<compile_context>
chip_gen: v7x
topology: tpu7x:2x2x1
jax: 0.10.0
libtpu: 0.0.40
codegen_flags: <defaults>
</compile_context>

<pallas_src>
import functools

import jax
import jax.numpy as jnp
from jax.experimental import pallas as pl
from jax.experimental.pallas import tpu as pltpu


# ----------------------------------------------------------------------------- kernel
def fused_cpnn_kernel(x_ref, *refs, seq_len, hidden, n_columns):
    """All cPNN columns fused: LSTM recurrences + final linear head.

    refs layout (after x_ref):
      weights per column (see module docstring), then W_out, b_out,
      then out_ref (T, TB, C), then scratch pre_scr (T*TB, 4H) and h_scr (T*TB, H).
    Gate columns are pre-permuted to (i, f, o, g).
    """
    n_w = 3 + 4 * (n_columns - 1)
    col_refs = refs[:n_w]
    wout_ref, bout_ref, out_ref, pre_scr, h_scr = refs[n_w:]

    T = seq_len
    TB = x_ref.shape[1]
    H = hidden
    n_classes = out_ref.shape[2]

    # (T, TB, D) -> (T*TB, D). TB is a multiple of 8, so this collapse of the leading
    # dim into the sublane dim is layout-preserving.
    x2d = x_ref[...].reshape(T * TB, x_ref.shape[2])

    ptr = 0
    for col in range(n_columns):
        if col == 0:
            wih_x_ref, whh_ref, b_ref = col_refs[ptr:ptr + 3]
            wih_h_ref = None
            ptr += 3
        else:
            wih_x_ref, wih_h_ref, whh_ref, b_ref = col_refs[ptr:ptr + 4]
            ptr += 4

        # Hoisted input projection for ALL timesteps at once (one big MXU call),
        # bias broadcast done once per column instead of once per step.
        pre = jnp.dot(x2d, wih_x_ref[...],
                      preferred_element_type=jnp.float32) + b_ref[...]
        if wih_h_ref is not None:
            # concat(x, prev_h) @ W_ih  ==  x @ W_ih[:D] + prev_h_seq @ W_ih[D:]
            pre = pre + jnp.dot(h_scr[...], wih_h_ref[...],
                                preferred_element_type=jnp.float32)
        pre_scr[...] = pre

        whh = whh_ref[...]
        h = jnp.zeros((TB, H), jnp.float32)
        c = jnp.zeros((TB, H), jnp.float32)
        # seq_len is small and static -> unrolled python loop.
        # TODO(synk): switch to lax.fori_loop with per-step scratch if seq_len grows.
        for t in range(T):
            row = t * TB  # static, multiple of 8 -> aligned sublane slice
            g = pre_scr[pl.ds(row, TB), :] + jnp.dot(
                h, whh, preferred_element_type=jnp.float32)
            sig = jax.nn.sigmoid(g[:, :3 * H])      # i, f, o in one activation
            g_act = jnp.tanh(g[:, 3 * H:])
            i_g = sig[:, :H]
            f_g = sig[:, H:2 * H]
            o_g = sig[:, 2 * H:]
            c = f_g * c + i_g * g_act
            h = o_g * jnp.tanh(c)
            h_scr[pl.ds(row, TB), :] = h

    # Output head of the LAST column only (intermediate outs are discarded by
    # cPNNModules.forward), fused into one matmul over all timesteps.
    out2d = (jnp.dot(h_scr[...], wout_ref[...], preferred_element_type=jnp.float32)
             + bout_ref[...])
    out_ref[...] = out2d.reshape(T, TB, n_classes)


# ----------------------------------------------------------------------------- wrapper
def _reorder_gates(w):
    """Permute gate columns from PyTorch order (i, f, g, o) to (i, f, o, g)."""
    i, f, g, o = jnp.split(w, 4, axis=-1)
    return jnp.concatenate([i, f, o, g], axis=-1)


def _full_spec(arr):
    return pl.BlockSpec(arr.shape, lambda i, _n=arr.ndim: (0,) * _n)


@functools.partial(jax.jit, static_argnames=("hidden", "n_classes", "batch_tile"))
def cpnn_forward(x_seq, module_params, *, hidden, n_classes, batch_tile=64):
    """cPNNModules.forward (combination=False): all columns fused into one pallas_call."""
    B, T, D_in = x_seq.shape
    n_columns = len(module_params)

    assert batch_tile % 8 == 0
    TB = min(batch_tile, ((B + 7) // 8) * 8)
    n_blocks = pl.cdiv(B, TB)
    B_pad = n_blocks * TB

    x = x_seq.astype(jnp.float32)
    if B_pad != B:
        x = jnp.pad(x, ((0, B_pad - B), (0, 0), (0, 0)))
    x_tm = jnp.transpose(x, (1, 0, 2))                       # (T, B_pad, D_in)

    # TODO(synk): optionally cast matmul operands to bfloat16 (keep f32 accumulation)
    # for 2x MXU rate / half the DMA bytes; requires loosening validation tolerance.
    args = [x_tm]
    in_specs = [pl.BlockSpec((T, TB, D_in), lambda i: (0, i, 0))]
    for col, p in enumerate(module_params):
        wih = _reorder_gates(p["W_ih"].astype(jnp.float32))
        whh = _reorder_gates(p["W_hh"].astype(jnp.float32))
        b = _reorder_gates(p["b"].astype(jnp.float32))
        if col == 0:
            col_args = [wih, whh, b]
        else:
            col_args = [wih[:D_in], wih[D_in:], whh, b]      # split concat -> 2 matmuls
        args += col_args
        in_specs += [_full_spec(a) for a in col_args]

    wout = module_params[-1]["W_out"].astype(jnp.float32)
    bout = module_params[-1]["b_out"].astype(jnp.float32)
    args += [wout, bout]
    in_specs += [_full_spec(wout), _full_spec(bout)]

    kernel = functools.partial(fused_cpnn_kernel, seq_len=T, hidden=hidden,
                               n_columns=n_columns)
    out_tm = pl.pallas_call(
        kernel,
        out_shape=jax.ShapeDtypeStruct((T, B_pad, n_classes), jnp.float32),
        grid_spec=pltpu.PrefetchScalarGridSpec(
            num_scalar_prefetch=0,
            grid=(n_blocks,),
            in_specs=in_specs,
            out_specs=pl.BlockSpec((T, TB, n_classes), lambda i: (0, i, 0)),
            scratch_shapes=[pltpu.VMEM((T * TB, 4 * hidden), jnp.float32),
                            pltpu.VMEM((T * TB, hidden), jnp.float32)]),
        compiler_params=pltpu.CompilerParams(
            dimension_semantics=("parallel",)),
    )(*args)

    out = jnp.transpose(out_tm, (1, 0, 2))                   # (B_pad, T, C)
    return out[:B]


# ----------------------------------------------------------------------------- glue
def cut_in_sequences(x, seq_len, stride=1):
    """Mirrors cPNNModules._cut_in_sequences for features only (sliding window)."""
    n = x.shape[0]
    seqs = [x[i:i + seq_len] for i in range(0, n, stride) if n - i >= seq_len]
    return jnp.stack(seqs).astype(jnp.float32)   # (n - seq_len + 1, seq_len, F)


def init_module_params(key, input_size, hidden, n_classes):
    k1, k2, k3, k4, k5 = jax.random.split(key, 5)
    scale = 0.1
    return {
        "W_ih":  scale * jax.random.normal(k1, (input_size, 4 * hidden), jnp.float32),
        "W_hh":  scale * jax.random.normal(k2, (hidden, 4 * hidden), jnp.float32),
        "b":     scale * jax.random.normal(k3, (1, 4 * hidden), jnp.float32),
        "W_out": scale * jax.random.normal(k4, (hidden, n_classes), jnp.float32),
        "b_out": scale * jax.random.normal(k5, (1, n_classes), jnp.float32),
    }


# ----------------------------------------------------------------------------- reference (pure JAX) for validation
def clstm_ref(x, p, hidden):
    B, T, _ = x.shape
    h = jnp.zeros((B, hidden), jnp.float32)
    c = jnp.zeros((B, hidden), jnp.float32)
    hs, outs = [], []
    for t in range(T):
        g = x[:, t, :] @ p["W_ih"] + h @ p["W_hh"] + p["b"]   # PyTorch gate order i,f,g,o
        i = jax.nn.sigmoid(g[:, :hidden])
        f = jax.nn.sigmoid(g[:, hidden:2 * hidden])
        gg = jnp.tanh(g[:, 2 * hidden:3 * hidden])
        o = jax.nn.sigmoid(g[:, 3 * hidden:])
        c = f * c + i * gg
        h = o * jnp.tanh(c)
        hs.append(h)
        outs.append(h @ p["W_out"] + p["b_out"])
    return jnp.stack(outs, axis=1), jnp.stack(hs, axis=1)


def cpnn_ref(x_seq, module_params, hidden):
    prev_h = None
    out = None
    for p in module_params:
        inp = x_seq if prev_h is None else jnp.concatenate([x_seq, prev_h], axis=-1)
        out, prev_h = clstm_ref(inp, p, hidden)
    return out


# ----------------------------------------------------------------------------- main
if __name__ == "__main__":
    SEQ_LEN = 5
    STRIDE = 1
    N_FEATURES = 4
    HIDDEN = 32
    N_CLASSES = 2
    RAW_BATCH = 132        # -> 132 - 5 + 1 = 128 sequences (fills the matmul M dim)

    key = jax.random.PRNGKey(0)
    kx, k0, k1 = jax.random.split(key, 3)

    # Raw stream batch (as fed to load_batch / convert_to_tensor_dataset).
    x_raw = jax.random.normal(kx, (RAW_BATCH, N_FEATURES), jnp.float32)
    x_seq = cut_in_sequences(x_raw, SEQ_LEN, STRIDE)          # (128, 5, 4)

    # Two cPNN columns: column 0 sees n_features, column 1 sees n_features + hidden
    # (cf. `self.model_args['input_size'] += self.model_args['hidden_size']`).
    module_params = [
        init_module_params(k0, N_FEATURES, HIDDEN, N_CLASSES),
        init_module_params(k1, N_FEATURES + HIDDEN, HIDDEN, N_CLASSES),
    ]

    out = cpnn_forward(x_seq, module_params, hidden=HIDDEN, n_classes=N_CLASSES)
    out = jax.block_until_ready(out)
    assert out.shape == (RAW_BATCH - SEQ_LEN + 1, SEQ_LEN, N_CLASSES)

    ref = cpnn_ref(x_seq, module_params, HIDDEN)
    assert jnp.allclose(out, ref, atol=1e-3, rtol=1e-3), "mismatch vs pure-JAX reference"

    # TODO(synk): training-side members (Adam optimizers, CrossEntropyLoss, add_new_module
    # bookkeeping) are not part of the forward pass and are intentionally not implemented.
    print("KERNEL_OK")
</pallas_src>

<mosaic_0001>
module attributes {stable_mosaic.version = 11 : i64} {
  func.func @fused_cpnn_kernel(%arg0: i32, %arg1: memref<5x64x4xf32, #tpu.memory_space<vmem>>, %arg2: memref<4x128xf32, #tpu.memory_space<vmem>>, %arg3: memref<32x128xf32, #tpu.memory_space<vmem>>, %arg4: memref<1x128xf32, #tpu.memory_space<vmem>>, %arg5: memref<4x128xf32, #tpu.memory_space<vmem>>, %arg6: memref<32x128xf32, #tpu.memory_space<vmem>>, %arg7: memref<32x128xf32, #tpu.memory_space<vmem>>, %arg8: memref<1x128xf32, #tpu.memory_space<vmem>>, %arg9: memref<32x2xf32, #tpu.memory_space<vmem>>, %arg10: memref<1x2xf32, #tpu.memory_space<vmem>>, %arg11: memref<5x64x2xf32, #tpu.memory_space<vmem>>, %arg12: memref<320x128xf32, #tpu.memory_space<vmem>>, %arg13: memref<320x32xf32, #tpu.memory_space<vmem>>) attributes {dimension_semantics = [#tpu.dimension_semantics<parallel>], iteration_bounds = array<i64: 2>, scalar_prefetch = 0 : i64, scratch_operands = 2 : i64, tpu.core_type = #tpu.core_type<tc>, window_params = [{transform_indices = @transform_0, window_bounds = array<i64: 5, 64, 4>}, {pipeline_mode = #tpu.pipeline_mode<synchronous>, transform_indices = @transform_1, window_bounds = array<i64: 4, 128>}, {pipeline_mode = #tpu.pipeline_mode<synchronous>, transform_indices = @transform_2, window_bounds = array<i64: 32, 128>}, {pipeline_mode = #tpu.pipeline_mode<synchronous>, transform_indices = @transform_3, window_bounds = array<i64: 1, 128>}, {pipeline_mode = #tpu.pipeline_mode<synchronous>, transform_indices = @transform_4, window_bounds = array<i64: 4, 128>}, {pipeline_mode = #tpu.pipeline_mode<synchronous>, transform_indices = @transform_5, window_bounds = array<i64: 32, 128>}, {pipeline_mode = #tpu.pipeline_mode<synchronous>, transform_indices = @transform_6, window_bounds = array<i64: 32, 128>}, {pipeline_mode = #tpu.pipeline_mode<synchronous>, transform_indices = @transform_7, window_bounds = array<i64: 1, 128>}, {pipeline_mode = #tpu.pipeline_mode<synchronous>, transform_indices = @transform_8, window_bounds = array<i64: 32, 2>}, {pipeline_mode = #tpu.pipeline_mode<synchronous>, transform_indices = @transform_9, window_bounds = array<i64: 1, 2>}, {transform_indices = @transform_10, window_bounds = array<i64: 5, 64, 2>}]} {
    %c0 = arith.constant 0 : index
    %c0_0 = arith.constant 0 : index
    %c0_1 = arith.constant 0 : index
    %0 = vector.load %arg1[%c0, %c0_0, %c0_1] : memref<5x64x4xf32, #tpu.memory_space<vmem>>, vector<5x64x4xf32>
    %1 = vector.shape_cast %0 : vector<5x64x4xf32> to vector<320x4xf32>
    %c0_2 = arith.constant 0 : index
    %c0_3 = arith.constant 0 : index
    %2 = vector.load %arg2[%c0_2, %c0_3] : memref<4x128xf32, #tpu.memory_space<vmem>>, vector<4x128xf32>
    %cst = arith.constant dense<0.000000e+00> : vector<320x128xf32>
    %3 = tpu.matmul %1, %2, %cst {dimension_numbers = #tpu.dot_dimension_numbers<[1], [0], [0], [1], [0, 0, 1, 1], [], []>} : vector<320x4xf32>, vector<4x128xf32>, vector<320x128xf32> -> vector<320x128xf32>
    %c0_4 = arith.constant 0 : index
    %c0_5 = arith.constant 0 : index
    %4 = vector.load %arg4[%c0_4, %c0_5] : memref<1x128xf32, #tpu.memory_space<vmem>>, vector<1x128xf32>
    %5 = vector.broadcast %4 : vector<1x128xf32> to vector<320x128xf32>
    %6 = arith.addf %3, %5 : vector<320x128xf32>
    %c0_6 = arith.constant 0 : index
    %c0_7 = arith.constant 0 : index
    %7 = vector.load %arg12[%c0_6, %c0_7] : memref<320x128xf32, #tpu.memory_space<vmem>>, vector<320x128xf32>
    tpu.vector_store %arg12[%c0_6, %c0_7], %6 {strides = array<i32>} : memref<320x128xf32, #tpu.memory_space<vmem>>, vector<320x128xf32>,
    %c0_8 = arith.constant 0 : index
    %c0_9 = arith.constant 0 : index
    %8 = vector.load %arg3[%c0_8, %c0_9] : memref<32x128xf32, #tpu.memory_space<vmem>>, vector<32x128xf32>
    %cst_10 = arith.constant 0.000000e+00 : f32
    %9 = vector.broadcast %cst_10 : f32 to vector<64x32xf32>
    %cst_11 = arith.constant 0.000000e+00 : f32
    %10 = vector.broadcast %cst_11 : f32 to vector<64x32xf32>
    %c0_12 = arith.constant 0 : index
    %c0_13 = arith.constant 0 : index
    %11 = vector.load %arg12[%c0_12, %c0_13] : memref<320x128xf32, #tpu.memory_space<vmem>>, vector<64x128xf32>
    %cst_14 = arith.constant dense<0.000000e+00> : vector<64x128xf32>
    %12 = tpu.matmul %9, %8, %cst_14 {dimension_numbers = #tpu.dot_dimension_numbers<[1], [0], [0], [1], [0, 0, 1, 1], [], []>} : vector<64x32xf32>, vector<32x128xf32>, vector<64x128xf32> -> vector<64x128xf32>
    %13 = arith.addf %11, %12 : vector<64x128xf32>
    %14 = vector.extract_strided_slice %13 {offsets = [0, 0], sizes = [64, 96], strides = [1, 1]} : vector<64x128xf32> to vector<64x96xf32>
    %15 = arith.negf %14 : vector<64x96xf32>
    %16 = math.exp %15 : vector<64x96xf32>
    %cst_15 = arith.constant 1.000000e+00 : f32
    %17 = vector.broadcast %cst_15 : f32 to vector<64x96xf32>
    %18 = arith.addf %17, %16 : vector<64x96xf32>
    %19 = arith.divf %17, %18 : vector<64x96xf32>
    %20 = vector.extract_strided_slice %13 {offsets = [0, 96], sizes = [64, 32], strides = [1, 1]} : vector<64x128xf32> to vector<64x32xf32>
    %21 = math.tanh %20 : vector<64x32xf32>
    %22 = vector.extract_strided_slice %19 {offsets = [0, 0], sizes = [64, 32], strides = [1, 1]} : vector<64x96xf32> to vector<64x32xf32>
    %23 = vector.extract_strided_slice %19 {offsets = [0, 32], sizes = [64, 32], strides = [1, 1]} : vector<64x96xf32> to vector<64x32xf32>
    %24 = vector.extract_strided_slice %19 {offsets = [0, 64], sizes = [64, 32], strides = [1, 1]} : vector<64x96xf32> to vector<64x32xf32>
    %25 = arith.mulf %23, %10 : vector<64x32xf32>
    %26 = arith.mulf %22, %21 : vector<64x32xf32>
    %27 = arith.addf %25, %26 : vector<64x32xf32>
    %28 = math.tanh %27 : vector<64x32xf32>
    %29 = arith.mulf %24, %28 : vector<64x32xf32>
    %c0_16 = arith.constant 0 : index
    %c0_17 = arith.constant 0 : index
    %30 = vector.load %arg13[%c0_16, %c0_17] : memref<320x32xf32, #tpu.memory_space<vmem>>, vector<64x32xf32>
    tpu.vector_store %arg13[%c0_16, %c0_17], %29 {strides = array<i32>} : memref<320x32xf32, #tpu.memory_space<vmem>>, vector<64x32xf32>,
    %c64 = arith.constant 64 : index
    %c0_18 = arith.constant 0 : index
    %31 = vector.load %arg12[%c64, %c0_18] : memref<320x128xf32, #tpu.memory_space<vmem>>, vector<64x128xf32>
    %cst_19 = arith.constant dense<0.000000e+00> : vector<64x128xf32>
    %32 = tpu.matmul %29, %8, %cst_19 {dimension_numbers = #tpu.dot_dimension_numbers<[1], [0], [0], [1], [0, 0, 1, 1], [], []>} : vector<64x32xf32>, vector<32x128xf32>, vector<64x128xf32> -> vector<64x128xf32>
    %33 = arith.addf %31, %32 : vector<64x128xf32>
    %34 = vector.extract_strided_slice %33 {offsets = [0, 0], sizes = [64, 96], strides = [1, 1]} : vector<64x128xf32> to vector<64x96xf32>
    %35 = arith.negf %34 : vector<64x96xf32>
    %36 = math.exp %35 : vector<64x96xf32>
    %cst_20 = arith.constant 1.000000e+00 : f32
    %37 = vector.broadcast %cst_20 : f32 to vector<64x96xf32>
    %38 = arith.addf %37, %36 : vector<64x96xf32>
    %39 = arith.divf %37, %38 : vector<64x96xf32>
    %40 = vector.extract_strided_slice %33 {offsets = [0, 96], sizes = [64, 32], strides = [1, 1]} : vector<64x128xf32> to vector<64x32xf32>
    %41 = math.tanh %40 : vector<64x32xf32>
    %42 = vector.extract_strided_slice %39 {offsets = [0, 0], sizes = [64, 32], strides = [1, 1]} : vector<64x96xf32> to vector<64x32xf32>
    %43 = vector.extract_strided_slice %39 {offsets = [0, 32], sizes = [64, 32], strides = [1, 1]} : vector<64x96xf32> to vector<64x32xf32>
    %44 = vector.extract_strided_slice %39 {offsets = [0, 64], sizes = [64, 32], strides = [1, 1]} : vector<64x96xf32> to vector<64x32xf32>
    %45 = arith.mulf %43, %27 : vector<64x32xf32>
    %46 = arith.mulf %42, %41 : vector<64x32xf32>
    %47 = arith.addf %45, %46 : vector<64x32xf32>
    %48 = math.tanh %47 : vector<64x32xf32>
    %49 = arith.mulf %44, %48 : vector<64x32xf32>
    %c64_21 = arith.constant 64 : index
    %c0_22 = arith.constant 0 : index
    %50 = vector.load %arg13[%c64_21, %c0_22] : memref<320x32xf32, #tpu.memory_space<vmem>>, vector<64x32xf32>
    tpu.vector_store %arg13[%c64_21, %c0_22], %49 {strides = array<i32>} : memref<320x32xf32, #tpu.memory_space<vmem>>, vector<64x32xf32>,
    %c128 = arith.constant 128 : index
    %c0_23 = arith.constant 0 : index
    %51 = vector.load %arg12[%c128, %c0_23] : memref<320x128xf32, #tpu.memory_space<vmem>>, vector<64x128xf32>
    %cst_24 = arith.constant dense<0.000000e+00> : vector<64x128xf32>
    %52 = tpu.matmul %49, %8, %cst_24 {dimension_numbers = #tpu.dot_dimension_numbers<[1], [0], [0], [1], [0, 0, 1, 1], [], []>} : vector<64x32xf32>, vector<32x128xf32>, vector<64x128xf32> -> vector<64x128xf32>
    %53 = arith.addf %51, %52 : vector<64x128xf32>
    %54 = vector.extract_strided_slice %53 {offsets = [0, 0], sizes = [64, 96], strides = [1, 1]} : vector<64x128xf32> to vector<64x96xf32>
    %55 = arith.negf %54 : vector<64x96xf32>
    %56 = math.exp %55 : vector<64x96xf32>
    %cst_25 = arith.constant 1.000000e+00 : f32
    %57 = vector.broadcast %cst_25 : f32 to vector<64x96xf32>
    %58 = arith.addf %57, %56 : vector<64x96xf32>
    %59 = arith.divf %57, %58 : vector<64x96xf32>
    %60 = vector.extract_strided_slice %53 {offsets = [0, 96], sizes = [64, 32], strides = [1, 1]} : vector<64x128xf32> to vector<64x32xf32>
    %61 = math.tanh %60 : vector<64x32xf32>
    %62 = vector.extract_strided_slice %59 {offsets = [0, 0], sizes = [64, 32], strides = [1, 1]} : vector<64x96xf32> to vector<64x32xf32>
    %63 = vector.extract_strided_slice %59 {offsets = [0, 32], sizes = [64, 32], strides = [1, 1]} : vector<64x96xf32> to vector<64x32xf32>
    %64 = vector.extract_strided_slice %59 {offsets = [0, 64], sizes = [64, 32], strides = [1, 1]} : vector<64x96xf32> to vector<64x32xf32>
    %65 = arith.mulf %63, %47 : vector<64x32xf32>
    %66 = arith.mulf %62, %61 : vector<64x32xf32>
    %67 = arith.addf %65, %66 : vector<64x32xf32>
    %68 = math.tanh %67 : vector<64x32xf32>
    %69 = arith.mulf %64, %68 : vector<64x32xf32>
    %c128_26 = arith.constant 128 : index
    %c0_27 = arith.constant 0 : index
    %70 = vector.load %arg13[%c128_26, %c0_27] : memref<320x32xf32, #tpu.memory_space<vmem>>, vector<64x32xf32>
    tpu.vector_store %arg13[%c128_26, %c0_27], %69 {strides = array<i32>} : memref<320x32xf32, #tpu.memory_space<vmem>>, vector<64x32xf32>,
    %c192 = arith.constant 192 : index
    %c0_28 = arith.constant 0 : index
    %71 = vector.load %arg12[%c192, %c0_28] : memref<320x128xf32, #tpu.memory_space<vmem>>, vector<64x128xf32>
    %cst_29 = arith.constant dense<0.000000e+00> : vector<64x128xf32>
    %72 = tpu.matmul %69, %8, %cst_29 {dimension_numbers = #tpu.dot_dimension_numbers<[1], [0], [0], [1], [0, 0, 1, 1], [], []>} : vector<64x32xf32>, vector<32x128xf32>, vector<64x128xf32> -> vector<64x128xf32>
    %73 = arith.addf %71, %72 : vector<64x128xf32>
    %74 = vector.extract_strided_slice %73 {offsets = [0, 0], sizes = [64, 96], strides = [1, 1]} : vector<64x128xf32> to vector<64x96xf32>
    %75 = arith.negf %74 : vector<64x96xf32>
    %76 = math.exp %75 : vector<64x96xf32>
    %cst_30 = arith.constant 1.000000e+00 : f32
    %77 = vector.broadcast %cst_30 : f32 to vector<64x96xf32>
    %78 = arith.addf %77, %76 : vector<64x96xf32>
    %79 = arith.divf %77, %78 : vector<64x96xf32>
    %80 = vector.extract_strided_slice %73 {offsets = [0, 96], sizes = [64, 32], strides = [1, 1]} : vector<64x128xf32> to vector<64x32xf32>
    %81 = math.tanh %80 : vector<64x32xf32>
    %82 = vector.extract_strided_slice %79 {offsets = [0, 0], sizes = [64, 32], strides = [1, 1]} : vector<64x96xf32> to vector<64x32xf32>
    %83 = vector.extract_strided_slice %79 {offsets = [0, 32], sizes = [64, 32], strides = [1, 1]} : vector<64x96xf32> to vector<64x32xf32>
    %84 = vector.extract_strided_slice %79 {offsets = [0, 64], sizes = [64, 32], strides = [1, 1]} : vector<64x96xf32> to vector<64x32xf32>
    %85 = arith.mulf %83, %67 : vector<64x32xf32>
    %86 = arith.mulf %82, %81 : vector<64x32xf32>
    %87 = arith.addf %85, %86 : vector<64x32xf32>
    %88 = math.tanh %87 : vector<64x32xf32>
    %89 = arith.mulf %84, %88 : vector<64x32xf32>
    %c192_31 = arith.constant 192 : index
    %c0_32 = arith.constant 0 : index
    %90 = vector.load %arg13[%c192_31, %c0_32] : memref<320x32xf32, #tpu.memory_space<vmem>>, vector<64x32xf32>
    tpu.vector_store %arg13[%c192_31, %c0_32], %89 {strides = array<i32>} : memref<320x32xf32, #tpu.memory_space<vmem>>, vector<64x32xf32>,
    %c256 = arith.constant 256 : index
    %c0_33 = arith.constant 0 : index
    %91 = vector.load %arg12[%c256, %c0_33] : memref<320x128xf32, #tpu.memory_space<vmem>>, vector<64x128xf32>
    %cst_34 = arith.constant dense<0.000000e+00> : vector<64x128xf32>
    %92 = tpu.matmul %89, %8, %cst_34 {dimension_numbers = #tpu.dot_dimension_numbers<[1], [0], [0], [1], [0, 0, 1, 1], [], []>} : vector<64x32xf32>, vector<32x128xf32>, vector<64x128xf32> -> vector<64x128xf32>
    %93 = arith.addf %91, %92 : vector<64x128xf32>
    %94 = vector.extract_strided_slice %93 {offsets = [0, 0], sizes = [64, 96], strides = [1, 1]} : vector<64x128xf32> to vector<64x96xf32>
    %95 = arith.negf %94 : vector<64x96xf32>
    %96 = math.exp %95 : vector<64x96xf32>
    %cst_35 = arith.constant 1.000000e+00 : f32
    %97 = vector.broadcast %cst_35 : f32 to vector<64x96xf32>
    %98 = arith.addf %97, %96 : vector<64x96xf32>
    %99 = arith.divf %97, %98 : vector<64x96xf32>
    %100 = vector.extract_strided_slice %93 {offsets = [0, 96], sizes = [64, 32], strides = [1, 1]} : vector<64x128xf32> to vector<64x32xf32>
    %101 = math.tanh %100 : vector<64x32xf32>
    %102 = vector.extract_strided_slice %99 {offsets = [0, 0], sizes = [64, 32], strides = [1, 1]} : vector<64x96xf32> to vector<64x32xf32>
    %103 = vector.extract_strided_slice %99 {offsets = [0, 32], sizes = [64, 32], strides = [1, 1]} : vector<64x96xf32> to vector<64x32xf32>
    %104 = vector.extract_strided_slice %99 {offsets = [0, 64], sizes = [64, 32], strides = [1, 1]} : vector<64x96xf32> to vector<64x32xf32>
    %105 = arith.mulf %103, %87 : vector<64x32xf32>
    %106 = arith.mulf %102, %101 : vector<64x32xf32>
    %107 = arith.addf %105, %106 : vector<64x32xf32>
    %108 = math.tanh %107 : vector<64x32xf32>
    %109 = arith.mulf %104, %108 : vector<64x32xf32>
    %c256_36 = arith.constant 256 : index
    %c0_37 = arith.constant 0 : index
    %110 = vector.load %arg13[%c256_36, %c0_37] : memref<320x32xf32, #tpu.memory_space<vmem>>, vector<64x32xf32>
    tpu.vector_store %arg13[%c256_36, %c0_37], %109 {strides = array<i32>} : memref<320x32xf32, #tpu.memory_space<vmem>>, vector<64x32xf32>,
    %c0_38 = arith.constant 0 : index
    %c0_39 = arith.constant 0 : index
    %111 = vector.load %arg5[%c0_38, %c0_39] : memref<4x128xf32, #tpu.memory_space<vmem>>, vector<4x128xf32>
    %cst_40 = arith.constant dense<0.000000e+00> : vector<320x128xf32>
    %112 = tpu.matmul %1, %111, %cst_40 {dimension_numbers = #tpu.dot_dimension_numbers<[1], [0], [0], [1], [0, 0, 1, 1], [], []>} : vector<320x4xf32>, vector<4x128xf32>, vector<320x128xf32> -> vector<320x128xf32>
    %c0_41 = arith.constant 0 : index
    %c0_42 = arith.constant 0 : index
    %113 = vector.load %arg8[%c0_41, %c0_42] : memref<1x128xf32, #tpu.memory_space<vmem>>, vector<1x128xf32>
    %114 = vector.broadcast %113 : vector<1x128xf32> to vector<320x128xf32>
    %115 = arith.addf %112, %114 : vector<320x128xf32>
    %c0_43 = arith.constant 0 : index
    %c0_44 = arith.constant 0 : index
    %116 = vector.load %arg13[%c0_43, %c0_44] : memref<320x32xf32, #tpu.memory_space<vmem>>, vector<320x32xf32>
    %c0_45 = arith.constant 0 : index
    %c0_46 = arith.constant 0 : index
    %117 = vector.load %arg6[%c0_45, %c0_46] : memref<32x128xf32, #tpu.memory_space<vmem>>, vector<32x128xf32>
    %cst_47 = arith.constant dense<0.000000e+00> : vector<320x128xf32>
    %118 = tpu.matmul %116, %117, %cst_47 {dimension_numbers = #tpu.dot_dimension_numbers<[1], [0], [0], [1], [0, 0, 1, 1], [], []>} : vector<320x32xf32>, vector<32x128xf32>, vector<320x128xf32> -> vector<320x128xf32>
    %119 = arith.addf %115, %118 : vector<320x128xf32>
    %c0_48 = arith.constant 0 : index
    %c0_49 = arith.constant 0 : index
    %120 = vector.load %arg12[%c0_48, %c0_49] : memref<320x128xf32, #tpu.memory_space<vmem>>, vector<320x128xf32>
    tpu.vector_store %arg12[%c0_48, %c0_49], %119 {strides = array<i32>} : memref<320x128xf32, #tpu.memory_space<vmem>>, vector<320x128xf32>,
    %c0_50 = arith.constant 0 : index
    %c0_51 = arith.constant 0 : index
    %121 = vector.load %arg7[%c0_50, %c0_51] : memref<32x128xf32, #tpu.memory_space<vmem>>, vector<32x128xf32>
    %cst_52 = arith.constant 0.000000e+00 : f32
    %122 = vector.broadcast %cst_52 : f32 to vector<64x32xf32>
    %cst_53 = arith.constant 0.000000e+00 : f32
    %123 = vector.broadcast %cst_53 : f32 to vector<64x32xf32>
    %c0_54 = arith.constant 0 : index
    %c0_55 = arith.constant 0 : index
    %124 = vector.load %arg12[%c0_54, %c0_55] : memref<320x128xf32, #tpu.memory_space<vmem>>, vector<64x128xf32>
    %cst_56 = arith.constant dense<0.000000e+00> : vector<64x128xf32>
    %125 = tpu.matmul %122, %121, %cst_56 {dimension_numbers = #tpu.dot_dimension_numbers<[1], [0], [0], [1], [0, 0, 1, 1], [], []>} : vector<64x32xf32>, vector<32x128xf32>, vector<64x128xf32> -> vector<64x128xf32>
    %126 = arith.addf %124, %125 : vector<64x128xf32>
    %127 = vector.extract_strided_slice %126 {offsets = [0, 0], sizes = [64, 96], strides = [1, 1]} : vector<64x128xf32> to vector<64x96xf32>
    %128 = arith.negf %127 : vector<64x96xf32>
    %129 = math.exp %128 : vector<64x96xf32>
    %cst_57 = arith.constant 1.000000e+00 : f32
    %130 = vector.broadcast %cst_57 : f32 to vector<64x96xf32>
    %131 = arith.addf %130, %129 : vector<64x96xf32>
    %132 = arith.divf %130, %131 : vector<64x96xf32>
    %133 = vector.extract_strided_slice %126 {offsets = [0, 96], sizes = [64, 32], strides = [1, 1]} : vector<64x128xf32> to vector<64x32xf32>
    %134 = math.tanh %133 : vector<64x32xf32>
    %135 = vector.extract_strided_slice %132 {offsets = [0, 0], sizes = [64, 32], strides = [1, 1]} : vector<64x96xf32> to vector<64x32xf32>
    %136 = vector.extract_strided_slice %132 {offsets = [0, 32], sizes = [64, 32], strides = [1, 1]} : vector<64x96xf32> to vector<64x32xf32>
    %137 = vector.extract_strided_slice %132 {offsets = [0, 64], sizes = [64, 32], strides = [1, 1]} : vector<64x96xf32> to vector<64x32xf32>
    %138 = arith.mulf %136, %123 : vector<64x32xf32>
    %139 = arith.mulf %135, %134 : vector<64x32xf32>
    %140 = arith.addf %138, %139 : vector<64x32xf32>
    %141 = math.tanh %140 : vector<64x32xf32>
    %142 = arith.mulf %137, %141 : vector<64x32xf32>
    %c0_58 = arith.constant 0 : index
    %c0_59 = arith.constant 0 : index
    %143 = vector.load %arg13[%c0_58, %c0_59] : memref<320x32xf32, #tpu.memory_space<vmem>>, vector<64x32xf32>
    tpu.vector_store %arg13[%c0_58, %c0_59], %142 {strides = array<i32>} : memref<320x32xf32, #tpu.memory_space<vmem>>, vector<64x32xf32>,
    %c64_60 = arith.constant 64 : index
    %c0_61 = arith.constant 0 : index
    %144 = vector.load %arg12[%c64_60, %c0_61] : memref<320x128xf32, #tpu.memory_space<vmem>>, vector<64x128xf32>
    %cst_62 = arith.constant dense<0.000000e+00> : vector<64x128xf32>
    %145 = tpu.matmul %142, %121, %cst_62 {dimension_numbers = #tpu.dot_dimension_numbers<[1], [0], [0], [1], [0, 0, 1, 1], [], []>} : vector<64x32xf32>, vector<32x128xf32>, vector<64x128xf32> -> vector<64x128xf32>
    %146 = arith.addf %144, %145 : vector<64x128xf32>
    %147 = vector.extract_strided_slice %146 {offsets = [0, 0], sizes = [64, 96], strides = [1, 1]} : vector<64x128xf32> to vector<64x96xf32>
    %148 = arith.negf %147 : vector<64x96xf32>
    %149 = math.exp %148 : vector<64x96xf32>
    %cst_63 = arith.constant 1.000000e+00 : f32
    %150 = vector.broadcast %cst_63 : f32 to vector<64x96xf32>
    %151 = arith.addf %150, %149 : vector<64x96xf32>
    %152 = arith.divf %150, %151 : vector<64x96xf32>
    %153 = vector.extract_strided_slice %146 {offsets = [0, 96], sizes = [64, 32], strides = [1, 1]} : vector<64x128xf32> to vector<64x32xf32>
    %154 = math.tanh %153 : vector<64x32xf32>
    %155 = vector.extract_strided_slice %152 {offsets = [0, 0], sizes = [64, 32], strides = [1, 1]} : vector<64x96xf32> to vector<64x32xf32>
    %156 = vector.extract_strided_slice %152 {offsets = [0, 32], sizes = [64, 32], strides = [1, 1]} : vector<64x96xf32> to vector<64x32xf32>
    %157 = vector.extract_strided_slice %152 {offsets = [0, 64], sizes = [64, 32], strides = [1, 1]} : vector<64x96xf32> to vector<64x32xf32>
    %158 = arith.mulf %156, %140 : vector<64x32xf32>
    %159 = arith.mulf %155, %154 : vector<64x32xf32>
    %160 = arith.addf %158, %159 : vector<64x32xf32>
    %161 = math.tanh %160 : vector<64x32xf32>
    %162 = arith.mulf %157, %161 : vector<64x32xf32>
    %c64_64 = arith.constant 64 : index
    %c0_65 = arith.constant 0 : index
    %163 = vector.load %arg13[%c64_64, %c0_65] : memref<320x32xf32, #tpu.memory_space<vmem>>, vector<64x32xf32>
    tpu.vector_store %arg13[%c64_64, %c0_65], %162 {strides = array<i32>} : memref<320x32xf32, #tpu.memory_space<vmem>>, vector<64x32xf32>,
    %c128_66 = arith.constant 128 : index
    %c0_67 = arith.constant 0 : index
    %164 = vector.load %arg12[%c128_66, %c0_67] : memref<320x128xf32, #tpu.memory_space<vmem>>, vector<64x128xf32>
    %cst_68 = arith.constant dense<0.000000e+00> : vector<64x128xf32>
    %165 = tpu.matmul %162, %121, %cst_68 {dimension_numbers = #tpu.dot_dimension_numbers<[1], [0], [0], [1], [0, 0, 1, 1], [], []>} : vector<64x32xf32>, vector<32x128xf32>, vector<64x128xf32> -> vector<64x128xf32>
    %166 = arith.addf %164, %165 : vector<64x128xf32>
    %167 = vector.extract_strided_slice %166 {offsets = [0, 0], sizes = [64, 96], strides = [1, 1]} : vector<64x128xf32> to vector<64x96xf32>
    %168 = arith.negf %167 : vector<64x96xf32>
    %169 = math.exp %168 : vector<64x96xf32>
    %cst_69 = arith.constant 1.000000e+00 : f32
    %170 = vector.broadcast %cst_69 : f32 to vector<64x96xf32>
    %171 = arith.addf %170, %169 : vector<64x96xf32>
    %172 = arith.divf %170, %171 : vector<64x96xf32>
    %173 = vector.extract_strided_slice %166 {offsets = [0, 96], sizes = [64, 32], strides = [1, 1]} : vector<64x128xf32> to vector<64x32xf32>
    %174 = math.tanh %173 : vector<64x32xf32>
    %175 = vector.extract_strided_slice %172 {offsets = [0, 0], sizes = [64, 32], strides = [1, 1]} : vector<64x96xf32> to vector<64x32xf32>
    %176 = vector.extract_strided_slice %172 {offsets = [0, 32], sizes = [64, 32], strides = [1, 1]} : vector<64x96xf32> to vector<64x32xf32>
    %177 = vector.extract_strided_slice %172 {offsets = [0, 64], sizes = [64, 32], strides = [1, 1]} : vector<64x96xf32> to vector<64x32xf32>
    %178 = arith.mulf %176, %160 : vector<64x32xf32>
    %179 = arith.mulf %175, %174 : vector<64x32xf32>
    %180 = arith.addf %178, %179 : vector<64x32xf32>
    %181 = math.tanh %180 : vector<64x32xf32>
    %182 = arith.mulf %177, %181 : vector<64x32xf32>
    %c128_70 = arith.constant 128 : index
    %c0_71 = arith.constant 0 : index
    %183 = vector.load %arg13[%c128_70, %c0_71] : memref<320x32xf32, #tpu.memory_space<vmem>>, vector<64x32xf32>
    tpu.vector_store %arg13[%c128_70, %c0_71], %182 {strides = array<i32>} : memref<320x32xf32, #tpu.memory_space<vmem>>, vector<64x32xf32>,
    %c192_72 = arith.constant 192 : index
    %c0_73 = arith.constant 0 : index
    %184 = vector.load %arg12[%c192_72, %c0_73] : memref<320x128xf32, #tpu.memory_space<vmem>>, vector<64x128xf32>
    %cst_74 = arith.constant dense<0.000000e+00> : vector<64x128xf32>
    %185 = tpu.matmul %182, %121, %cst_74 {dimension_numbers = #tpu.dot_dimension_numbers<[1], [0], [0], [1], [0, 0, 1, 1], [], []>} : vector<64x32xf32>, vector<32x128xf32>, vector<64x128xf32> -> vector<64x128xf32>
    %186 = arith.addf %184, %185 : vector<64x128xf32>
    %187 = vector.extract_strided_slice %186 {offsets = [0, 0], sizes = [64, 96], strides = [1, 1]} : vector<64x128xf32> to vector<64x96xf32>
    %188 = arith.negf %187 : vector<64x96xf32>
    %189 = math.exp %188 : vector<64x96xf32>
    %cst_75 = arith.constant 1.000000e+00 : f32
    %190 = vector.broadcast %cst_75 : f32 to vector<64x96xf32>
    %191 = arith.addf %190, %189 : vector<64x96xf32>
    %192 = arith.divf %190, %191 : vector<64x96xf32>
    %193 = vector.extract_strided_slice %186 {offsets = [0, 96], sizes = [64, 32], strides = [1, 1]} : vector<64x128xf32> to vector<64x32xf32>
    %194 = math.tanh %193 : vector<64x32xf32>
    %195 = vector.extract_strided_slice %192 {offsets = [0, 0], sizes = [64, 32], strides = [1, 1]} : vector<64x96xf32> to vector<64x32xf32>
    %196 = vector.extract_strided_slice %192 {offsets = [0, 32], sizes = [64, 32], strides = [1, 1]} : vector<64x96xf32> to vector<64x32xf32>
    %197 = vector.extract_strided_slice %192 {offsets = [0, 64], sizes = [64, 32], strides = [1, 1]} : vector<64x96xf32> to vector<64x32xf32>
    %198 = arith.mulf %196, %180 : vector<64x32xf32>
    %199 = arith.mulf %195, %194 : vector<64x32xf32>
    %200 = arith.addf %198, %199 : vector<64x32xf32>
    %201 = math.tanh %200 : vector<64x32xf32>
    %202 = arith.mulf %197, %201 : vector<64x32xf32>
    %c192_76 = arith.constant 192 : index
    %c0_77 = arith.constant 0 : index
    %203 = vector.load %arg13[%c192_76, %c0_77] : memref<320x32xf32, #tpu.memory_space<vmem>>, vector<64x32xf32>
    tpu.vector_store %arg13[%c192_76, %c0_77], %202 {strides = array<i32>} : memref<320x32xf32, #tpu.memory_space<vmem>>, vector<64x32xf32>,
    %c256_78 = arith.constant 256 : index
    %c0_79 = arith.constant 0 : index
    %204 = vector.load %arg12[%c256_78, %c0_79] : memref<320x128xf32, #tpu.memory_space<vmem>>, vector<64x128xf32>
    %cst_80 = arith.constant dense<0.000000e+00> : vector<64x128xf32>
    %205 = tpu.matmul %202, %121, %cst_80 {dimension_numbers = #tpu.dot_dimension_numbers<[1], [0], [0], [1], [0, 0, 1, 1], [], []>} : vector<64x32xf32>, vector<32x128xf32>, vector<64x128xf32> -> vector<64x128xf32>
    %206 = arith.addf %204, %205 : vector<64x128xf32>
    %207 = vector.extract_strided_slice %206 {offsets = [0, 0], sizes = [64, 96], strides = [1, 1]} : vector<64x128xf32> to vector<64x96xf32>
    %208 = arith.negf %207 : vector<64x96xf32>
    %209 = math.exp %208 : vector<64x96xf32>
    %cst_81 = arith.constant 1.000000e+00 : f32
    %210 = vector.broadcast %cst_81 : f32 to vector<64x96xf32>
    %211 = arith.addf %210, %209 : vector<64x96xf32>
    %212 = arith.divf %210, %211 : vector<64x96xf32>
    %213 = vector.extract_strided_slice %206 {offsets = [0, 96], sizes = [64, 32], strides = [1, 1]} : vector<64x128xf32> to vector<64x32xf32>
    %214 = math.tanh %213 : vector<64x32xf32>
    %215 = vector.extract_strided_slice %212 {offsets = [0, 0], sizes = [64, 32], strides = [1, 1]} : vector<64x96xf32> to vector<64x32xf32>
    %216 = vector.extract_strided_slice %212 {offsets = [0, 32], sizes = [64, 32], strides = [1, 1]} : vector<64x96xf32> to vector<64x32xf32>
    %217 = vector.extract_strided_slice %212 {offsets = [0, 64], sizes = [64, 32], strides = [1, 1]} : vector<64x96xf32> to vector<64x32xf32>
    %218 = arith.mulf %216, %200 : vector<64x32xf32>
    %219 = arith.mulf %215, %214 : vector<64x32xf32>
    %220 = arith.addf %218, %219 : vector<64x32xf32>
    %221 = math.tanh %220 : vector<64x32xf32>
    %222 = arith.mulf %217, %221 : vector<64x32xf32>
    %c256_82 = arith.constant 256 : index
    %c0_83 = arith.constant 0 : index
    %223 = vector.load %arg13[%c256_82, %c0_83] : memref<320x32xf32, #tpu.memory_space<vmem>>, vector<64x32xf32>
    tpu.vector_store %arg13[%c256_82, %c0_83], %222 {strides = array<i32>} : memref<320x32xf32, #tpu.memory_space<vmem>>, vector<64x32xf32>,
    %c0_84 = arith.constant 0 : index
    %c0_85 = arith.constant 0 : index
    %224 = vector.load %arg13[%c0_84, %c0_85] : memref<320x32xf32, #tpu.memory_space<vmem>>, vector<320x32xf32>
    %c0_86 = arith.constant 0 : index
    %c0_87 = arith.constant 0 : index
    %225 = vector.load %arg9[%c0_86, %c0_87] : memref<32x2xf32, #tpu.memory_space<vmem>>, vector<32x2xf32>
    %cst_88 = arith.constant dense<0.000000e+00> : vector<320x2xf32>
    %226 = tpu.matmul %224, %225, %cst_88 {dimension_numbers = #tpu.dot_dimension_numbers<[1], [0], [0], [1], [0, 0, 1, 1], [], []>} : vector<320x32xf32>, vector<32x2xf32>, vector<320x2xf32> -> vector<320x2xf32>
    %c0_89 = arith.constant 0 : index
    %c0_90 = arith.constant 0 : index
    %227 = vector.load %arg10[%c0_89, %c0_90] : memref<1x2xf32, #tpu.memory_space<vmem>>, vector<1x2xf32>
    %228 = vector.broadcast %227 : vector<1x2xf32> to vector<320x2xf32>
    %229 = arith.addf %226, %228 : vector<320x2xf32>
    %230 = vector.shape_cast %229 : vector<320x2xf32> to vector<5x64x2xf32>
    %c0_91 = arith.constant 0 : index
    %c0_92 = arith.constant 0 : index
    %c0_93 = arith.constant 0 : index
    %231 = vector.load %arg11[%c0_91, %c0_92, %c0_93] : memref<5x64x2xf32, #tpu.memory_space<vmem>>, vector<5x64x2xf32>
    tpu.vector_store %arg11[%c0_91, %c0_92, %c0_93], %230 {strides = array<i32>} : memref<5x64x2xf32, #tpu.memory_space<vmem>>, vector<5x64x2xf32>,
    return
  }
  func.func @transform_0(%arg0: i32) -> (i32, i32, i32) {
    %c0_i32 = arith.constant 0 : i32
    %c0_i32_0 = arith.constant 0 : i32
    %c0_i32_1 = arith.constant 0 : i32
    return %c0_i32, %arg0, %c0_i32_0 : i32, i32, i32
  }
  func.func @transform_1(%arg0: i32) -> (i32, i32) {
    %c0_i32 = arith.constant 0 : i32
    %c0_i32_0 = arith.constant 0 : i32
    %c0_i32_1 = arith.constant 0 : i32
    return %c0_i32, %c0_i32_0 : i32, i32
  }
  func.func @transform_2(%arg0: i32) -> (i32, i32) {
    %c0_i32 = arith.constant 0 : i32
    %c0_i32_0 = arith.constant 0 : i32
    %c0_i32_1 = arith.constant 0 : i32
    return %c0_i32, %c0_i32_0 : i32, i32
  }
  func.func @transform_3(%arg0: i32) -> (i32, i32) {
    %c0_i32 = arith.constant 0 : i32
    %c0_i32_0 = arith.constant 0 : i32
    %c0_i32_1 = arith.constant 0 : i32
    return %c0_i32, %c0_i32_0 : i32, i32
  }
  func.func @transform_4(%arg0: i32) -> (i32, i32) {
    %c0_i32 = arith.constant 0 : i32
    %c0_i32_0 = arith.constant 0 : i32
    %c0_i32_1 = arith.constant 0 : i32
    return %c0_i32, %c0_i32_0 : i32, i32
  }
  func.func @transform_5(%arg0: i32) -> (i32, i32) {
    %c0_i32 = arith.constant 0 : i32
    %c0_i32_0 = arith.constant 0 : i32
    %c0_i32_1 = arith.constant 0 : i32
    return %c0_i32, %c0_i32_0 : i32, i32
  }
  func.func @transform_6(%arg0: i32) -> (i32, i32) {
    %c0_i32 = arith.constant 0 : i32
    %c0_i32_0 = arith.constant 0 : i32
    %c0_i32_1 = arith.constant 0 : i32
    return %c0_i32, %c0_i32_0 : i32, i32
  }
  func.func @transform_7(%arg0: i32) -> (i32, i32) {
    %c0_i32 = arith.constant 0 : i32
    %c0_i32_0 = arith.constant 0 : i32
    %c0_i32_1 = arith.constant 0 : i32
    return %c0_i32, %c0_i32_0 : i32, i32
  }
  func.func @transform_8(%arg0: i32) -> (i32, i32) {
    %c0_i32 = arith.constant 0 : i32
    %c0_i32_0 = arith.constant 0 : i32
    %c0_i32_1 = arith.constant 0 : i32
    return %c0_i32, %c0_i32_0 : i32, i32
  }
  func.func @transform_9(%arg0: i32) -> (i32, i32) {
    %c0_i32 = arith.constant 0 : i32
    %c0_i32_0 = arith.constant 0 : i32
    %c0_i32_1 = arith.constant 0 : i32
    return %c0_i32, %c0_i32_0 : i32, i32
  }
  func.func @transform_10(%arg0: i32) -> (i32, i32, i32) {
    %c0_i32 = arith.constant 0 : i32
    %c0_i32_0 = arith.constant 0 : i32
    %c0_i32_1 = arith.constant 0 : i32
    return %c0_i32, %arg0, %c0_i32_0 : i32, i32, i32
  }
}

</mosaic_0001>

<llo_original>
// kernel: cpnn_forward.1
$region0: #{cpnn_forward.1}
  #allocation0 [shape = 'u32[]', space=smem, size = 0x4, offset = 0x4, fixed_abs, tag = 'smem constant byte address 0x4 - core index']
  #allocation1 [shape = 'u32[144,128]{1,0:T(1,128)}', space=vmem, size = 0x12000, scoped, tag = 'internal scratch']
  #allocation2 [shape = 'f32[320,128]{1,0:T(8,128)}', space=vmem, size = 0x28000, scoped, tag = 'scratch operand']
  #allocation3 [shape = 'f32[320,32]{1,0:T(8,128)}', space=vmem, size = 0x28000, scoped, tag = 'scratch operand']
  %s0 = inlined_call_operand.vmem [shape: f32[5,128,4], index: 0, kind: input, shape index: {}]
  %s1 = inlined_call_operand.vmem [shape: f32[4,128], index: 1, kind: input, shape index: {}]
  %s2 = inlined_call_operand.vmem [shape: f32[32,128], index: 2, kind: input, shape index: {}]
  %s3 = inlined_call_operand.vmem [shape: f32[1,128], index: 3, kind: input, shape index: {}]
  %s4 = inlined_call_operand.vmem [shape: f32[4,128], index: 4, kind: input, shape index: {}]
  %s5 = inlined_call_operand.vmem [shape: f32[32,128], index: 5, kind: input, shape index: {}]
  %s6 = inlined_call_operand.vmem [shape: f32[32,128], index: 6, kind: input, shape index: {}]
  %s7 = inlined_call_operand.vmem [shape: f32[1,128], index: 7, kind: input, shape index: {}]
  %s8 = inlined_call_operand.vmem [shape: f32[32,2], index: 8, kind: input, shape index: {}]
  %s9 = inlined_call_operand.vmem [shape: f32[1,2], index: 9, kind: input, shape index: {}]
  %s10 = inlined_call_operand.vmem [shape: f32[5,128,2], index: 10, kind: output, shape index: {}]
  %s11 = sld [smem:[#allocation0]]
  $region145: #{cpnn_forward.1} parent=0
    _
  %s13 = ssub.s32 1, %s11
  %s14 = scalar_select 0, %s13, %s11
  $region1: #{cpnn_forward.1} parent=0
    #allocation4 [shape = 'u8[327680]{0}', space=vmem, size = 0x50000, scoped, tag = 'input window, operand 0']
    #allocation5 [shape = 'u8[327680]{0}', space=vmem, size = 0x50000, scoped, tag = 'output window, operand 0']
    loop: start=0, step=1, limit=4
    $region2: #{cpnn_forward.1} parent=1 // loop_pre_header
      _
    $region3: #{cpnn_forward.1} parent=1 // loop_header
      %s16 = sphi 0, %s20
      %p17 = scmp.ge.s32.totalorder %s16, 4
      %s26 = sphi 0, %s28
      %s29 = sphi 0, %s26
      %s30 = sphi 0, %s29
      %s46 = sphi 0, %s30
      %s50 = sphi 0, %s50
      %s52 = sphi 0, %s50
      %s53 = sphi 0, %s52
      %s67 = sphi 0, %s53
      %s71 = sphi 0, %s71
      %s73 = sphi 0, %s71
      %s74 = sphi 0, %s73
      %s88 = sphi 0, %s74
      %s92 = sphi 0, %s92
      %s94 = sphi 0, %s92
      %s95 = sphi 0, %s94
      %s109 = sphi 0, %s95
      %s113 = sphi 0, %s113
      %s115 = sphi 0, %s113
      %s116 = sphi 0, %s115
      %s130 = sphi 0, %s116
      %s134 = sphi 0, %s134
      %s136 = sphi 0, %s134
      %s137 = sphi 0, %s136
      %s151 = sphi 0, %s137
      %s155 = sphi 0, %s155
      %s157 = sphi 0, %s155
      %s158 = sphi 0, %s157
      %s172 = sphi 0, %s158
      %s176 = sphi 0, %s176
      %s178 = sphi 0, %s176
      %s179 = sphi 0, %s178
      %s193 = sphi 0, %s179
      %s197 = sphi 0, %s197
      %s199 = sphi 0, %s197
      %s200 = sphi 0, %s199
      %s214 = sphi 0, %s200
      %s218 = sphi 0, %s218
      %s220 = sphi 0, %s218
      %s221 = sphi 0, %s220
      %s235 = sphi 0, %s221
      %s241 = sphi 0, %s243
      %s244 = sphi 0, %s241
      %s245 = sphi 0, %s244
      %s261 = sphi 0, %s245
    $region4: #{cpnn_forward.1} parent=1 // loop_header_branch
      %19 = sbr.rel (%p17) target = $region8
    $region5: #{cpnn_forward.1} parent=1 // loop_body
      %s21 = ssub.s32 %s16, 1
      %s22 = ssub.s32 %s16, 2
      %s23 = sadd.s32 %s16, 1
      %s24 = ssub.s32 %s16, %s23
      %p25 = scmp.eq.s32.totalorder %s24, 0
      %s27 = sadd.s32 %s26, 1
      %s28 = scalar_select %p25, %s26, %s27
      %p31 = pneg %p25
      %p32 = scmp.eq.s32.totalorder %s16, 1
      %p33 = por %p31, %p32
      %p34 = scmp.ne.s32.totalorder %s26, %s29
      %p35 = scmp.eq.s32.totalorder %s16, 0
      %p36 = por %p34, %p35
      %p37 = scmp.ne.s32.totalorder %s26, %s29
      %p38 = scmp.eq.s32.totalorder %s21, 1
      %p39 = por %p37, %p38
      %p40 = scmp.ne.s32.totalorder %s29, %s30
      %p41 = scmp.eq.s32.totalorder %s21, 0
      %p42 = por %p40, %p41
      %p43 = scmp.ne.s32.totalorder %s29, %s30
      %p44 = scmp.eq.s32.totalorder %s22, 1
      %p45 = por %p43, %p44
      %p47 = scmp.ne.s32.totalorder %s30, %s46
      %p48 = scmp.eq.s32.totalorder %s22, 0
      %p49 = por %p47, %p48
      %s51 = sadd.s32 %s50, 1
      %p54 = scmp.eq.s32.totalorder %s16, 1
      %p55 = scmp.ne.s32.totalorder %s50, %s52
      %p56 = scmp.eq.s32.totalorder %s16, 0
      %p57 = por %p55, %p56
      %p58 = scmp.ne.s32.totalorder %s50, %s52
      %p59 = scmp.eq.s32.totalorder %s21, 1
      %p60 = por %p58, %p59
      %p61 = scmp.ne.s32.totalorder %s52, %s53
      %p62 = scmp.eq.s32.totalorder %s21, 0
      %p63 = por %p61, %p62
      %p64 = scmp.ne.s32.totalorder %s52, %s53
      %p65 = scmp.eq.s32.totalorder %s22, 1
      %p66 = por %p64, %p65
      %p68 = scmp.ne.s32.totalorder %s53, %s67
      %p69 = scmp.eq.s32.totalorder %s22, 0
      %p70 = por %p68, %p69
      %s72 = sadd.s32 %s71, 1
      %p75 = scmp.eq.s32.totalorder %s16, 1
      %p76 = scmp.ne.s32.totalorder %s71, %s73
      %p77 = scmp.eq.s32.totalorder %s16, 0
      %p78 = por %p76, %p77
      %p79 = scmp.ne.s32.totalorder %s71, %s73
      %p80 = scmp.eq.s32.totalorder %s21, 1
      %p81 = por %p79, %p80
      %p82 = scmp.ne.s32.totalorder %s73, %s74
      %p83 = scmp.eq.s32.totalorder %s21, 0
      %p84 = por %p82, %p83
      %p85 = scmp.ne.s32.totalorder %s73, %s74
      %p86 = scmp.eq.s32.totalorder %s22, 1
      %p87 = por %p85, %p86
      %p89 = scmp.ne.s32.totalorder %s74, %s88
      %p90 = scmp.eq.s32.totalorder %s22, 0
      %p91 = por %p89, %p90
      %s93 = sadd.s32 %s92, 1
      %p96 = scmp.eq.s32.totalorder %s16, 1
      %p97 = scmp.ne.s32.totalorder %s92, %s94
      %p98 = scmp.eq.s32.totalorder %s16, 0
      %p99 = por %p97, %p98
      %p100 = scmp.ne.s32.totalorder %s92, %s94
      %p101 = scmp.eq.s32.totalorder %s21, 1
      %p102 = por %p100, %p101
      %p103 = scmp.ne.s32.totalorder %s94, %s95
      %p104 = scmp.eq.s32.totalorder %s21, 0
      %p105 = por %p103, %p104
      %p106 = scmp.ne.s32.totalorder %s94, %s95
      %p107 = scmp.eq.s32.totalorder %s22, 1
      %p108 = por %p106, %p107
      %p110 = scmp.ne.s32.totalorder %s95, %s109
      %p111 = scmp.eq.s32.totalorder %s22, 0
      %p112 = por %p110, %p111
      %s114 = sadd.s32 %s113, 1
      %p117 = scmp.eq.s32.totalorder %s16, 1
      %p118 = scmp.ne.s32.totalorder %s113, %s115
      %p119 = scmp.eq.s32.totalorder %s16, 0
      %p120 = por %p118, %p119
      %p121 = scmp.ne.s32.totalorder %s113, %s115
      %p122 = scmp.eq.s32.totalorder %s21, 1
      %p123 = por %p121, %p122
      %p124 = scmp.ne.s32.totalorder %s115, %s116
      %p125 = scmp.eq.s32.totalorder %s21, 0
      %p126 = por %p124, %p125
      %p127 = scmp.ne.s32.totalorder %s115, %s116
      %p128 = scmp.eq.s32.totalorder %s22, 1
      %p129 = por %p127, %p128
      %p131 = scmp.ne.s32.totalorder %s116, %s130
      %p132 = scmp.eq.s32.totalorder %s22, 0
      %p133 = por %p131, %p132
      %s135 = sadd.s32 %s134, 1
      %p138 = scmp.eq.s32.totalorder %s16, 1
      %p139 = scmp.ne.s32.totalorder %s134, %s136
      %p140 = scmp.eq.s32.totalorder %s16, 0
      %p141 = por %p139, %p140
      %p142 = scmp.ne.s32.totalorder %s134, %s136
      %p143 = scmp.eq.s32.totalorder %s21, 1
      %p144 = por %p142, %p143
      %p145 = scmp.ne.s32.totalorder %s136, %s137
      %p146 = scmp.eq.s32.totalorder %s21, 0
      %p147 = por %p145, %p146
      %p148 = scmp.ne.s32.totalorder %s136, %s137
      %p149 = scmp.eq.s32.totalorder %s22, 1
      %p150 = por %p148, %p149
      %p152 = scmp.ne.s32.totalorder %s137, %s151
      %p153 = scmp.eq.s32.totalorder %s22, 0
      %p154 = por %p152, %p153
      %s156 = sadd.s32 %s155, 1
      %p159 = scmp.eq.s32.totalorder %s16, 1
      %p160 = scmp.ne.s32.totalorder %s155, %s157
      %p161 = scmp.eq.s32.totalorder %s16, 0
      %p162 = por %p160, %p161
      %p163 = scmp.ne.s32.totalorder %s155, %s157
      %p164 = scmp.eq.s32.totalorder %s21, 1
      %p165 = por %p163, %p164
      %p166 = scmp.ne.s32.totalorder %s157, %s158
      %p167 = scmp.eq.s32.totalorder %s21, 0
      %p168 = por %p166, %p167
      %p169 = scmp.ne.s32.totalorder %s157, %s158
      %p170 = scmp.eq.s32.totalorder %s22, 1
      %p171 = por %p169, %p170
      %p173 = scmp.ne.s32.totalorder %s158, %s172
      %p174 = scmp.eq.s32.totalorder %s22, 0
      %p175 = por %p173, %p174
      %s177 = sadd.s32 %s176, 1
      %p180 = scmp.eq.s32.totalorder %s16, 1
      %p181 = scmp.ne.s32.totalorder %s176, %s178
      %p182 = scmp.eq.s32.totalorder %s16, 0
      %p183 = por %p181, %p182
      %p184 = scmp.ne.s32.totalorder %s176, %s178
      %p185 = scmp.eq.s32.totalorder %s21, 1
      %p186 = por %p184, %p185
      %p187 = scmp.ne.s32.totalorder %s178, %s179
      %p188 = scmp.eq.s32.totalorder %s21, 0
      %p189 = por %p187, %p188
      %p190 = scmp.ne.s32.totalorder %s178, %s179
      %p191 = scmp.eq.s32.totalorder %s22, 1
      %p192 = por %p190, %p191
      %p194 = scmp.ne.s32.totalorder %s179, %s193
      %p195 = scmp.eq.s32.totalorder %s22, 0
      %p196 = por %p194, %p195
      %s198 = sadd.s32 %s197, 1
      %p201 = scmp.eq.s32.totalorder %s16, 1
      %p202 = scmp.ne.s32.totalorder %s197, %s199
      %p203 = scmp.eq.s32.totalorder %s16, 0
      %p204 = por %p202, %p203
      %p205 = scmp.ne.s32.totalorder %s197, %s199
      %p206 = scmp.eq.s32.totalorder %s21, 1
      %p207 = por %p205, %p206
      %p208 = scmp.ne.s32.totalorder %s199, %s200
      %p209 = scmp.eq.s32.totalorder %s21, 0
      %p210 = por %p208, %p209
      %p211 = scmp.ne.s32.totalorder %s199, %s200
      %p212 = scmp.eq.s32.totalorder %s22, 1
      %p213 = por %p211, %p212
      %p215 = scmp.ne.s32.totalorder %s200, %s214
      %p216 = scmp.eq.s32.totalorder %s22, 0
      %p217 = por %p215, %p216
      %s219 = sadd.s32 %s218, 1
      %p222 = scmp.eq.s32.totalorder %s16, 1
      %p223 = scmp.ne.s32.totalorder %s218, %s220
      %p224 = scmp.eq.s32.totalorder %s16, 0
      %p225 = por %p223, %p224
      %p226 = scmp.ne.s32.totalorder %s218, %s220
      %p227 = scmp.eq.s32.totalorder %s21, 1
      %p228 = por %p226, %p227
      %p229 = scmp.ne.s32.totalorder %s220, %s221
      %p230 = scmp.eq.s32.totalorder %s21, 0
      %p231 = por %p229, %p230
      %p232 = scmp.ne.s32.totalorder %s220, %s221
      %p233 = scmp.eq.s32.totalorder %s22, 1
      %p234 = por %p232, %p233
      %p236 = scmp.ne.s32.totalorder %s221, %s235
      %p237 = scmp.eq.s32.totalorder %s22, 0
      %p238 = por %p236, %p237
      %s239 = ssub.s32 %s16, %s23
      %p240 = scmp.eq.s32.totalorder %s239, 0
      %s242 = sadd.s32 %s241, 1
      %s243 = scalar_select %p240, %s241, %s242
      %p246 = pneg %p240
      %p247 = scmp.eq.s32.totalorder %s16, 1
      %p248 = por %p246, %p247
      %p249 = scmp.ne.s32.totalorder %s241, %s244
      %p250 = scmp.eq.s32.totalorder %s16, 0
      %p251 = por %p249, %p250
      %p252 = scmp.ne.s32.totalorder %s241, %s244
      %p253 = scmp.eq.s32.totalorder %s21, 1
      %p254 = por %p252, %p253
      %p255 = scmp.ne.s32.totalorder %s244, %s245
      %p256 = scmp.eq.s32.totalorder %s21, 0
      %p257 = por %p255, %p256
      %p258 = scmp.ne.s32.totalorder %s244, %s245
      %p259 = scmp.eq.s32.totalorder %s22, 1
      %p260 = por %p258, %p259
      %p262 = scmp.ne.s32.totalorder %s245, %s261
      %p263 = scmp.eq.s32.totalorder %s22, 0
      %p264 = por %p262, %p263
      %p265 = scmp.le.s32.totalorder 1, %s16
      %p266 = scmp.lt.s32.totalorder %s16, 3
      %p267 = pnand %p265, %p266
      %p268 = pneg %p267
      // Predicated region
      $region9: #{cpnn_forward.1} parent=5 // pred_check
        _
      $region10: #{cpnn_forward.1} parent=5 // pred_check_branch
        %270 = sbr.rel (%p267) target = $region12
      $region11: #{cpnn_forward.1} parent=5 // pred_region
        %s271 = ssub.s32 %s16, 1
        // Predicated region
        $region13: #{cpnn_forward.1} parent=11 // pred_check
          %p272 = pneg %p63
        $region14: #{cpnn_forward.1} parent=11 // pred_check_branch
          %274 = sbr.rel (%p272) target = $region16
        $region15: #{cpnn_forward.1} parent=11 // pred_region
          _
        $region16: #{cpnn_forward.1} parent=11 // pred_fallthru
          _
        // Predicated region
        $region17: #{cpnn_forward.1} parent=11 // pred_check
          %p275 = pneg %p84
        $region18: #{cpnn_forward.1} parent=11 // pred_check_branch
          %277 = sbr.rel (%p275) target = $region20
        $region19: #{cpnn_forward.1} parent=11 // pred_region
          _
        $region20: #{cpnn_forward.1} parent=11 // pred_fallthru
          _
        // Predicated region
        $region21: #{cpnn_forward.1} parent=11 // pred_check
          %p278 = pneg %p105
        $region22: #{cpnn_forward.1} parent=11 // pred_check_branch
          %280 = sbr.rel (%p278) target = $region24
        $region23: #{cpnn_forward.1} parent=11 // pred_region
          _
        $region24: #{cpnn_forward.1} parent=11 // pred_fallthru
          _
        // Predicated region
        $region25: #{cpnn_forward.1} parent=11 // pred_check
          %p281 = pneg %p126
        $region26: #{cpnn_forward.1} parent=11 // pred_check_branch
          %283 = sbr.rel (%p281) target = $region28
        $region27: #{cpnn_forward.1} parent=11 // pred_region
          _
        $region28: #{cpnn_forward.1} parent=11 // pred_fallthru
          _
        // Predicated region
        $region29: #{cpnn_forward.1} parent=11 // pred_check
          %p284 = pneg %p147
        $region30: #{cpnn_forward.1} parent=11 // pred_check_branch
          %286 = sbr.rel (%p284) target = $region32
        $region31: #{cpnn_forward.1} parent=11 // pred_region
          _
        $region32: #{cpnn_forward.1} parent=11 // pred_fallthru
          _
        // Predicated region
        $region33: #{cpnn_forward.1} parent=11 // pred_check
          %p287 = pneg %p168
        $region34: #{cpnn_forward.1} parent=11 // pred_check_branch
          %289 = sbr.rel (%p287) target = $region36
        $region35: #{cpnn_forward.1} parent=11 // pred_region
          _
        $region36: #{cpnn_forward.1} parent=11 // pred_fallthru
          _
        // Predicated region
        $region37: #{cpnn_forward.1} parent=11 // pred_check
          %p290 = pneg %p189
        $region38: #{cpnn_forward.1} parent=11 // pred_check_branch
          %292 = sbr.rel (%p290) target = $region40
        $region39: #{cpnn_forward.1} parent=11 // pred_region
          _
        $region40: #{cpnn_forward.1} parent=11 // pred_fallthru
          _
        // Predicated region
        $region41: #{cpnn_forward.1} parent=11 // pred_check
          %p293 = pneg %p210
        $region42: #{cpnn_forward.1} parent=11 // pred_check_branch
          %295 = sbr.rel (%p293) target = $region44
        $region43: #{cpnn_forward.1} parent=11 // pred_region
          _
        $region44: #{cpnn_forward.1} parent=11 // pred_fallthru
          _
        // Predicated region
        $region45: #{cpnn_forward.1} parent=11 // pred_check
          %p296 = pneg %p231
        $region46: #{cpnn_forward.1} parent=11 // pred_check_branch
          %298 = sbr.rel (%p296) target = $region48
        $region47: #{cpnn_forward.1} parent=11 // pred_region
          _
        $region48: #{cpnn_forward.1} parent=11 // pred_fallthru
          _
      $region12: #{cpnn_forward.1} parent=5 // pred_fallthru
        _
      %p299 = scmp.lt.s32.totalorder %s16, 2
      // Predicated region
      $region49: #{cpnn_forward.1} parent=5 // pred_check
        %p300 = pneg %p299
      $region50: #{cpnn_forward.1} parent=5 // pred_check_branch
        %302 = sbr.rel (%p300) target = $region52
      $region51: #{cpnn_forward.1} parent=5 // pred_region
        // Predicated region
        $region53: #{cpnn_forward.1} parent=51 // pred_check
          %p303 = pneg %p36
        $region54: #{cpnn_forward.1} parent=51 // pred_check_branch
          %305 = sbr.rel (%p303) target = $region56
        $region55: #{cpnn_forward.1} parent=51 // pred_region
          %s306 = sand.u32 %s26, 1
          %s307 = sand.u32 %s26, 1
          %s308 = smul.addr %s307, 320
          %s309 = scalar_lea.vmem [#allocation4], %s308
          %s310 = smul.u32 8, %s16
          %s311 = smul.addr %s310, 8
          %s312 = scalar_lea.vmem %s0, %s311
          // Predicated region
          $region57: #{cpnn_forward.1} parent=55 // pred_check
            _
          $region58: #{cpnn_forward.1} parent=55 // pred_check_branch
            %314 = sbr.rel (0) target = $region60
          $region59: #{cpnn_forward.1} parent=55 // pred_region
            // Predicated region
            $region61: #{cpnn_forward.1} parent=59 // pred_check
              _
            $region62: #{cpnn_forward.1} parent=59 // pred_check_branch
              %316 = sbr.rel (0) target = $region64
            $region63: #{cpnn_forward.1} parent=59 // pred_region
              // Predicated region
              $region76: #{cpnn_forward.1} parent=63 // pred_check
                _
              $region77: #{cpnn_forward.1} parent=63 // pred_check_branch
                %409 = sbr.rel (0) target = $region79
              $region78: #{cpnn_forward.1} parent=63 // pred_region
                loop: start=0, step=1, limit=1
                $region80: #{cpnn_forward.1} parent=78 // loop_pre_header
                  _
                $region81: #{cpnn_forward.1} parent=78 // loop_header
                  %s411 = sphi 0, %s415
                  %p412 = scmp.ge.s32.totalorder %s411, 1
                  %s416 = sphi %s312, %s312
                  %s417 = sphi %s309, %s309
                $region82: #{cpnn_forward.1} parent=78 // loop_header_branch
                  %414 = sbr.rel (%p412) target = $region86
                $region83: #{cpnn_forward.1} parent=78 // loop_body
                  %v418 = vld [vmem:[%s416] sm:$0xff]
                  %419 = vst [vmem:[%s417] sm:$0xff] %v418
                  %v420 = vld [vmem:[%s416 + $0x8] sm:$0xff]
                  %421 = vst [vmem:[%s417 + $0x8] sm:$0xff] %v420
                  %v422 = vld [vmem:[%s416 + $0x10] sm:$0xff]
                  %423 = vst [vmem:[%s417 + $0x10] sm:$0xff] %v422
                  %v424 = vld [vmem:[%s416 + $0x18] sm:$0xff]
                  %425 = vst [vmem:[%s417 + $0x18] sm:$0xff] %v424
                  %v426 = vld [vmem:[%s416 + $0x20] sm:$0xff]
                  %427 = vst [vmem:[%s417 + $0x20] sm:$0xff] %v426
                  %v428 = vld [vmem:[%s416 + $0x28] sm:$0xff]
                  %429 = vst [vmem:[%s417 + $0x28] sm:$0xff] %v428
                  %v430 = vld [vmem:[%s416 + $0x30] sm:$0xff]
                  %431 = vst [vmem:[%s417 + $0x30] sm:$0xff] %v430
                  %v432 = vld [vmem:[%s416 + $0x38] sm:$0xff]
                  %433 = vst [vmem:[%s417 + $0x38] sm:$0xff] %v432
                  %v434 = vld [vmem:[%s416 + $0x80] sm:$0xff]
                  %435 = vst [vmem:[%s417 + $0x40] sm:$0xff] %v434
                  %v436 = vld [vmem:[%s416 + $0x88] sm:$0xff]
                  %437 = vst [vmem:[%s417 + $0x48] sm:$0xff] %v436
                  %v438 = vld [vmem:[%s416 + $0x90] sm:$0xff]
                  %439 = vst [vmem:[%s417 + $0x50] sm:$0xff] %v438
                  %v440 = vld [vmem:[%s416 + $0x98] sm:$0xff]
                  %441 = vst [vmem:[%s417 + $0x58] sm:$0xff] %v440
                  %v442 = vld [vmem:[%s416 + $0xa0] sm:$0xff]
                  %443 = vst [vmem:[%s417 + $0x60] sm:$0xff] %v442
                  %v444 = vld [vmem:[%s416 + $0xa8] sm:$0xff]
                  %445 = vst [vmem:[%s417 + $0x68] sm:$0xff] %v444
                  %v446 = vld [vmem:[%s416 + $0xb0] sm:$0xff]
                  %447 = vst [vmem:[%s417 + $0x70] sm:$0xff] %v446
                  %v448 = vld [vmem:[%s416 + $0xb8] sm:$0xff]
                  %449 = vst [vmem:[%s417 + $0x78] sm:$0xff] %v448
                  %v450 = vld [vmem:[%s416 + $0x100] sm:$0xff]
                  %451 = vst [vmem:[%s417 + $0x80] sm:$0xff] %v450
                  %v452 = vld [vmem:[%s416 + $0x108] sm:$0xff]
                  %453 = vst [vmem:[%s417 + $0x88] sm:$0xff] %v452
                  %v454 = vld [vmem:[%s416 + $0x110] sm:$0xff]
                  %455 = vst [vmem:[%s417 + $0x90] sm:$0xff] %v454
                  %v456 = vld [vmem:[%s416 + $0x118] sm:$0xff]
                  %457 = vst [vmem:[%s417 + $0x98] sm:$0xff] %v456
                  %v458 = vld [vmem:[%s416 + $0x120] sm:$0xff]
                  %459 = vst [vmem:[%s417 + $0xa0] sm:$0xff] %v458
                  %v460 = vld [vmem:[%s416 + $0x128] sm:$0xff]
                  %461 = vst [vmem:[%s417 + $0xa8] sm:$0xff] %v460
                  %v462 = vld [vmem:[%s416 + $0x130] sm:$0xff]
                  %463 = vst [vmem:[%s417 + $0xb0] sm:$0xff] %v462
                  %v464 = vld [vmem:[%s416 + $0x138] sm:$0xff]
                  %465 = vst [vmem:[%s417 + $0xb8] sm:$0xff] %v464
                  %v466 = vld [vmem:[%s416 + $0x180] sm:$0xff]
                  %467 = vst [vmem:[%s417 + $0xc0] sm:$0xff] %v466
                  %v468 = vld [vmem:[%s416 + $0x188] sm:$0xff]
                  %469 = vst [vmem:[%s417 + $0xc8] sm:$0xff] %v468
                  %v470 = vld [vmem:[%s416 + $0x190] sm:$0xff]
                  %471 = vst [vmem:[%s417 + $0xd0] sm:$0xff] %v470
                  %v472 = vld [vmem:[%s416 + $0x198] sm:$0xff]
                  %473 = vst [vmem:[%s417 + $0xd8] sm:$0xff] %v472
                  %v474 = vld [vmem:[%s416 + $0x1a0] sm:$0xff]
                  %475 = vst [vmem:[%s417 + $0xe0] sm:$0xff] %v474
                  %v476 = vld [vmem:[%s416 + $0x1a8] sm:$0xff]
                  %477 = vst [vmem:[%s417 + $0xe8] sm:$0xff] %v476
                  %v478 = vld [vmem:[%s416 + $0x1b0] sm:$0xff]
                  %479 = vst [vmem:[%s417 + $0xf0] sm:$0xff] %v478
                  %v480 = vld [vmem:[%s416 + $0x1b8] sm:$0xff]
                  %481 = vst [vmem:[%s417 + $0xf8] sm:$0xff] %v480
                  %v482 = vld [vmem:[%s416 + $0x200] sm:$0xff]
                  %483 = vst [vmem:[%s417 + $0x100] sm:$0xff] %v482
                  %v484 = vld [vmem:[%s416 + $0x208] sm:$0xff]
                  %485 = vst [vmem:[%s417 + $0x108] sm:$0xff] %v484
                  %v486 = vld [vmem:[%s416 + $0x210] sm:$0xff]
                  %487 = vst [vmem:[%s417 + $0x110] sm:$0xff] %v486
                  %v488 = vld [vmem:[%s416 + $0x218] sm:$0xff]
                  %489 = vst [vmem:[%s417 + $0x118] sm:$0xff] %v488
                  %v490 = vld [vmem:[%s416 + $0x220] sm:$0xff]
                  %491 = vst [vmem:[%s417 + $0x120] sm:$0xff] %v490
                  %v492 = vld [vmem:[%s416 + $0x228] sm:$0xff]
                  %493 = vst [vmem:[%s417 + $0x128] sm:$0xff] %v492
                  %v494 = vld [vmem:[%s416 + $0x230] sm:$0xff]
                  %495 = vst [vmem:[%s417 + $0x130] sm:$0xff] %v494
                  %v496 = vld [vmem:[%s416 + $0x238] sm:$0xff]
                  %497 = vst [vmem:[%s417 + $0x138] sm:$0xff] %v496
                $region84: #{cpnn_forward.1} parent=78 // loop_footer
                  %s415 = sadd.s32 1, %s411
                $region85: #{cpnn_forward.1} parent=78 // loop_footer_branch
                  %410 = sbr.rel target = $region81
                $region86: #{cpnn_forward.1} parent=78 // loop_exit
                  _
              $region79: #{cpnn_forward.1} parent=63 // pred_fallthru
                _
              // Predicated region
              $region87: #{cpnn_forward.1} parent=63 // pred_check
                _
              $region88: #{cpnn_forward.1} parent=63 // pred_check_branch
                %499 = sbr.rel target = $region90
              $region89: #{cpnn_forward.1} parent=63 // pred_region
                _
              $region90: #{cpnn_forward.1} parent=63 // pred_fallthru
                _
            $region64: #{cpnn_forward.1} parent=59 // pred_fallthru
              _
            // Predicated region
            $region65: #{cpnn_forward.1} parent=59 // pred_check
              _
            $region66: #{cpnn_forward.1} parent=59 // pred_check_branch
              %318 = sbr.rel target = $region68
            $region67: #{cpnn_forward.1} parent=59 // pred_region
              loop: start=0, step=1, limit=1
              $region69: #{cpnn_forward.1} parent=67 // loop_pre_header
                _
              $region70: #{cpnn_forward.1} parent=67 // loop_header
                %s321 = sphi 0, %s325
                %p322 = scmp.ge.s32.totalorder %s321, 1
                %s326 = sphi %s312, %s312
                %s327 = sphi %s309, %s309
              $region71: #{cpnn_forward.1} parent=67 // loop_header_branch
                %324 = sbr.rel (%p322) target = $region75
              $region72: #{cpnn_forward.1} parent=67 // loop_body
                %v328 = vld [vmem:[%s326] sm:$0xff]
                %329 = vst [vmem:[%s327] sm:$0xff] %v328
                %v330 = vld [vmem:[%s326 + $0x8] sm:$0xff]
                %331 = vst [vmem:[%s327 + $0x8] sm:$0xff] %v330
                %v332 = vld [vmem:[%s326 + $0x10] sm:$0xff]
                %333 = vst [vmem:[%s327 + $0x10] sm:$0xff] %v332
                %v334 = vld [vmem:[%s326 + $0x18] sm:$0xff]
                %335 = vst [vmem:[%s327 + $0x18] sm:$0xff] %v334
                %v336 = vld [vmem:[%s326 + $0x20] sm:$0xff]
                %337 = vst [vmem:[%s327 + $0x20] sm:$0xff] %v336
                %v338 = vld [vmem:[%s326 + $0x28] sm:$0xff]
                %339 = vst [vmem:[%s327 + $0x28] sm:$0xff] %v338
                %v340 = vld [vmem:[%s326 + $0x30] sm:$0xff]
                %341 = vst [vmem:[%s327 + $0x30] sm:$0xff] %v340
                %v342 = vld [vmem:[%s326 + $0x38] sm:$0xff]
                %343 = vst [vmem:[%s327 + $0x38] sm:$0xff] %v342
                %v344 = vld [vmem:[%s326 + $0x80] sm:$0xff]
                %345 = vst [vmem:[%s327 + $0x40] sm:$0xff] %v344
                %v346 = vld [vmem:[%s326 + $0x88] sm:$0xff]
                %347 = vst [vmem:[%s327 + $0x48] sm:$0xff] %v346
                %v348 = vld [vmem:[%s326 + $0x90] sm:$0xff]
                %349 = vst [vmem:[%s327 + $0x50] sm:$0xff] %v348
                %v350 = vld [vmem:[%s326 + $0x98] sm:$0xff]
                %351 = vst [vmem:[%s327 + $0x58] sm:$0xff] %v350
                %v352 = vld [vmem:[%s326 + $0xa0] sm:$0xff]
                %353 = vst [vmem:[%s327 + $0x60] sm:$0xff] %v352
                %v354 = vld [vmem:[%s326 + $0xa8] sm:$0xff]
                %355 = vst [vmem:[%s327 + $0x68] sm:$0xff] %v354
                %v356 = vld [vmem:[%s326 + $0xb0] sm:$0xff]
                %357 = vst [vmem:[%s327 + $0x70] sm:$0xff] %v356
                %v358 = vld [vmem:[%s326 + $0xb8] sm:$0xff]
                %359 = vst [vmem:[%s327 + $0x78] sm:$0xff] %v358
                %v360 = vld [vmem:[%s326 + $0x100] sm:$0xff]
                %361 = vst [vmem:[%s327 + $0x80] sm:$0xff] %v360
                %v362 = vld [vmem:[%s326 + $0x108] sm:$0xff]
                %363 = vst [vmem:[%s327 + $0x88] sm:$0xff] %v362
                %v364 = vld [vmem:[%s326 + $0x110] sm:$0xff]
                %365 = vst [vmem:[%s327 + $0x90] sm:$0xff] %v364
                %v366 = vld [vmem:[%s326 + $0x118] sm:$0xff]
                %367 = vst [vmem:[%s327 + $0x98] sm:$0xff] %v366
                %v368 = vld [vmem:[%s326 + $0x120] sm:$0xff]
                %369 = vst [vmem:[%s327 + $0xa0] sm:$0xff] %v368
                %v370 = vld [vmem:[%s326 + $0x128] sm:$0xff]
                %371 = vst [vmem:[%s327 + $0xa8] sm:$0xff] %v370
                %v372 = vld [vmem:[%s326 + $0x130] sm:$0xff]
                %373 = vst [vmem:[%s327 + $0xb0] sm:$0xff] %v372
                %v374 = vld [vmem:[%s326 + $0x138] sm:$0xff]
                %375 = vst [vmem:[%s327 + $0xb8] sm:$0xff] %v374
                %v376 = vld [vmem:[%s326 + $0x180] sm:$0xff]
                %377 = vst [vmem:[%s327 + $0xc0] sm:$0xff] %v376
                %v378 = vld [vmem:[%s326 + $0x188] sm:$0xff]
                %379 = vst [vmem:[%s327 + $0xc8] sm:$0xff] %v378
                %v380 = vld [vmem:[%s326 + $0x190] sm:$0xff]
                %381 = vst [vmem:[%s327 + $0xd0] sm:$0xff] %v380
                %v382 = vld [vmem:[%s326 + $0x198] sm:$0xff]
                %383 = vst [vmem:[%s327 + $0xd8] sm:$0xff] %v382
                %v384 = vld [vmem:[%s326 + $0x1a0] sm:$0xff]
                %385 = vst [vmem:[%s327 + $0xe0] sm:$0xff] %v384
                %v386 = vld [vmem:[%s326 + $0x1a8] sm:$0xff]
                %387 = vst [vmem:[%s327 + $0xe8] sm:$0xff] %v386
                %v388 = vld [vmem:[%s326 + $0x1b0] sm:$0xff]
                %389 = vst [vmem:[%s327 + $0xf0] sm:$0xff] %v388
                %v390 = vld [vmem:[%s326 + $0x1b8] sm:$0xff]
                %391 = vst [vmem:[%s327 + $0xf8] sm:$0xff] %v390
                %v392 = vld [vmem:[%s326 + $0x200] sm:$0xff]
                %393 = vst [vmem:[%s327 + $0x100] sm:$0xff] %v392
                %v394 = vld [vmem:[%s326 + $0x208] sm:$0xff]
                %395 = vst [vmem:[%s327 + $0x108] sm:$0xff] %v394
                %v396 = vld [vmem:[%s326 + $0x210] sm:$0xff]
                %397 = vst [vmem:[%s327 + $0x110] sm:$0xff] %v396
                %v398 = vld [vmem:[%s326 + $0x218] sm:$0xff]
                %399 = vst [vmem:[%s327 + $0x118] sm:$0xff] %v398
                %v400 = vld [vmem:[%s326 + $0x220] sm:$0xff]
                %401 = vst [vmem:[%s327 + $0x120] sm:$0xff] %v400
                %v402 = vld [vmem:[%s326 + $0x228] sm:$0xff]
                %403 = vst [vmem:[%s327 + $0x128] sm:$0xff] %v402
                %v404 = vld [vmem:[%s326 + $0x230] sm:$0xff]
                %405 = vst [vmem:[%s327 + $0x130] sm:$0xff] %v404
                %v406 = vld [vmem:[%s326 + $0x238] sm:$0xff]
                %407 = vst [vmem:[%s327 + $0x138] sm:$0xff] %v406
              $region73: #{cpnn_forward.1} parent=67 // loop_footer
                %s325 = sadd.s32 1, %s321
              $region74: #{cpnn_forward.1} parent=67 // loop_footer_branch
                %320 = sbr.rel target = $region70
              $region75: #{cpnn_forward.1} parent=67 // loop_exit
                _
            $region68: #{cpnn_forward.1} parent=59 // pred_fallthru
              _
          $region60: #{cpnn_forward.1} parent=55 // pred_fallthru
            _
          %500 = vnop
        $region56: #{cpnn_forward.1} parent=51 // pred_fallthru
          _
      $region52: #{cpnn_forward.1} parent=5 // pred_fallthru
        _
      %p501 = scmp.le.s32.totalorder 1, %s16
      %p502 = scmp.lt.s32.totalorder %s16, 3
      %p503 = pnand %p501, %p502
      %p504 = pneg %p503
      // Predicated region
      $region91: #{cpnn_forward.1} parent=5 // pred_check
        _
      $region92: #{cpnn_forward.1} parent=5 // pred_check_branch
        %506 = sbr.rel (%p503) target = $region94
      $region93: #{cpnn_forward.1} parent=5 // pred_region
        %s507 = ssub.s32 %s16, 1
        %s508 = sand.u32 %s29, 1
        %s509 = sand.u32 %s29, 1
        %s510 = smul.addr %s509, 320
        %s511 = scalar_lea.vmem [#allocation4], %s510
        // Predicated region
        $region95: #{cpnn_forward.1} parent=93 // pred_check
          %p512 = pneg %p42
        $region96: #{cpnn_forward.1} parent=93 // pred_check_branch
          %514 = sbr.rel (%p512) target = $region98
        $region97: #{cpnn_forward.1} parent=93 // pred_region
          _
        $region98: #{cpnn_forward.1} parent=93 // pred_fallthru
          _
        %s515 = sand.u32 %s29, 1
        %s516 = sand.u32 %s29, 1
        %s517 = smul.addr %s516, 320
        %s518 = scalar_lea.vmem [#allocation4], %s517
        %p519 = pneg %p42
        %p520 = pneg %p39
        %p521 = pneg %p63
        %p522 = pneg %p60
        %p523 = pneg %p84
        %p524 = pneg %p81
        %p525 = pneg %p105
        %p526 = pneg %p102
        %p527 = pneg %p126
        %p528 = pneg %p123
        %p529 = pneg %p147
        %p530 = pneg %p144
        %p531 = pneg %p168
        %p532 = pneg %p165
        %p533 = pneg %p189
        %p534 = pneg %p186
        %p535 = pneg %p210
        %p536 = pneg %p207
        %p537 = pneg %p231
        %p538 = pneg %p228
        %p539 = pneg %p257
        %p540 = pneg %p254
        %s541 = sand.u32 %s244, 1
        %s542 = sand.u32 %s244, 1
        %s543 = smul.addr %s542, 320
        %s544 = scalar_lea.vmem [#allocation5], %s543
        %s545 = smul.u32 8, %s21
        %s546 = smul.u32 8, %s21
        %v547 = vld [vmem:[%s511] sm:$0xff]
        %v548 = vld [vmem:[%s511 + $0x8] sm:$0xff]
        %v549 = vld [vmem:[%s511 + $0x10] sm:$0xff]
        %v550 = vld [vmem:[%s511 + $0x18] sm:$0xff]
        %v551 = vld [vmem:[%s511 + $0x20] sm:$0xff]
        %v552 = vld [vmem:[%s511 + $0x28] sm:$0xff]
        %v553 = vld [vmem:[%s511 + $0x30] sm:$0xff]
        %v554 = vld [vmem:[%s511 + $0x38] sm:$0xff]
        %v555 = vld [vmem:[%s511 + $0x40] sm:$0xff]
        %v556 = vld [vmem:[%s511 + $0x48] sm:$0xff]
        %v557 = vld [vmem:[%s511 + $0x50] sm:$0xff]
        %v558 = vld [vmem:[%s511 + $0x58] sm:$0xff]
        %v559 = vld [vmem:[%s511 + $0x60] sm:$0xff]
        %v560 = vld [vmem:[%s511 + $0x68] sm:$0xff]
        %v561 = vld [vmem:[%s511 + $0x70] sm:$0xff]
        %v562 = vld [vmem:[%s511 + $0x78] sm:$0xff]
        %v563 = vld [vmem:[%s511 + $0x80] sm:$0xff]
        %v564 = vld [vmem:[%s511 + $0x88] sm:$0xff]
        %v565 = vld [vmem:[%s511 + $0x90] sm:$0xff]
        %v566 = vld [vmem:[%s511 + $0x98] sm:$0xff]
        %v567 = vld [vmem:[%s511 + $0xa0] sm:$0xff]
        %v568 = vld [vmem:[%s511 + $0xa8] sm:$0xff]
        %v569 = vld [vmem:[%s511 + $0xb0] sm:$0xff]
        %v570 = vld [vmem:[%s511 + $0xb8] sm:$0xff]
        %v571 = vld [vmem:[%s511 + $0xc0] sm:$0xff]
        %v572 = vld [vmem:[%s511 + $0xc8] sm:$0xff]
        %v573 = vld [vmem:[%s511 + $0xd0] sm:$0xff]
        %v574 = vld [vmem:[%s511 + $0xd8] sm:$0xff]
        %v575 = vld [vmem:[%s511 + $0xe0] sm:$0xff]
        %v576 = vld [vmem:[%s511 + $0xe8] sm:$0xff]
        %v577 = vld [vmem:[%s511 + $0xf0] sm:$0xff]
        %v578 = vld [vmem:[%s511 + $0xf8] sm:$0xff]
        %v579 = vld [vmem:[%s511 + $0x100] sm:$0xff]
        %v580 = vld [vmem:[%s511 + $0x108] sm:$0xff]
        %v581 = vld [vmem:[%s511 + $0x110] sm:$0xff]
        %v582 = vld [vmem:[%s511 + $0x118] sm:$0xff]
        %v583 = vld [vmem:[%s511 + $0x120] sm:$0xff]
        %v584 = vld [vmem:[%s511 + $0x128] sm:$0xff]
        %v585 = vld [vmem:[%s511 + $0x130] sm:$0xff]
        %v586 = vld [vmem:[%s511 + $0x138] sm:$0xff]
        %v587 = vld [vmem:[%s1] sm:$0xf]
        %v588 = vld [vmem:[%s3] sm:$0x1]
        %v590 = vlaneseq
        %v591 = vshrl.u32 %v590, 7
        %v592 = vsub.s32 0, %v591
        %v593 = vrot.slane %v588, %v592
        %vm595 = vcmask 31744
        %v597 = vsel %vm595, %v547, 0
        %v600 = vsel %vm595, %v548, 0
        %v603 = vsel %vm595, %v549, 0
        %v606 = vsel %vm595, %v550, 0
        %v609 = vsel %vm595, %v551, 0
        %v612 = vsel %vm595, %v552, 0
        %v615 = vsel %vm595, %v553, 0
        %v618 = vsel %vm595, %v554, 0
        %v621 = vsel %vm595, %v555, 0
        %v624 = vsel %vm595, %v556, 0
        %v627 = vsel %vm595, %v557, 0
        %v630 = vsel %vm595, %v558, 0
        %v633 = vsel %vm595, %v559, 0
        %v636 = vsel %vm595, %v560, 0
        %v639 = vsel %vm595, %v561, 0
        %v642 = vsel %vm595, %v562, 0
        %v645 = vsel %vm595, %v563, 0
        %v648 = vsel %vm595, %v564, 0
        %v651 = vsel %vm595, %v565, 0
        %v654 = vsel %vm595, %v566, 0
        %v657 = vsel %vm595, %v567, 0
        %v660 = vsel %vm595, %v568, 0
        %v663 = vsel %vm595, %v569, 0
        %v666 = vsel %vm595, %v570, 0
        %v669 = vsel %vm595, %v571, 0
        %v672 = vsel %vm595, %v572, 0
        %v675 = vsel %vm595, %v573, 0
        %v678 = vsel %vm595, %v574, 0
        %v681 = vsel %vm595, %v575, 0
        %v684 = vsel %vm595, %v576, 0
        %v687 = vsel %vm595, %v577, 0
        %v690 = vsel %vm595, %v578, 0
        %v693 = vsel %vm595, %v579, 0
        %v696 = vsel %vm595, %v580, 0
        %v699 = vsel %vm595, %v581, 0
        %v702 = vsel %vm595, %v582, 0
        %v705 = vsel %vm595, %v583, 0
        %v708 = vsel %vm595, %v584, 0
        %v711 = vsel %vm595, %v585, 0
        %v714 = vsel %vm595, %v586, 0
        %vm716 = vcmask 1043456
        %v718 = vsel %vm716, %v587, 0
        %720 = vmatprep.subr.mxu0 0.0
        %721 = vmatpush1.msra.mxu0 %v718
        %722 = vmatprep.subr.mxu0 0.0
        %723 = vmatpush1.msra.mxu0 0.0
        %724 = vmatprep.subr.mxu0 0.0
        %725 = vmatpush1.msra.mxu0 0.0
        %726 = vmatprep.subr.mxu0 0.0
        %727 = vmatpush1.msra.mxu0 0.0
        %728 = vmatprep.subr.mxu0 0.0
        %729 = vmatpush1.msra.mxu0 0.0
        %730 = vmatprep.subr.mxu0 0.0
        %731 = vmatpush1.msra.mxu0 0.0
        %732 = vmatprep.subr.mxu0 0.0
        %733 = vmatpush1.msra.mxu0 0.0
        %734 = vmatprep.subr.mxu0 0.0
        %735 = vmatpush1.msra.mxu0 0.0
        %736 = vmatprep.subr.mxu0 0.0
        %737 = vmatpush1.msra.mxu0 0.0
        %738 = vmatprep.subr.mxu0 0.0
        %739 = vmatpush1.msra.mxu0 0.0
        %740 = vmatprep.subr.mxu0 0.0
        %741 = vmatpush1.msra.mxu0 0.0
        %742 = vmatprep.subr.mxu0 0.0
        %743 = vmatpush1.msra.mxu0 0.0
        %744 = vmatprep.subr.mxu0 0.0
        %745 = vmatpush1.msra.mxu0 0.0
        %746 = vmatprep.subr.mxu0 0.0
        %747 = vmatpush1.msra.mxu0 0.0
        %748 = vmatprep.subr.mxu0 0.0
        %749 = vmatpush1.msra.mxu0 0.0
        %750 = vmatprep.subr.mxu0 0.0
        %751 = vmatpush1.msra.mxu0 0.0
        %752 = vmatprep.subr.mxu0 0.0
        %753 = vmatpush1.msra.mxu0 0.0
        %754 = vmatprep.subr.mxu0 0.0
        %755 = vmatpush1.msra.mxu0 0.0
        %756 = vmatprep.subr.mxu0 0.0
        %757 = vmatpush1.msra.mxu0 0.0
        %758 = vmatprep.subr.mxu0 0.0
        %759 = vmatpush1.msra.mxu0 0.0
        %760 = vmatprep.subr.mxu0 0.0
        %761 = vmatpush1.msra.mxu0 0.0
        %762 = vmatprep.subr.mxu0 0.0
        %763 = vmatpush1.msra.mxu0 0.0
        %764 = vmatprep.subr.mxu0 0.0
        %765 = vmatpush1.msra.mxu0 0.0
        %766 = vmatprep.subr.mxu0 0.0
        %767 = vmatpush1.msra.mxu0 0.0
        %768 = vmatprep.subr.mxu0 0.0
        %769 = vmatpush1.msra.mxu0 0.0
        %770 = vmatprep.subr.mxu0 0.0
        %771 = vmatpush1.msra.mxu0 0.0
        %772 = vmatprep.subr.mxu0 0.0
        %773 = vmatpush1.msra.mxu0 0.0
        %774 = vmatprep.subr.mxu0 0.0
        %775 = vmatpush1.msra.mxu0 0.0
        %776 = vmatprep.subr.mxu0 0.0
        %777 = vmatpush1.msra.mxu0 0.0
        %778 = vmatprep.subr.mxu0 0.0
        %779 = vmatpush1.msra.mxu0 0.0
        %780 = vmatprep.subr.mxu0 0.0
        %781 = vmatpush1.msra.mxu0 0.0
        %782 = vmatprep.subr.mxu0 0.0
        %783 = vmatpush1.msra.mxu0 0.0
        %784 = vmatprep.mubr.f32.mxu0 0.0
        %785 = vmatmul.mubr.f32.gmra.mrb[0].mxu0 %v597
        %v786 = vpop.f32.mrb[0].mxu0
        %v787 = vadd.f32 %v593, %v786
        %v788 = vpop.f32.mrb[0].mxu0
        %789 = vmatprep.mubr.f32.mxu0 0.0
        %790 = vmatmul.mubr.f32.gmra.mrb[0].mxu0 %v600
        %v791 = vpop.f32.mrb[0].mxu0
        %v792 = vadd.f32 %v593, %v791
        %v793 = vpop.f32.mrb[0].mxu0
        %794 = vmatprep.mubr.f32.mxu0 0.0
        %795 = vmatmul.mubr.f32.gmra.mrb[0].mxu0 %v603
        %v796 = vpop.f32.mrb[0].mxu0
        %v797 = vadd.f32 %v593, %v796
        %v798 = vpop.f32.mrb[0].mxu0
        %799 = vmatprep.mubr.f32.mxu0 0.0
        %800 = vmatmul.mubr.f32.gmra.mrb[0].mxu0 %v606
        %v801 = vpop.f32.mrb[0].mxu0
        %v802 = vadd.f32 %v593, %v801
        %v803 = vpop.f32.mrb[0].mxu0
        %804 = vmatprep.mubr.f32.mxu0 0.0
        %805 = vmatmul.mubr.f32.gmra.mrb[0].mxu0 %v609
        %v806 = vpop.f32.mrb[0].mxu0
        %v807 = vadd.f32 %v593, %v806
        %v808 = vpop.f32.mrb[0].mxu0
        %809 = vmatprep.mubr.f32.mxu0 0.0
        %810 = vmatmul.mubr.f32.gmra.mrb[0].mxu0 %v612
        %v811 = vpop.f32.mrb[0].mxu0
        %v812 = vadd.f32 %v593, %v811
        %v813 = vpop.f32.mrb[0].mxu0
        %814 = vmatprep.mubr.f32.mxu0 0.0
        %815 = vmatmul.mubr.f32.gmra.mrb[0].mxu0 %v615
        %v816 = vpop.f32.mrb[0].mxu0
        %v817 = vadd.f32 %v593, %v816
        %v818 = vpop.f32.mrb[0].mxu0
        %819 = vmatprep.mubr.f32.mxu0 0.0
        %820 = vmatmul.mubr.f32.gmra.mrb[0].mxu0 %v618
        %v821 = vpop.f32.mrb[0].mxu0
        %v822 = vadd.f32 %v593, %v821
        %v823 = vpop.f32.mrb[0].mxu0
        %824 = vmatprep.mubr.f32.mxu0 0.0
        %825 = vmatmul.mubr.f32.gmra.mrb[0].mxu0 %v621
        %v826 = vpop.f32.mrb[0].mxu0
        %v827 = vadd.f32 %v593, %v826
        %v828 = vpop.f32.mrb[0].mxu0
        %829 = vmatprep.mubr.f32.mxu0 0.0
        %830 = vmatmul.mubr.f32.gmra.mrb[0].mxu0 %v624
        %v831 = vpop.f32.mrb[0].mxu0
        %v832 = vadd.f32 %v593, %v831
        %v833 = vpop.f32.mrb[0].mxu0
        %834 = vmatprep.mubr.f32.mxu0 0.0
        %835 = vmatmul.mubr.f32.gmra.mrb[0].mxu0 %v627
        %v836 = vpop.f32.mrb[0].mxu0
        %v837 = vadd.f32 %v593, %v836
        %v838 = vpop.f32.mrb[0].mxu0
        %839 = vmatprep.mubr.f32.mxu0 0.0
        %840 = vmatmul.mubr.f32.gmra.mrb[0].mxu0 %v630
        %v841 = vpop.f32.mrb[0].mxu0
        %v842 = vadd.f32 %v593, %v841
        %v843 = vpop.f32.mrb[0].mxu0
        %844 = vmatprep.mubr.f32.mxu0 0.0
        %845 = vmatmul.mubr.f32.gmra.mrb[0].mxu0 %v633
        %v846 = vpop.f32.mrb[0].mxu0
        %v847 = vadd.f32 %v593, %v846
        %v848 = vpop.f32.mrb[0].mxu0
        %849 = vmatprep.mubr.f32.mxu0 0.0
        %850 = vmatmul.mubr.f32.gmra.mrb[0].mxu0 %v636
        %v851 = vpop.f32.mrb[0].mxu0
        %v852 = vadd.f32 %v593, %v851
        %v853 = vpop.f32.mrb[0].mxu0
        %854 = vmatprep.mubr.f32.mxu0 0.0
        %855 = vmatmul.mubr.f32.gmra.mrb[0].mxu0 %v639
        %v856 = vpop.f32.mrb[0].mxu0
        %v857 = vadd.f32 %v593, %v856
        %v858 = vpop.f32.mrb[0].mxu0
        %859 = vmatprep.mubr.f32.mxu0 0.0
        %860 = vmatmul.mubr.f32.gmra.mrb[0].mxu0 %v642
        %v861 = vpop.f32.mrb[0].mxu0
        %v862 = vadd.f32 %v593, %v861
        %v863 = vpop.f32.mrb[0].mxu0
        %864 = vmatprep.mubr.f32.mxu0 0.0
        %865 = vmatmul.mubr.f32.gmra.mrb[0].mxu0 %v645
        %v866 = vpop.f32.mrb[0].mxu0
        %v867 = vadd.f32 %v593, %v866
        %v868 = vpop.f32.mrb[0].mxu0
        %869 = vmatprep.mubr.f32.mxu0 0.0
        %870 = vmatmul.mubr.f32.gmra.mrb[0].mxu0 %v648
        %v871 = vpop.f32.mrb[0].mxu0
        %v872 = vadd.f32 %v593, %v871
        %v873 = vpop.f32.mrb[0].mxu0
        %874 = vmatprep.mubr.f32.mxu0 0.0
        %875 = vmatmul.mubr.f32.gmra.mrb[0].mxu0 %v651
        %v876 = vpop.f32.mrb[0].mxu0
        %v877 = vadd.f32 %v593, %v876
        %v878 = vpop.f32.mrb[0].mxu0
        %879 = vmatprep.mubr.f32.mxu0 0.0
        %880 = vmatmul.mubr.f32.gmra.mrb[0].mxu0 %v654
        %v881 = vpop.f32.mrb[0].mxu0
        %v882 = vadd.f32 %v593, %v881
        %v883 = vpop.f32.mrb[0].mxu0
        %884 = vmatprep.mubr.f32.mxu0 0.0
        %885 = vmatmul.mubr.f32.gmra.mrb[0].mxu0 %v657
        %v886 = vpop.f32.mrb[0].mxu0
        %v887 = vadd.f32 %v593, %v886
        %v888 = vpop.f32.mrb[0].mxu0
        %889 = vmatprep.mubr.f32.mxu0 0.0
        %890 = vmatmul.mubr.f32.gmra.mrb[0].mxu0 %v660
        %v891 = vpop.f32.mrb[0].mxu0
        %v892 = vadd.f32 %v593, %v891
        %v893 = vpop.f32.mrb[0].mxu0
        %894 = vmatprep.mubr.f32.mxu0 0.0
        %895 = vmatmul.mubr.f32.gmra.mrb[0].mxu0 %v663
        %v896 = vpop.f32.mrb[0].mxu0
        %v897 = vadd.f32 %v593, %v896
        %v898 = vpop.f32.mrb[0].mxu0
        %899 = vmatprep.mubr.f32.mxu0 0.0
        %900 = vmatmul.mubr.f32.gmra.mrb[0].mxu0 %v666
        %v901 = vpop.f32.mrb[0].mxu0
        %v902 = vadd.f32 %v593, %v901
        %v903 = vpop.f32.mrb[0].mxu0
        %904 = vmatprep.mubr.f32.mxu0 0.0
        %905 = vmatmul.mubr.f32.gmra.mrb[0].mxu0 %v669
        %v906 = vpop.f32.mrb[0].mxu0
        %v907 = vadd.f32 %v593, %v906
        %v908 = vpop.f32.mrb[0].mxu0
        %909 = vmatprep.mubr.f32.mxu0 0.0
        %910 = vmatmul.mubr.f32.gmra.mrb[0].mxu0 %v672
        %v911 = vpop.f32.mrb[0].mxu0
        %v912 = vadd.f32 %v593, %v911
        %v913 = vpop.f32.mrb[0].mxu0
        %914 = vmatprep.mubr.f32.mxu0 0.0
        %915 = vmatmul.mubr.f32.gmra.mrb[0].mxu0 %v675
        %v916 = vpop.f32.mrb[0].mxu0
        %v917 = vadd.f32 %v593, %v916
        %v918 = vpop.f32.mrb[0].mxu0
        %919 = vmatprep.mubr.f32.mxu0 0.0
        %920 = vmatmul.mubr.f32.gmra.mrb[0].mxu0 %v678
        %v921 = vpop.f32.mrb[0].mxu0
        %v922 = vadd.f32 %v593, %v921
        %v923 = vpop.f32.mrb[0].mxu0
        %924 = vmatprep.mubr.f32.mxu0 0.0
        %925 = vmatmul.mubr.f32.gmra.mrb[0].mxu0 %v681
        %v926 = vpop.f32.mrb[0].mxu0
        %v927 = vadd.f32 %v593, %v926
        %v928 = vpop.f32.mrb[0].mxu0
        %929 = vmatprep.mubr.f32.mxu0 0.0
        %930 = vmatmul.mubr.f32.gmra.mrb[0].mxu0 %v684
        %v931 = vpop.f32.mrb[0].mxu0
        %v932 = vadd.f32 %v593, %v931
        %v933 = vpop.f32.mrb[0].mxu0
        %934 = vmatprep.mubr.f32.mxu0 0.0
        %935 = vmatmul.mubr.f32.gmra.mrb[0].mxu0 %v687
        %v936 = vpop.f32.mrb[0].mxu0
        %v937 = vadd.f32 %v593, %v936
        %v938 = vpop.f32.mrb[0].mxu0
        %939 = vmatprep.mubr.f32.mxu0 0.0
        %940 = vmatmul.mubr.f32.gmra.mrb[0].mxu0 %v690
        %v941 = vpop.f32.mrb[0].mxu0
        %v942 = vadd.f32 %v593, %v941
        %v943 = vpop.f32.mrb[0].mxu0
        %944 = vmatprep.mubr.f32.mxu0 0.0
        %945 = vmatmul.mubr.f32.gmra.mrb[0].mxu0 %v693
        %v946 = vpop.f32.mrb[0].mxu0
        %v947 = vadd.f32 %v593, %v946
        %v948 = vpop.f32.mrb[0].mxu0
        %949 = vmatprep.mubr.f32.mxu0 0.0
        %950 = vmatmul.mubr.f32.gmra.mrb[0].mxu0 %v696
        %v951 = vpop.f32.mrb[0].mxu0
        %v952 = vadd.f32 %v593, %v951
        %v953 = vpop.f32.mrb[0].mxu0
        %954 = vmatprep.mubr.f32.mxu0 0.0
        %955 = vmatmul.mubr.f32.gmra.mrb[0].mxu0 %v699
        %v956 = vpop.f32.mrb[0].mxu0
        %v957 = vadd.f32 %v593, %v956
        %v958 = vpop.f32.mrb[0].mxu0
        %959 = vmatprep.mubr.f32.mxu0 0.0
        %960 = vmatmul.mubr.f32.gmra.mrb[0].mxu0 %v702
        %v961 = vpop.f32.mrb[0].mxu0
        %v962 = vadd.f32 %v593, %v961
        %v963 = vpop.f32.mrb[0].mxu0
        %964 = vmatprep.mubr.f32.mxu0 0.0
        %965 = vmatmul.mubr.f32.gmra.mrb[0].mxu0 %v705
        %v966 = vpop.f32.mrb[0].mxu0
        %v967 = vadd.f32 %v593, %v966
        %v968 = vpop.f32.mrb[0].mxu0
        %969 = vmatprep.mubr.f32.mxu0 0.0
        %970 = vmatmul.mubr.f32.gmra.mrb[0].mxu0 %v708
        %v971 = vpop.f32.mrb[0].mxu0
        %v972 = vadd.f32 %v593, %v971
        %v973 = vpop.f32.mrb[0].mxu0
        %974 = vmatprep.mubr.f32.mxu0 0.0
        %975 = vmatmul.mubr.f32.gmra.mrb[0].mxu0 %v711
        %v976 = vpop.f32.mrb[0].mxu0
        %v977 = vadd.f32 %v593, %v976
        %v978 = vpop.f32.mrb[0].mxu0
        %979 = vmatprep.mubr.f32.mxu0 0.0
        %980 = vmatmul.mubr.f32.gmra.mrb[0].mxu0 %v714
        %v981 = vpop.f32.mrb[0].mxu0
        %v982 = vadd.f32 %v593, %v981
        %v983 = vpop.f32.mrb[0].mxu0
        %984 = vdwg.mxu0
        %985 = vst [vmem:[#allocation2] sm:$0xff] %v787
        %986 = vst [vmem:[#allocation2 + $0x8] sm:$0xff] %v792
        %987 = vst [vmem:[#allocation2 + $0x10] sm:$0xff] %v797
        %988 = vst [vmem:[#allocation2 + $0x18] sm:$0xff] %v802
        %989 = vst [vmem:[#allocation2 + $0x20] sm:$0xff] %v807
        %990 = vst [vmem:[#allocation2 + $0x28] sm:$0xff] %v812
        %991 = vst [vmem:[#allocation2 + $0x30] sm:$0xff] %v817
        %992 = vst [vmem:[#allocation2 + $0x38] sm:$0xff] %v822
        %993 = vst [vmem:[#allocation2 + $0x40] sm:$0xff] %v827
        %994 = vst [vmem:[#allocation2 + $0x48] sm:$0xff] %v832
        %995 = vst [vmem:[#allocation2 + $0x50] sm:$0xff] %v837
        %996 = vst [vmem:[#allocation2 + $0x58] sm:$0xff] %v842
        %997 = vst [vmem:[#allocation2 + $0x60] sm:$0xff] %v847
        %998 = vst [vmem:[#allocation2 + $0x68] sm:$0xff] %v852
        %999 = vst [vmem:[#allocation2 + $0x70] sm:$0xff] %v857
        %1000 = vst [vmem:[#allocation2 + $0x78] sm:$0xff] %v862
        %1001 = vst [vmem:[#allocation2 + $0x80] sm:$0xff] %v867
        %1002 = vst [vmem:[#allocation2 + $0x88] sm:$0xff] %v872
        %1003 = vst [vmem:[#allocation2 + $0x90] sm:$0xff] %v877
        %1004 = vst [vmem:[#allocation2 + $0x98] sm:$0xff] %v882
        %1005 = vst [vmem:[#allocation2 + $0xa0] sm:$0xff] %v887
        %1006 = vst [vmem:[#allocation2 + $0xa8] sm:$0xff] %v892
        %1007 = vst [vmem:[#allocation2 + $0xb0] sm:$0xff] %v897
        %1008 = vst [vmem:[#allocation2 + $0xb8] sm:$0xff] %v902
        %1009 = vst [vmem:[#allocation2 + $0xc0] sm:$0xff] %v907
        %1010 = vst [vmem:[#allocation2 + $0xc8] sm:$0xff] %v912
        %1011 = vst [vmem:[#allocation2 + $0xd0] sm:$0xff] %v917
        %1012 = vst [vmem:[#allocation2 + $0xd8] sm:$0xff] %v922
        %1013 = vst [vmem:[#allocation2 + $0xe0] sm:$0xff] %v927
        %1014 = vst [vmem:[#allocation2 + $0xe8] sm:$0xff] %v932
        %1015 = vst [vmem:[#allocation2 + $0xf0] sm:$0xff] %v937
        %1016 = vst [vmem:[#allocation2 + $0xf8] sm:$0xff] %v942
        %1017 = vst [vmem:[#allocation2 + $0x100] sm:$0xff] %v947
        %1018 = vst [vmem:[#allocation2 + $0x108] sm:$0xff] %v952
        %1019 = vst [vmem:[#allocation2 + $0x110] sm:$0xff] %v957
        %1020 = vst [vmem:[#allocation2 + $0x118] sm:$0xff] %v962
        %1021 = vst [vmem:[#allocation2 + $0x120] sm:$0xff] %v967
        %1022 = vst [vmem:[#allocation2 + $0x128] sm:$0xff] %v972
        %1023 = vst [vmem:[#allocation2 + $0x130] sm:$0xff] %v977
        %1024 = vst [vmem:[#allocation2 + $0x138] sm:$0xff] %v982
        %v1025 = vld [vmem:[%s2] sm:$0xff]
        %v1026 = vld [vmem:[%s2 + $0x8] sm:$0xff]
        %v1027 = vld [vmem:[%s2 + $0x10] sm:$0xff]
        %v1028 = vld [vmem:[%s2 + $0x18] sm:$0xff]
        %v1029 = vld [vmem:[#allocation2] sm:$0xff]
        %v1030 = vld [vmem:[#allocation2 + $0x8] sm:$0xff]
        %v1031 = vld [vmem:[#allocation2 + $0x10] sm:$0xff]
        %v1032 = vld [vmem:[#allocation2 + $0x18] sm:$0xff]
        %v1033 = vld [vmem:[#allocation2 + $0x20] sm:$0xff]
        %v1034 = vld [vmem:[#allocation2 + $0x28] sm:$0xff]
        %v1035 = vld [vmem:[#allocation2 + $0x30] sm:$0xff]
        %v1036 = vld [vmem:[#allocation2 + $0x38] sm:$0xff]
        %vm1037 = vcmask 261120
        %v1039 = vsel %vm1037, 0.0, 0
        %1041 = vmatprep.subr.mxu0 0.0
        %1042 = vmatpush1.msra.mxu0 %v1025
        %1043 = vmatprep.subr.mxu0 0.0
        %1044 = vmatpush1.msra.mxu0 %v1026
        %1045 = vmatprep.subr.mxu0 0.0
        %1046 = vmatpush1.msra.mxu0 %v1027
        %1047 = vmatprep.subr.mxu0 0.0
        %1048 = vmatpush1.msra.mxu0 %v1028
        %1049 = vmatprep.subr.mxu0 0.0
        %1050 = vmatpush1.msra.mxu0 0.0
        %1051 = vmatprep.subr.mxu0 0.0
        %1052 = vmatpush1.msra.mxu0 0.0
        %1053 = vmatprep.subr.mxu0 0.0
        %1054 = vmatpush1.msra.mxu0 0.0
        %1055 = vmatprep.subr.mxu0 0.0
        %1056 = vmatpush1.msra.mxu0 0.0
        %1057 = vmatprep.subr.mxu0 0.0
        %1058 = vmatpush1.msra.mxu0 0.0
        %1059 = vmatprep.subr.mxu0 0.0
        %1060 = vmatpush1.msra.mxu0 0.0
        %1061 = vmatprep.subr.mxu0 0.0
        %1062 = vmatpush1.msra.mxu0 0.0
        %1063 = vmatprep.subr.mxu0 0.0
        %1064 = vmatpush1.msra.mxu0 0.0
        %1065 = vmatprep.subr.mxu0 0.0
        %1066 = vmatpush1.msra.mxu0 0.0
        %1067 = vmatprep.subr.mxu0 0.0
        %1068 = vmatpush1.msra.mxu0 0.0
        %1069 = vmatprep.subr.mxu0 0.0
        %1070 = vmatpush1.msra.mxu0 0.0
        %1071 = vmatprep.subr.mxu0 0.0
        %1072 = vmatpush1.msra.mxu0 0.0
        %1073 = vmatprep.subr.mxu0 0.0
        %1074 = vmatpush1.msra.mxu0 0.0
        %1075 = vmatprep.subr.mxu0 0.0
        %1076 = vmatpush1.msra.mxu0 0.0
        %1077 = vmatprep.subr.mxu0 0.0
        %1078 = vmatpush1.msra.mxu0 0.0
        %1079 = vmatprep.subr.mxu0 0.0
        %1080 = vmatpush1.msra.mxu0 0.0
        %1081 = vmatprep.subr.mxu0 0.0
        %1082 = vmatpush1.msra.mxu0 0.0
        %1083 = vmatprep.subr.mxu0 0.0
        %1084 = vmatpush1.msra.mxu0 0.0
        %1085 = vmatprep.subr.mxu0 0.0
        %1086 = vmatpush1.msra.mxu0 0.0
        %1087 = vmatprep.subr.mxu0 0.0
        %1088 = vmatpush1.msra.mxu0 0.0
        %1089 = vmatprep.subr.mxu0 0.0
        %1090 = vmatpush1.msra.mxu0 0.0
        %1091 = vmatprep.subr.mxu0 0.0
        %1092 = vmatpush1.msra.mxu0 0.0
        %1093 = vmatprep.subr.mxu0 0.0
        %1094 = vmatpush1.msra.mxu0 0.0
        %1095 = vmatprep.subr.mxu0 0.0
        %1096 = vmatpush1.msra.mxu0 0.0
        %1097 = vmatprep.subr.mxu0 0.0
        %1098 = vmatpush1.msra.mxu0 0.0
        %1099 = vmatprep.subr.mxu0 0.0
        %1100 = vmatpush1.msra.mxu0 0.0
        %1101 = vmatprep.subr.mxu0 0.0
        %1102 = vmatpush1.msra.mxu0 0.0
        %1103 = vmatprep.subr.mxu0 0.0
        %1104 = vmatpush1.msra.mxu0 0.0
        %1105 = vmatprep.mubr.f32.mxu0 0.0
        %1106 = vmatmul.mubr.f32.gmra.mrb[0].mxu0 %v1039
        %v1107 = vpop.f32.mrb[0].mxu0
        %v1108 = vadd.f32 0.0, %v1107
        %v1109 = vpop.f32.mrb[0].mxu0
        %1110 = vmatprep.mubr.f32.mxu0 0.0
        %1111 = vmatmul.mubr.f32.gmra.mrb[0].mxu0 %v1039
        %v1112 = vpop.f32.mrb[0].mxu0
        %v1113 = vadd.f32 0.0, %v1112
        %v1114 = vpop.f32.mrb[0].mxu0
        %1115 = vmatprep.mubr.f32.mxu0 0.0
        %1116 = vmatmul.mubr.f32.gmra.mrb[0].mxu0 %v1039
        %v1117 = vpop.f32.mrb[0].mxu0
        %v1118 = vadd.f32 0.0, %v1117
        %v1119 = vpop.f32.mrb[0].mxu0
        %1120 = vmatprep.mubr.f32.mxu0 0.0
        %1121 = vmatmul.mubr.f32.gmra.mrb[0].mxu0 %v1039
        %v1122 = vpop.f32.mrb[0].mxu0
        %v1123 = vadd.f32 0.0, %v1122
        %v1124 = vpop.f32.mrb[0].mxu0
        %1125 = vmatprep.mubr.f32.mxu0 0.0
        %1126 = vmatmul.mubr.f32.gmra.mrb[0].mxu0 %v1039
        %v1127 = vpop.f32.mrb[0].mxu0
        %v1128 = vadd.f32 0.0, %v1127
        %v1129 = vpop.f32.mrb[0].mxu0
        %1130 = vmatprep.mubr.f32.mxu0 0.0
        %1131 = vmatmul.mubr.f32.gmra.mrb[0].mxu0 %v1039
        %v1132 = vpop.f32.mrb[0].mxu0
        %v1133 = vadd.f32 0.0, %v1132
        %v1134 = vpop.f32.mrb[0].mxu0
        %1135 = vmatprep.mubr.f32.mxu0 0.0
        %1136 = vmatmul.mubr.f32.gmra.mrb[0].mxu0 %v1039
        %v1137 = vpop.f32.mrb[0].mxu0
        %v1138 = vadd.f32 0.0, %v1137
        %v1139 = vpop.f32.mrb[0].mxu0
        %1140 = vmatprep.mubr.f32.mxu0 0.0
        %1141 = vmatmul.mubr.f32.gmra.mrb[0].mxu0 %v1039
        %v1142 = vpop.f32.mrb[0].mxu0
        %v1143 = vadd.f32 0.0, %v1142
        %v1144 = vpop.f32.mrb[0].mxu0
        %1145 = vdwg.mxu0
        %v1146 = vadd.f32 %v1029, %v1108
        %v1147 = vadd.f32 %v1030, %v1113
        %v1148 = vadd.f32 %v1031, %v1118
        %v1149 = vadd.f32 %v1032, %v1123
        %v1150 = vadd.f32 %v1033, %v1128
        %v1151 = vadd.f32 %v1034, %v1133
        %v1152 = vadd.f32 %v1035, %v1138
        %v1153 = vadd.f32 %v1036, %v1143
        %v1154 = vxor.u32 %v1146, 2147483648
        %v1155 = vxor.u32 %v1147, 2147483648
        %v1156 = vxor.u32 %v1148, 2147483648
        %v1157 = vxor.u32 %v1149, 2147483648
        %v1158 = vxor.u32 %v1150, 2147483648
        %v1159 = vxor.u32 %v1151, 2147483648
        %v1160 = vxor.u32 %v1152, 2147483648
        %v1161 = vxor.u32 %v1153, 2147483648
        %v1162 = vmul.f32 %v1154, 1.442695
        %v1163 = vpow.pop %v1162
        %v1164 = vmul.f32 %v1155, 1.442695
        %v1165 = vpow.pop %v1164
        %v1166 = vmul.f32 %v1156, 1.442695
        %v1167 = vpow.pop %v1166
        %v1168 = vmul.f32 %v1157, 1.442695
        %v1169 = vpow.pop %v1168
        %v1170 = vmul.f32 %v1158, 1.442695
        %v1171 = vpow.pop %v1170
        %v1172 = vmul.f32 %v1159, 1.442695
        %v1173 = vpow.pop %v1172
        %v1174 = vmul.f32 %v1160, 1.442695
        %v1175 = vpow.pop %v1174
        %v1176 = vmul.f32 %v1161, 1.442695
        %v1177 = vpow.pop %v1176
        %v1178 = vadd.f32 %v1163, 1.0
        %v1179 = vadd.f32 %v1165, 1.0
        %v1180 = vadd.f32 %v1167, 1.0
        %v1181 = vadd.f32 %v1169, 1.0
        %v1182 = vadd.f32 %v1171, 1.0
        %v1183 = vadd.f32 %v1173, 1.0
        %v1184 = vadd.f32 %v1175, 1.0
        %v1185 = vadd.f32 %v1177, 1.0
        %v1186 = vrcp.pop %v1178
        %v1187 = vmul.f32 1.0, %v1186
        %v1188 = vrcp.pop %v1179
        %v1189 = vmul.f32 1.0, %v1188
        %v1190 = vrcp.pop %v1180
        %v1191 = vmul.f32 1.0, %v1190
        %v1192 = vrcp.pop %v1181
        %v1193 = vmul.f32 1.0, %v1192
        %v1194 = vrcp.pop %v1182
        %v1195 = vmul.f32 1.0, %v1194
        %v1196 = vrcp.pop %v1183
        %v1197 = vmul.f32 1.0, %v1196
        %v1198 = vrcp.pop %v1184
        %v1199 = vmul.f32 1.0, %v1198
        %v1200 = vrcp.pop %v1185
        %v1201 = vmul.f32 1.0, %v1200
        %v1202 = vtanh.pop %v1146
        %v1203 = vtanh.pop %v1147
        %v1204 = vtanh.pop %v1148
        %v1205 = vtanh.pop %v1149
        %v1206 = vtanh.pop %v1150
        %v1207 = vtanh.pop %v1151
        %v1208 = vtanh.pop %v1152
        %v1209 = vtanh.pop %v1153
        %v1210 = vmul.f32 %v1187, 0.0
        %v1211 = vmul.f32 %v1189, 0.0
        %v1212 = vmul.f32 %v1191, 0.0
        %v1213 = vmul.f32 %v1193, 0.0
        %v1214 = vmul.f32 %v1195, 0.0
        %v1215 = vmul.f32 %v1197, 0.0
        %v1216 = vmul.f32 %v1199, 0.0
        %v1217 = vmul.f32 %v1201, 0.0
        %1226 = vrot.lane.b32.xlu0 %v1202, 32
        %v1227 = vpop.permute.xlu0 %1226
        %1228 = vrot.lane.b32.xlu0 %v1203, 32
        %v1229 = vpop.permute.xlu0 %1228
        %1230 = vrot.lane.b32.xlu0 %v1204, 32
        %v1231 = vpop.permute.xlu0 %1230
        %1232 = vrot.lane.b32.xlu0 %v1205, 32
        %v1233 = vpop.permute.xlu0 %1232
        %1234 = vrot.lane.b32.xlu0 %v1206, 32
        %v1235 = vpop.permute.xlu0 %1234
        %1236 = vrot.lane.b32.xlu0 %v1207, 32
        %v1237 = vpop.permute.xlu0 %1236
        %1238 = vrot.lane.b32.xlu0 %v1208, 32
        %v1239 = vpop.permute.xlu0 %1238
        %1240 = vrot.lane.b32.xlu0 %v1209, 32
        %v1241 = vpop.permute.xlu0 %1240
        %v1250 = vmul.f32 %v1187, %v1227
        %v1251 = vmul.f32 %v1189, %v1229
        %v1252 = vmul.f32 %v1191, %v1231
        %v1253 = vmul.f32 %v1193, %v1233
        %v1254 = vmul.f32 %v1195, %v1235
        %v1255 = vmul.f32 %v1197, %v1237
        %v1256 = vmul.f32 %v1199, %v1239
        %v1257 = vmul.f32 %v1201, %v1241
        %1266 = vrot.lane.b32.xlu0 %v1250, 32
        %v1267 = vpop.permute.xlu0 %1266
        %1268 = vrot.lane.b32.xlu0 %v1251, 32
        %v1269 = vpop.permute.xlu0 %1268
        %1270 = vrot.lane.b32.xlu0 %v1252, 32
        %v1271 = vpop.permute.xlu0 %1270
        %1272 = vrot.lane.b32.xlu0 %v1253, 32
        %v1273 = vpop.permute.xlu0 %1272
        %1274 = vrot.lane.b32.xlu0 %v1254, 32
        %v1275 = vpop.permute.xlu0 %1274
        %1276 = vrot.lane.b32.xlu0 %v1255, 32
        %v1277 = vpop.permute.xlu0 %1276
        %1278 = vrot.lane.b32.xlu0 %v1256, 32
        %v1279 = vpop.permute.xlu0 %1278
        %1280 = vrot.lane.b32.xlu0 %v1257, 32
        %v1281 = vpop.permute.xlu0 %1280
        %v1290 = vadd.f32 %v1210, %v1267
        %v1291 = vadd.f32 %v1211, %v1269
        %v1292 = vadd.f32 %v1212, %v1271
        %v1293 = vadd.f32 %v1213, %v1273
        %v1294 = vadd.f32 %v1214, %v1275
        %v1295 = vadd.f32 %v1215, %v1277
        %v1296 = vadd.f32 %v1216, %v1279
        %v1297 = vadd.f32 %v1217, %v1281
        %v1298 = vtanh.pop %v1290
        %v1299 = vtanh.pop %v1291
        %v1300 = vtanh.pop %v1292
        %v1301 = vtanh.pop %v1293
        %v1302 = vtanh.pop %v1294
        %v1303 = vtanh.pop %v1295
        %v1304 = vtanh.pop %v1296
        %v1305 = vtanh.pop %v1297
        %1314 = vrot.lane.b32.xlu0 %v1298, 32
        %v1315 = vpop.permute.xlu0 %1314
        %1316 = vrot.lane.b32.xlu0 %v1299, 32
        %v1317 = vpop.permute.xlu0 %1316
        %1318 = vrot.lane.b32.xlu0 %v1300, 32
        %v1319 = vpop.permute.xlu0 %1318
        %1320 = vrot.lane.b32.xlu0 %v1301, 32
        %v1321 = vpop.permute.xlu0 %1320
        %1322 = vrot.lane.b32.xlu0 %v1302, 32
        %v1323 = vpop.permute.xlu0 %1322
        %1324 = vrot.lane.b32.xlu0 %v1303, 32
        %v1325 = vpop.permute.xlu0 %1324
        %1326 = vrot.lane.b32.xlu0 %v1304, 32
        %v1327 = vpop.permute.xlu0 %1326
        %1328 = vrot.lane.b32.xlu0 %v1305, 32
        %v1329 = vpop.permute.xlu0 %1328
        %v1338 = vmul.f32 %v1187, %v1315
        %v1339 = vmul.f32 %v1189, %v1317
        %v1340 = vmul.f32 %v1191, %v1319
        %v1341 = vmul.f32 %v1193, %v1321
        %v1342 = vmul.f32 %v1195, %v1323
        %v1343 = vmul.f32 %v1197, %v1325
        %v1344 = vmul.f32 %v1199, %v1327
        %v1345 = vmul.f32 %v1201, %v1329
        %1354 = vrot.lane.b32.xlu0 %v1338, 64
        %v1355 = vpop.permute.xlu0 %1354
        %1356 = vrot.lane.b32.xlu0 %v1339, 64
        %v1357 = vpop.permute.xlu0 %1356
        %1358 = vrot.lane.b32.xlu0 %v1340, 64
        %v1359 = vpop.permute.xlu0 %1358
        %1360 = vrot.lane.b32.xlu0 %v1341, 64
        %v1361 = vpop.permute.xlu0 %1360
        %1362 = vrot.lane.b32.xlu0 %v1342, 64
        %v1363 = vpop.permute.xlu0 %1362
        %1364 = vrot.lane.b32.xlu0 %v1343, 64
        %v1365 = vpop.permute.xlu0 %1364
        %1366 = vrot.lane.b32.xlu0 %v1344, 64
        %v1367 = vpop.permute.xlu0 %1366
        %1368 = vrot.lane.b32.xlu0 %v1345, 64
        %v1369 = vpop.permute.xlu0 %1368
        %1378 = vst.msk [vmem:[#allocation3] sm:$0xff] %vm1037, %v1355
        %1379 = vst.msk [vmem:[#allocation3 + $0x8] sm:$0xff] %vm1037, %v1357
        %1380 = vst.msk [vmem:[#allocation3 + $0x10] sm:$0xff] %vm1037, %v1359
        %1381 = vst.msk [vmem:[#allocation3 + $0x18] sm:$0xff] %vm1037, %v1361
        %1382 = vst.msk [vmem:[#allocation3 + $0x20] sm:$0xff] %vm1037, %v1363
        %1383 = vst.msk [vmem:[#allocation3 + $0x28] sm:$0xff] %vm1037, %v1365
        %1384 = vst.msk [vmem:[#allocation3 + $0x30] sm:$0xff] %vm1037, %v1367
        %1385 = vst.msk [vmem:[#allocation3 + $0x38] sm:$0xff] %vm1037, %v1369
        %v1386 = vld [vmem:[#allocation2 + $0x40] sm:$0xff]
        %v1387 = vld [vmem:[#allocation2 + $0x48] sm:$0xff]
        %v1388 = vld [vmem:[#allocation2 + $0x50] sm:$0xff]
        %v1389 = vld [vmem:[#allocation2 + $0x58] sm:$0xff]
        %v1390 = vld [vmem:[#allocation2 + $0x60] sm:$0xff]
        %v1391 = vld [vmem:[#allocation2 + $0x68] sm:$0xff]
        %v1392 = vld [vmem:[#allocation2 + $0x70] sm:$0xff]
        %v1393 = vld [vmem:[#allocation2 + $0x78] sm:$0xff]
        %v1394 = vsel %vm1037, %v1355, 0
        %v1396 = vsel %vm1037, %v1357, 0
        %v1398 = vsel %vm1037, %v1359, 0
        %v1400 = vsel %vm1037, %v1361, 0
        %v1402 = vsel %vm1037, %v1363, 0
        %v1404 = vsel %vm1037, %v1365, 0
        %v1406 = vsel %vm1037, %v1367, 0
        %v1408 = vsel %vm1037, %v1369, 0
        %1410 = vmatprep.subr.mxu0 0.0
        %1411 = vmatpush1.msra.mxu0 %v1025
        %1412 = vmatprep.subr.mxu0 0.0
        %1413 = vmatpush1.msra.mxu0 %v1026
        %1414 = vmatprep.subr.mxu0 0.0
        %1415 = vmatpush1.msra.mxu0 %v1027
        %1416 = vmatprep.subr.mxu0 0.0
        %1417 = vmatpush1.msra.mxu0 %v1028
        %1418 = vmatprep.subr.mxu0 0.0
        %1419 = vmatpush1.msra.mxu0 0.0
        %1420 = vmatprep.subr.mxu0 0.0
        %1421 = vmatpush1.msra.mxu0 0.0
        %1422 = vmatprep.subr.mxu0 0.0
        %1423 = vmatpush1.msra.mxu0 0.0
        %1424 = vmatprep.subr.mxu0 0.0
        %1425 = vmatpush1.msra.mxu0 0.0
        %1426 = vmatprep.subr.mxu0 0.0
        %1427 = vmatpush1.msra.mxu0 0.0
        %1428 = vmatprep.subr.mxu0 0.0
        %1429 = vmatpush1.msra.mxu0 0.0
        %1430 = vmatprep.subr.mxu0 0.0
        %1431 = vmatpush1.msra.mxu0 0.0
        %1432 = vmatprep.subr.mxu0 0.0
        %1433 = vmatpush1.msra.mxu0 0.0
        %1434 = vmatprep.subr.mxu0 0.0
        %1435 = vmatpush1.msra.mxu0 0.0
        %1436 = vmatprep.subr.mxu0 0.0
        %1437 = vmatpush1.msra.mxu0 0.0
        %1438 = vmatprep.subr.mxu0 0.0
        %1439 = vmatpush1.msra.mxu0 0.0
        %1440 = vmatprep.subr.mxu0 0.0
        %1441 = vmatpush1.msra.mxu0 0.0
        %1442 = vmatprep.subr.mxu0 0.0
        %1443 = vmatpush1.msra.mxu0 0.0
        %1444 = vmatprep.subr.mxu0 0.0
        %1445 = vmatpush1.msra.mxu0 0.0
        %1446 = vmatprep.subr.mxu0 0.0
        %1447 = vmatpush1.msra.mxu0 0.0
        %1448 = vmatprep.subr.mxu0 0.0
        %1449 = vmatpush1.msra.mxu0 0.0
        %1450 = vmatprep.subr.mxu0 0.0
        %1451 = vmatpush1.msra.mxu0 0.0
        %1452 = vmatprep.subr.mxu0 0.0
        %1453 = vmatpush1.msra.mxu0 0.0
        %1454 = vmatprep.subr.mxu0 0.0
        %1455 = vmatpush1.msra.mxu0 0.0
        %1456 = vmatprep.subr.mxu0 0.0
        %1457 = vmatpush1.msra.mxu0 0.0
        %1458 = vmatprep.subr.mxu0 0.0
        %1459 = vmatpush1.msra.mxu0 0.0
        %1460 = vmatprep.subr.mxu0 0.0
        %1461 = vmatpush1.msra.mxu0 0.0
        %1462 = vmatprep.subr.mxu0 0.0
        %1463 = vmatpush1.msra.mxu0 0.0
        %1464 = vmatprep.subr.mxu0 0.0
        %1465 = vmatpush1.msra.mxu0 0.0
        %1466 = vmatprep.subr.mxu0 0.0
        %1467 = vmatpush1.msra.mxu0 0.0
        %1468 = vmatprep.subr.mxu0 0.0
        %1469 = vmatpush1.msra.mxu0 0.0
        %1470 = vmatprep.subr.mxu0 0.0
        %1471 = vmatpush1.msra.mxu0 0.0
        %1472 = vmatprep.subr.mxu0 0.0
        %1473 = vmatpush1.msra.mxu0 0.0
        %1474 = vmatprep.mubr.f32.mxu0 0.0
        %1475 = vmatmul.mubr.f32.gmra.mrb[0].mxu0 %v1394
        %v1476 = vpop.f32.mrb[0].mxu0
        %v1477 = vadd.f32 0.0, %v1476
        %v1478 = vpop.f32.mrb[0].mxu0
        %1479 = vmatprep.mubr.f32.mxu0 0.0
        %1480 = vmatmul.mubr.f32.gmra.mrb[0].mxu0 %v1396
        %v1481 = vpop.f32.mrb[0].mxu0
        %v1482 = vadd.f32 0.0, %v1481
        %v1483 = vpop.f32.mrb[0].mxu0
        %1484 = vmatprep.mubr.f32.mxu0 0.0
        %1485 = vmatmul.mubr.f32.gmra.mrb[0].mxu0 %v1398
        %v1486 = vpop.f32.mrb[0].mxu0
        %v1487 = vadd.f32 0.0, %v1486
        %v1488 = vpop.f32.mrb[0].mxu0
        %1489 = vmatprep.mubr.f32.mxu0 0.0
        %1490 = vmatmul.mubr.f32.gmra.mrb[0].mxu0 %v1400
        %v1491 = vpop.f32.mrb[0].mxu0
        %v1492 = vadd.f32 0.0, %v1491
        %v1493 = vpop.f32.mrb[0].mxu0
        %1494 = vmatprep.mubr.f32.mxu0 0.0
        %1495 = vmatmul.mubr.f32.gmra.mrb[0].mxu0 %v1402
        %v1496 = vpop.f32.mrb[0].mxu0
        %v1497 = vadd.f32 0.0, %v1496
        %v1498 = vpop.f32.mrb[0].mxu0
        %1499 = vmatprep.mubr.f32.mxu0 0.0
        %1500 = vmatmul.mubr.f32.gmra.mrb[0].mxu0 %v1404
        %v1501 = vpop.f32.mrb[0].mxu0
        %v1502 = vadd.f32 0.0, %v1501
        %v1503 = vpop.f32.mrb[0].mxu0
        %1504 = vmatprep.mubr.f32.mxu0 0.0
        %1505 = vmatmul.mubr.f32.gmra.mrb[0].mxu0 %v1406
        %v1506 = vpop.f32.mrb[0].mxu0
        %v1507 = vadd.f32 0.0, %v1506
        %v1508 = vpop.f32.mrb[0].mxu0
        %1509 = vmatprep.mubr.f32.mxu0 0.0
        %1510 = vmatmul.mubr.f32.gmra.mrb[0].mxu0 %v1408
        %v1511 = vpop.f32.mrb[0].mxu0
        %v1512 = vadd.f32 0.0, %v1511
        %v1513 = vpop.f32.mrb[0].mxu0
        %1514 = vdwg.mxu0
        %v1515 = vadd.f32 %v1386, %v1477
        %v1516 = vadd.f32 %v1387, %v1482
        %v1517 = vadd.f32 %v1388, %v1487
        %v1518 = vadd.f32 %v1389, %v1492
        %v1519 = vadd.f32 %v1390, %v1497
        %v1520 = vadd.f32 %v1391, %v1502
        %v1521 = vadd.f32 %v1392, %v1507
        %v1522 = vadd.f32 %v1393, %v1512
        %v1523 = vxor.u32 %v1515, 2147483648
        %v1524 = vxor.u32 %v1516, 2147483648
        %v1525 = vxor.u32 %v1517, 2147483648
        %v1526 = vxor.u32 %v1518, 2147483648
        %v1527 = vxor.u32 %v1519, 2147483648
        %v1528 = vxor.u32 %v1520, 2147483648
        %v1529 = vxor.u32 %v1521, 2147483648
        %v1530 = vxor.u32 %v1522, 2147483648
        %v1531 = vmul.f32 %v1523, 1.442695
        %v1532 = vpow.pop %v1531
        %v1533 = vmul.f32 %v1524, 1.442695
        %v1534 = vpow.pop %v1533
        %v1535 = vmul.f32 %v1525, 1.442695
        %v1536 = vpow.pop %v1535
        %v1537 = vmul.f32 %v1526, 1.442695
        %v1538 = vpow.pop %v1537
        %v1539 = vmul.f32 %v1527, 1.442695
        %v1540 = vpow.pop %v1539
        %v1541 = vmul.f32 %v1528, 1.442695
        %v1542 = vpow.pop %v1541
        %v1543 = vmul.f32 %v1529, 1.442695
        %v1544 = vpow.pop %v1543
        %v1545 = vmul.f32 %v1530, 1.442695
        %v1546 = vpow.pop %v1545
        %v1547 = vadd.f32 %v1532, 1.0
        %v1548 = vadd.f32 %v1534, 1.0
        %v1549 = vadd.f32 %v1536, 1.0
        %v1550 = vadd.f32 %v1538, 1.0
        %v1551 = vadd.f32 %v1540, 1.0
        %v1552 = vadd.f32 %v1542, 1.0
        %v1553 = vadd.f32 %v1544, 1.0
        %v1554 = vadd.f32 %v1546, 1.0
        %v1555 = vrcp.pop %v1547
        %v1556 = vmul.f32 1.0, %v1555
        %v1557 = vrcp.pop %v1548
        %v1558 = vmul.f32 1.0, %v1557
        %v1559 = vrcp.pop %v1549
        %v1560 = vmul.f32 1.0, %v1559
        %v1561 = vrcp.pop %v1550
        %v1562 = vmul.f32 1.0, %v1561
        %v1563 = vrcp.pop %v1551
        %v1564 = vmul.f32 1.0, %v1563
        %v1565 = vrcp.pop %v1552
        %v1566 = vmul.f32 1.0, %v1565
        %v1567 = vrcp.pop %v1553
        %v1568 = vmul.f32 1.0, %v1567
        %v1569 = vrcp.pop %v1554
        %v1570 = vmul.f32 1.0, %v1569
        %v1571 = vtanh.pop %v1515
        %v1572 = vtanh.pop %v1516
        %v1573 = vtanh.pop %v1517
        %v1574 = vtanh.pop %v1518
        %v1575 = vtanh.pop %v1519
        %v1576 = vtanh.pop %v1520
        %v1577 = vtanh.pop %v1521
        %v1578 = vtanh.pop %v1522
        %v1579 = vmul.f32 %v1556, %v1290
        %v1580 = vmul.f32 %v1558, %v1291
        %v1581 = vmul.f32 %v1560, %v1292
        %v1582 = vmul.f32 %v1562, %v1293
        %v1583 = vmul.f32 %v1564, %v1294
        %v1584 = vmul.f32 %v1566, %v1295
        %v1585 = vmul.f32 %v1568, %v1296
        %v1586 = vmul.f32 %v1570, %v1297
        %1595 = vrot.lane.b32.xlu0 %v1571, 32
        %v1596 = vpop.permute.xlu0 %1595
        %1597 = vrot.lane.b32.xlu0 %v1572, 32
        %v1598 = vpop.permute.xlu0 %1597
        %1599 = vrot.lane.b32.xlu0 %v1573, 32
        %v1600 = vpop.permute.xlu0 %1599
        %1601 = vrot.lane.b32.xlu0 %v1574, 32
        %v1602 = vpop.permute.xlu0 %1601
        %1603 = vrot.lane.b32.xlu0 %v1575, 32
        %v1604 = vpop.permute.xlu0 %1603
        %1605 = vrot.lane.b32.xlu0 %v1576, 32
        %v1606 = vpop.permute.xlu0 %1605
        %1607 = vrot.lane.b32.xlu0 %v1577, 32
        %v1608 = vpop.permute.xlu0 %1607
        %1609 = vrot.lane.b32.xlu0 %v1578, 32
        %v1610 = vpop.permute.xlu0 %1609
        %v1619 = vmul.f32 %v1556, %v1596
        %v1620 = vmul.f32 %v1558, %v1598
        %v1621 = vmul.f32 %v1560, %v1600
        %v1622 = vmul.f32 %v1562, %v1602
        %v1623 = vmul.f32 %v1564, %v1604
        %v1624 = vmul.f32 %v1566, %v1606
        %v1625 = vmul.f32 %v1568, %v1608
        %v1626 = vmul.f32 %v1570, %v1610
        %1635 = vrot.lane.b32.xlu0 %v1619, 32
        %v1636 = vpop.permute.xlu0 %1635
        %1637 = vrot.lane.b32.xlu0 %v1620, 32
        %v1638 = vpop.permute.xlu0 %1637
        %1639 = vrot.lane.b32.xlu0 %v1621, 32
        %v1640 = vpop.permute.xlu0 %1639
        %1641 = vrot.lane.b32.xlu0 %v1622, 32
        %v1642 = vpop.permute.xlu0 %1641
        %1643 = vrot.lane.b32.xlu0 %v1623, 32
        %v1644 = vpop.permute.xlu0 %1643
        %1645 = vrot.lane.b32.xlu0 %v1624, 32
        %v1646 = vpop.permute.xlu0 %1645
        %1647 = vrot.lane.b32.xlu0 %v1625, 32
        %v1648 = vpop.permute.xlu0 %1647
        %1649 = vrot.lane.b32.xlu0 %v1626, 32
        %v1650 = vpop.permute.xlu0 %1649
        %v1659 = vadd.f32 %v1579, %v1636
        %v1660 = vadd.f32 %v1580, %v1638
        %v1661 = vadd.f32 %v1581, %v1640
        %v1662 = vadd.f32 %v1582, %v1642
        %v1663 = vadd.f32 %v1583, %v1644
        %v1664 = vadd.f32 %v1584, %v1646
        %v1665 = vadd.f32 %v1585, %v1648
        %v1666 = vadd.f32 %v1586, %v1650
        %v1667 = vtanh.pop %v1659
        %v1668 = vtanh.pop %v1660
        %v1669 = vtanh.pop %v1661
        %v1670 = vtanh.pop %v1662
        %v1671 = vtanh.pop %v1663
        %v1672 = vtanh.pop %v1664
        %v1673 = vtanh.pop %v1665
        %v1674 = vtanh.pop %v1666
        %1683 = vrot.lane.b32.xlu0 %v1667, 32
        %v1684 = vpop.permute.xlu0 %1683
        %1685 = vrot.lane.b32.xlu0 %v1668, 32
        %v1686 = vpop.permute.xlu0 %1685
        %1687 = vrot.lane.b32.xlu0 %v1669, 32
        %v1688 = vpop.permute.xlu0 %1687
        %1689 = vrot.lane.b32.xlu0 %v1670, 32
        %v1690 = vpop.permute.xlu0 %1689
        %1691 = vrot.lane.b32.xlu0 %v1671, 32
        %v1692 = vpop.permute.xlu0 %1691
        %1693 = vrot.lane.b32.xlu0 %v1672, 32
        %v1694 = vpop.permute.xlu0 %1693
        %1695 = vrot.lane.b32.xlu0 %v1673, 32
        %v1696 = vpop.permute.xlu0 %1695
        %1697 = vrot.lane.b32.xlu0 %v1674, 32
        %v1698 = vpop.permute.xlu0 %1697
        %v1707 = vmul.f32 %v1556, %v1684
        %v1708 = vmul.f32 %v1558, %v1686
        %v1709 = vmul.f32 %v1560, %v1688
        %v1710 = vmul.f32 %v1562, %v1690
        %v1711 = vmul.f32 %v1564, %v1692
        %v1712 = vmul.f32 %v1566, %v1694
        %v1713 = vmul.f32 %v1568, %v1696
        %v1714 = vmul.f32 %v1570, %v1698
        %1723 = vrot.lane.b32.xlu0 %v1707, 64
        %v1724 = vpop.permute.xlu0 %1723
        %1725 = vrot.lane.b32.xlu0 %v1708, 64
        %v1726 = vpop.permute.xlu0 %1725
        %1727 = vrot.lane.b32.xlu0 %v1709, 64
        %v1728 = vpop.permute.xlu0 %1727
        %1729 = vrot.lane.b32.xlu0 %v1710, 64
        %v1730 = vpop.permute.xlu0 %1729
        %1731 = vrot.lane.b32.xlu0 %v1711, 64
        %v1732 = vpop.permute.xlu0 %1731
        %1733 = vrot.lane.b32.xlu0 %v1712, 64
        %v1734 = vpop.permute.xlu0 %1733
        %1735 = vrot.lane.b32.xlu0 %v1713, 64
        %v1736 = vpop.permute.xlu0 %1735
        %1737 = vrot.lane.b32.xlu0 %v1714, 64
        %v1738 = vpop.permute.xlu0 %1737
        %1747 = vst.msk [vmem:[#allocation3 + $0x40] sm:$0xff] %vm1037, %v1724
        %1748 = vst.msk [vmem:[#allocation3 + $0x48] sm:$0xff] %vm1037, %v1726
        %1749 = vst.msk [vmem:[#allocation3 + $0x50] sm:$0xff] %vm1037, %v1728
        %1750 = vst.msk [vmem:[#allocation3 + $0x58] sm:$0xff] %vm1037, %v1730
        %1751 = vst.msk [vmem:[#allocation3 + $0x60] sm:$0xff] %vm1037, %v1732
        %1752 = vst.msk [vmem:[#allocation3 + $0x68] sm:$0xff] %vm1037, %v1734
        %1753 = vst.msk [vmem:[#allocation3 + $0x70] sm:$0xff] %vm1037, %v1736
        %1754 = vst.msk [vmem:[#allocation3 + $0x78] sm:$0xff] %vm1037, %v1738
        %v1755 = vld [vmem:[#allocation2 + $0x80] sm:$0xff]
        %v1756 = vld [vmem:[#allocation2 + $0x88] sm:$0xff]
        %v1757 = vld [vmem:[#allocation2 + $0x90] sm:$0xff]
        %v1758 = vld [vmem:[#allocation2 + $0x98] sm:$0xff]
        %v1759 = vld [vmem:[#allocation2 + $0xa0] sm:$0xff]
        %v1760 = vld [vmem:[#allocation2 + $0xa8] sm:$0xff]
        %v1761 = vld [vmem:[#allocation2 + $0xb0] sm:$0xff]
        %v1762 = vld [vmem:[#allocation2 + $0xb8] sm:$0xff]
        %v1763 = vsel %vm1037, %v1724, 0
        %v1765 = vsel %vm1037, %v1726, 0
        %v1767 = vsel %vm1037, %v1728, 0
        %v1769 = vsel %vm1037, %v1730, 0
        %v1771 = vsel %vm1037, %v1732, 0
        %v1773 = vsel %vm1037, %v1734, 0
        %v1775 = vsel %vm1037, %v1736, 0
        %v1777 = vsel %vm1037, %v1738, 0
        %1779 = vmatprep.subr.mxu0 0.0
        %1780 = vmatpush1.msra.mxu0 %v1025
        %1781 = vmatprep.subr.mxu0 0.0
        %1782 = vmatpush1.msra.mxu0 %v1026
        %1783 = vmatprep.subr.mxu0 0.0
        %1784 = vmatpush1.msra.mxu0 %v1027
        %1785 = vmatprep.subr.mxu0 0.0
        %1786 = vmatpush1.msra.mxu0 %v1028
        %1787 = vmatprep.subr.mxu0 0.0
        %1788 = vmatpush1.msra.mxu0 0.0
        %1789 = vmatprep.subr.mxu0 0.0
        %1790 = vmatpush1.msra.mxu0 0.0
        %1791 = vmatprep.subr.mxu0 0.0
        %1792 = vmatpush1.msra.mxu0 0.0
        %1793 = vmatprep.subr.mxu0 0.0
        %1794 = vmatpush1.msra.mxu0 0.0
        %1795 = vmatprep.subr.mxu0 0.0
        %1796 = vmatpush1.msra.mxu0 0.0
        %1797 = vmatprep.subr.mxu0 0.0
        %1798 = vmatpush1.msra.mxu0 0.0
        %1799 = vmatprep.subr.mxu0 0.0
        %1800 = vmatpush1.msra.mxu0 0.0
        %1801 = vmatprep.subr.mxu0 0.0
        %1802 = vmatpush1.msra.mxu0 0.0
        %1803 = vmatprep.subr.mxu0 0.0
        %1804 = vmatpush1.msra.mxu0 0.0
        %1805 = vmatprep.subr.mxu0 0.0
        %1806 = vmatpush1.msra.mxu0 0.0
        %1807 = vmatprep.subr.mxu0 0.0
        %1808 = vmatpush1.msra.mxu0 0.0
        %1809 = vmatprep.subr.mxu0 0.0
        %1810 = vmatpush1.msra.mxu0 0.0
        %1811 = vmatprep.subr.mxu0 0.0
        %1812 = vmatpush1.msra.mxu0 0.0
        %1813 = vmatprep.subr.mxu0 0.0
        %1814 = vmatpush1.msra.mxu0 0.0
        %1815 = vmatprep.subr.mxu0 0.0
        %1816 = vmatpush1.msra.mxu0 0.0
        %1817 = vmatprep.subr.mxu0 0.0
        %1818 = vmatpush1.msra.mxu0 0.0
        %1819 = vmatprep.subr.mxu0 0.0
        %1820 = vmatpush1.msra.mxu0 0.0
        %1821 = vmatprep.subr.mxu0 0.0
        %1822 = vmatpush1.msra.mxu0 0.0
        %1823 = vmatprep.subr.mxu0 0.0
        %1824 = vmatpush1.msra.mxu0 0.0
        %1825 = vmatprep.subr.mxu0 0.0
        %1826 = vmatpush1.msra.mxu0 0.0
        %1827 = vmatprep.subr.mxu0 0.0
        %1828 = vmatpush1.msra.mxu0 0.0
        %1829 = vmatprep.subr.mxu0 0.0
        %1830 = vmatpush1.msra.mxu0 0.0
        %1831 = vmatprep.subr.mxu0 0.0
        %1832 = vmatpush1.msra.mxu0 0.0
        %1833 = vmatprep.subr.mxu0 0.0
        %1834 = vmatpush1.msra.mxu0 0.0
        %1835 = vmatprep.subr.mxu0 0.0
        %1836 = vmatpush1.msra.mxu0 0.0
        %1837 = vmatprep.subr.mxu0 0.0
        %1838 = vmatpush1.msra.mxu0 0.0
        %1839 = vmatprep.subr.mxu0 0.0
        %1840 = vmatpush1.msra.mxu0 0.0
        %1841 = vmatprep.subr.mxu0 0.0
        %1842 = vmatpush1.msra.mxu0 0.0
        %1843 = vmatprep.mubr.f32.mxu0 0.0
        %1844 = vmatmul.mubr.f32.gmra.mrb[0].mxu0 %v1763
        %v1845 = vpop.f32.mrb[0].mxu0
        %v1846 = vadd.f32 0.0, %v1845
        %v1847 = vpop.f32.mrb[0].mxu0
        %1848 = vmatprep.mubr.f32.mxu0 0.0
        %1849 = vmatmul.mubr.f32.gmra.mrb[0].mxu0 %v1765
        %v1850 = vpop.f32.mrb[0].mxu0
        %v1851 = vadd.f32 0.0, %v1850
        %v1852 = vpop.f32.mrb[0].mxu0
        %1853 = vmatprep.mubr.f32.mxu0 0.0
        %1854 = vmatmul.mubr.f32.gmra.mrb[0].mxu0 %v1767
        %v1855 = vpop.f32.mrb[0].mxu0
        %v1856 = vadd.f32 0.0, %v1855
        %v1857 = vpop.f32.mrb[0].mxu0
        %1858 = vmatprep.mubr.f32.mxu0 0.0
        %1859 = vmatmul.mubr.f32.gmra.mrb[0].mxu0 %v1769
        %v1860 = vpop.f32.mrb[0].mxu0
        %v1861 = vadd.f32 0.0, %v1860
        %v1862 = vpop.f32.mrb[0].mxu0
        %1863 = vmatprep.mubr.f32.mxu0 0.0
        %1864 = vmatmul.mubr.f32.gmra.mrb[0].mxu0 %v1771
        %v1865 = vpop.f32.mrb[0].mxu0
        %v1866 = vadd.f32 0.0, %v1865
        %v1867 = vpop.f32.mrb[0].mxu0
        %1868 = vmatprep.mubr.f32.mxu0 0.0
        %1869 = vmatmul.mubr.f32.gmra.mrb[0].mxu0 %v1773
        %v1870 = vpop.f32.mrb[0].mxu0
        %v1871 = vadd.f32 0.0, %v1870
        %v1872 = vpop.f32.mrb[0].mxu0
        %1873 = vmatprep.mubr.f32.mxu0 0.0
        %1874 = vmatmul.mubr.f32.gmra.mrb[0].mxu0 %v1775
        %v1875 = vpop.f32.mrb[0].mxu0
        %v1876 = vadd.f32 0.0, %v1875
        %v1877 = vpop.f32.mrb[0].mxu0
        %1878 = vmatprep.mubr.f32.mxu0 0.0
        %1879 = vmatmul.mubr.f32.gmra.mrb[0].mxu0 %v1777
        %v1880 = vpop.f32.mrb[0].mxu0
        %v1881 = vadd.f32 0.0, %v1880
        %v1882 = vpop.f32.mrb[0].mxu0
        %1883 = vdwg.mxu0
        %v1884 = vadd.f32 %v1755, %v1846
        %v1885 = vadd.f32 %v1756, %v1851
        %v1886 = vadd.f32 %v1757, %v1856
        %v1887 = vadd.f32 %v1758, %v1861
        %v1888 = vadd.f32 %v1759, %v1866
        %v1889 = vadd.f32 %v1760, %v1871
        %v1890 = vadd.f32 %v1761, %v1876
        %v1891 = vadd.f32 %v1762, %v1881
        %v1892 = vxor.u32 %v1884, 2147483648
        %v1893 = vxor.u32 %v1885, 2147483648
        %v1894 = vxor.u32 %v1886, 2147483648
        %v1895 = vxor.u32 %v1887, 2147483648
        %v1896 = vxor.u32 %v1888, 2147483648
        %v1897 = vxor.u32 %v1889, 2147483648
        %v1898 = vxor.u32 %v1890, 2147483648
        %v1899 = vxor.u32 %v1891, 2147483648
        %v1900 = vmul.f32 %v1892, 1.442695
        %v1901 = vpow.pop %v1900
        %v1902 = vmul.f32 %v1893, 1.442695
        %v1903 = vpow.pop %v1902
        %v1904 = vmul.f32 %v1894, 1.442695
        %v1905 = vpow.pop %v1904
        %v1906 = vmul.f32 %v1895, 1.442695
        %v1907 = vpow.pop %v1906
        %v1908 = vmul.f32 %v1896, 1.442695
        %v1909 = vpow.pop %v1908
        %v1910 = vmul.f32 %v1897, 1.442695
        %v1911 = vpow.pop %v1910
        %v1912 = vmul.f32 %v1898, 1.442695
        %v1913 = vpow.pop %v1912
        %v1914 = vmul.f32 %v1899, 1.442695
        %v1915 = vpow.pop %v1914
        %v1916 = vadd.f32 %v1901, 1.0
        %v1917 = vadd.f32 %v1903, 1.0
        %v1918 = vadd.f32 %v1905, 1.0
        %v1919 = vadd.f32 %v1907, 1.0
        %v1920 = vadd.f32 %v1909, 1.0
        %v1921 = vadd.f32 %v1911, 1.0
        %v1922 = vadd.f32 %v1913, 1.0
        %v1923 = vadd.f32 %v1915, 1.0
        %v1924 = vrcp.pop %v1916
        %v1925 = vmul.f32 1.0, %v1924
        %v1926 = vrcp.pop %v1917
        %v1927 = vmul.f32 1.0, %v1926
        %v1928 = vrcp.pop %v1918
        %v1929 = vmul.f32 1.0, %v1928
        %v1930 = vrcp.pop %v1919
        %v1931 = vmul.f32 1.0, %v1930
        %v1932 = vrcp.pop %v1920
        %v1933 = vmul.f32 1.0, %v1932
        %v1934 = vrcp.pop %v1921
        %v1935 = vmul.f32 1.0, %v1934
        %v1936 = vrcp.pop %v1922
        %v1937 = vmul.f32 1.0, %v1936
        %v1938 = vrcp.pop %v1923
        %v1939 = vmul.f32 1.0, %v1938
        %v1940 = vtanh.pop %v1884
        %v1941 = vtanh.pop %v1885
        %v1942 = vtanh.pop %v1886
        %v1943 = vtanh.pop %v1887
        %v1944 = vtanh.pop %v1888
        %v1945 = vtanh.pop %v1889
        %v1946 = vtanh.pop %v1890
        %v1947 = vtanh.pop %v1891
        %v1948 = vmul.f32 %v1925, %v1659
        %v1949 = vmul.f32 %v1927, %v1660
        %v1950 = vmul.f32 %v1929, %v1661
        %v1951 = vmul.f32 %v1931, %v1662
        %v1952 = vmul.f32 %v1933, %v1663
        %v1953 = vmul.f32 %v1935, %v1664
        %v1954 = vmul.f32 %v1937, %v1665
        %v1955 = vmul.f32 %v1939, %v1666
        %1964 = vrot.lane.b32.xlu0 %v1940, 32
        %v1965 = vpop.permute.xlu0 %1964
        %1966 = vrot.lane.b32.xlu0 %v1941, 32
        %v1967 = vpop.permute.xlu0 %1966
        %1968 = vrot.lane.b32.xlu0 %v1942, 32
        %v1969 = vpop.permute.xlu0 %1968
        %1970 = vrot.lane.b32.xlu0 %v1943, 32
        %v1971 = vpop.permute.xlu0 %1970
        %1972 = vrot.lane.b32.xlu0 %v1944, 32
        %v1973 = vpop.permute.xlu0 %1972
        %1974 = vrot.lane.b32.xlu0 %v1945, 32
        %v1975 = vpop.permute.xlu0 %1974
        %1976 = vrot.lane.b32.xlu0 %v1946, 32
        %v1977 = vpop.permute.xlu0 %1976
        %1978 = vrot.lane.b32.xlu0 %v1947, 32
        %v1979 = vpop.permute.xlu0 %1978
        %v1988 = vmul.f32 %v1925, %v1965
        %v1989 = vmul.f32 %v1927, %v1967
        %v1990 = vmul.f32 %v1929, %v1969
        %v1991 = vmul.f32 %v1931, %v1971
        %v1992 = vmul.f32 %v1933, %v1973
        %v1993 = vmul.f32 %v1935, %v1975
        %v1994 = vmul.f32 %v1937, %v1977
        %v1995 = vmul.f32 %v1939, %v1979
        %2004 = vrot.lane.b32.xlu0 %v1988, 32
        %v2005 = vpop.permute.xlu0 %2004
        %2006 = vrot.lane.b32.xlu0 %v1989, 32
        %v2007 = vpop.permute.xlu0 %2006
        %2008 = vrot.lane.b32.xlu0 %v1990, 32
        %v2009 = vpop.permute.xlu0 %2008
        %2010 = vrot.lane.b32.xlu0 %v1991, 32
        %v2011 = vpop.permute.xlu0 %2010
        %2012 = vrot.lane.b32.xlu0 %v1992, 32
        %v2013 = vpop.permute.xlu0 %2012
        %2014 = vrot.lane.b32.xlu0 %v1993, 32
        %v2015 = vpop.permute.xlu0 %2014
        %2016 = vrot.lane.b32.xlu0 %v1994, 32
        %v2017 = vpop.permute.xlu0 %2016
        %2018 = vrot.lane.b32.xlu0 %v1995, 32
        %v2019 = vpop.permute.xlu0 %2018
        %v2028 = vadd.f32 %v1948, %v2005
        %v2029 = vadd.f32 %v1949, %v2007
        %v2030 = vadd.f32 %v1950, %v2009
        %v2031 = vadd.f32 %v1951, %v2011
        %v2032 = vadd.f32 %v1952, %v2013
        %v2033 = vadd.f32 %v1953, %v2015
        %v2034 = vadd.f32 %v1954, %v2017
        %v2035 = vadd.f32 %v1955, %v2019
        %v2036 = vtanh.pop %v2028
        %v2037 = vtanh.pop %v2029
        %v2038 = vtanh.pop %v2030
        %v2039 = vtanh.pop %v2031
        %v2040 = vtanh.pop %v2032
        %v2041 = vtanh.pop %v2033
        %v2042 = vtanh.pop %v2034
        %v2043 = vtanh.pop %v2035
        %2052 = vrot.lane.b32.xlu0 %v2036, 32
        %v2053 = vpop.permute.xlu0 %2052
        %2054 = vrot.lane.b32.xlu0 %v2037, 32
        %v2055 = vpop.permute.xlu0 %2054
        %2056 = vrot.lane.b32.xlu0 %v2038, 32
        %v2057 = vpop.permute.xlu0 %2056
        %2058 = vrot.lane.b32.xlu0 %v2039, 32
        %v2059 = vpop.permute.xlu0 %2058
        %2060 = vrot.lane.b32.xlu0 %v2040, 32
        %v2061 = vpop.permute.xlu0 %2060
        %2062 = vrot.lane.b32.xlu0 %v2041, 32
        %v2063 = vpop.permute.xlu0 %2062
        %2064 = vrot.lane.b32.xlu0 %v2042, 32
        %v2065 = vpop.permute.xlu0 %2064
        %2066 = vrot.lane.b32.xlu0 %v2043, 32
        %v2067 = vpop.permute.xlu0 %2066
        %v2076 = vmul.f32 %v1925, %v2053
        %v2077 = vmul.f32 %v1927, %v2055
        %v2078 = vmul.f32 %v1929, %v2057
        %v2079 = vmul.f32 %v1931, %v2059
        %v2080 = vmul.f32 %v1933, %v2061
        %v2081 = vmul.f32 %v1935, %v2063
        %v2082 = vmul.f32 %v1937, %v2065
        %v2083 = vmul.f32 %v1939, %v2067
        %2092 = vrot.lane.b32.xlu0 %v2076, 64
        %v2093 = vpop.permute.xlu0 %2092
        %2094 = vrot.lane.b32.xlu0 %v2077, 64
        %v2095 = vpop.permute.xlu0 %2094
        %2096 = vrot.lane.b32.xlu0 %v2078, 64
        %v2097 = vpop.permute.xlu0 %2096
        %2098 = vrot.lane.b32.xlu0 %v2079, 64
        %v2099 = vpop.permute.xlu0 %2098
        %2100 = vrot.lane.b32.xlu0 %v2080, 64
        %v2101 = vpop.permute.xlu0 %2100
        %2102 = vrot.lane.b32.xlu0 %v2081, 64
        %v2103 = vpop.permute.xlu0 %2102
        %2104 = vrot.lane.b32.xlu0 %v2082, 64
        %v2105 = vpop.permute.xlu0 %2104
        %2106 = vrot.lane.b32.xlu0 %v2083, 64
        %v2107 = vpop.permute.xlu0 %2106
        %2116 = vst.msk [vmem:[#allocation3 + $0x80] sm:$0xff] %vm1037, %v2093
        %2117 = vst.msk [vmem:[#allocation3 + $0x88] sm:$0xff] %vm1037, %v2095
        %2118 = vst.msk [vmem:[#allocation3 + $0x90] sm:$0xff] %vm1037, %v2097
        %2119 = vst.msk [vmem:[#allocation3 + $0x98] sm:$0xff] %vm1037, %v2099
        %2120 = vst.msk [vmem:[#allocation3 + $0xa0] sm:$0xff] %vm1037, %v2101
        %2121 = vst.msk [vmem:[#allocation3 + $0xa8] sm:$0xff] %vm1037, %v2103
        %2122 = vst.msk [vmem:[#allocation3 + $0xb0] sm:$0xff] %vm1037, %v2105
        %2123 = vst.msk [vmem:[#allocation3 + $0xb8] sm:$0xff] %vm1037, %v2107
        %v2124 = vld [vmem:[#allocation2 + $0xc0] sm:$0xff]
        %v2125 = vld [vmem:[#allocation2 + $0xc8] sm:$0xff]
        %v2126 = vld [vmem:[#allocation2 + $0xd0] sm:$0xff]
        %v2127 = vld [vmem:[#allocation2 + $0xd8] sm:$0xff]
        %v2128 = vld [vmem:[#allocation2 + $0xe0] sm:$0xff]
        %v2129 = vld [vmem:[#allocation2 + $0xe8] sm:$0xff]
        %v2130 = vld [vmem:[#allocation2 + $0xf0] sm:$0xff]
        %v2131 = vld [vmem:[#allocation2 + $0xf8] sm:$0xff]
        %v2132 = vsel %vm1037, %v2093, 0
        %v2134 = vsel %vm1037, %v2095, 0
        %v2136 = vsel %vm1037, %v2097, 0
        %v2138 = vsel %vm1037, %v2099, 0
        %v2140 = vsel %vm1037, %v2101, 0
        %v2142 = vsel %vm1037, %v2103, 0
        %v2144 = vsel %vm1037, %v2105, 0
        %v2146 = vsel %vm1037, %v2107, 0
        %2148 = vmatprep.subr.mxu0 0.0
        %2149 = vmatpush1.msra.mxu0 %v1025
        %2150 = vmatprep.subr.mxu0 0.0
        %2151 = vmatpush1.msra.mxu0 %v1026
        %2152 = vmatprep.subr.mxu0 0.0
        %2153 = vmatpush1.msra.mxu0 %v1027
        %2154 = vmatprep.subr.mxu0 0.0
        %2155 = vmatpush1.msra.mxu0 %v1028
        %2156 = vmatprep.subr.mxu0 0.0
        %2157 = vmatpush1.msra.mxu0 0.0
        %2158 = vmatprep.subr.mxu0 0.0
        %2159 = vmatpush1.msra.mxu0 0.0
        %2160 = vmatprep.subr.mxu0 0.0
        %2161 = vmatpush1.msra.mxu0 0.0
        %2162 = vmatprep.subr.mxu0 0.0
        %2163 = vmatpush1.msra.mxu0 0.0
        %2164 = vmatprep.subr.mxu0 0.0
        %2165 = vmatpush1.msra.mxu0 0.0
        %2166 = vmatprep.subr.mxu0 0.0
        %2167 = vmatpush1.msra.mxu0 0.0
        %2168 = vmatprep.subr.mxu0 0.0
        %2169 = vmatpush1.msra.mxu0 0.0
        %2170 = vmatprep.subr.mxu0 0.0
        %2171 = vmatpush1.msra.mxu0 0.0
        %2172 = vmatprep.subr.mxu0 0.0
        %2173 = vmatpush1.msra.mxu0 0.0
        %2174 = vmatprep.subr.mxu0 0.0
        %2175 = vmatpush1.msra.mxu0 0.0
        %2176 = vmatprep.subr.mxu0 0.0
        %2177 = vmatpush1.msra.mxu0 0.0
        %2178 = vmatprep.subr.mxu0 0.0
        %2179 = vmatpush1.msra.mxu0 0.0
        %2180 = vmatprep.subr.mxu0 0.0
        %2181 = vmatpush1.msra.mxu0 0.0
        %2182 = vmatprep.subr.mxu0 0.0
        %2183 = vmatpush1.msra.mxu0 0.0
        %2184 = vmatprep.subr.mxu0 0.0
        %2185 = vmatpush1.msra.mxu0 0.0
        %2186 = vmatprep.subr.mxu0 0.0
        %2187 = vmatpush1.msra.mxu0 0.0
        %2188 = vmatprep.subr.mxu0 0.0
        %2189 = vmatpush1.msra.mxu0 0.0
        %2190 = vmatprep.subr.mxu0 0.0
        %2191 = vmatpush1.msra.mxu0 0.0
        %2192 = vmatprep.subr.mxu0 0.0
        %2193 = vmatpush1.msra.mxu0 0.0
        %2194 = vmatprep.subr.mxu0 0.0
        %2195 = vmatpush1.msra.mxu0 0.0
        %2196 = vmatprep.subr.mxu0 0.0
        %2197 = vmatpush1.msra.mxu0 0.0
        %2198 = vmatprep.subr.mxu0 0.0
        %2199 = vmatpush1.msra.mxu0 0.0
        %2200 = vmatprep.subr.mxu0 0.0
        %2201 = vmatpush1.msra.mxu0 0.0
        %2202 = vmatprep.subr.mxu0 0.0
        %2203 = vmatpush1.msra.mxu0 0.0
        %2204 = vmatprep.subr.mxu0 0.0
        %2205 = vmatpush1.msra.mxu0 0.0
        %2206 = vmatprep.subr.mxu0 0.0
        %2207 = vmatpush1.msra.mxu0 0.0
        %2208 = vmatprep.subr.mxu0 0.0
        %2209 = vmatpush1.msra.mxu0 0.0
        %2210 = vmatprep.subr.mxu0 0.0
        %2211 = vmatpush1.msra.mxu0 0.0
        %2212 = vmatprep.mubr.f32.mxu0 0.0
        %2213 = vmatmul.mubr.f32.gmra.mrb[0].mxu0 %v2132
        %v2214 = vpop.f32.mrb[0].mxu0
        %v2215 = vadd.f32 0.0, %v2214
        %v2216 = vpop.f32.mrb[0].mxu0
        %2217 = vmatprep.mubr.f32.mxu0 0.0
        %2218 = vmatmul.mubr.f32.gmra.mrb[0].mxu0 %v2134
        %v2219 = vpop.f32.mrb[0].mxu0
        %v2220 = vadd.f32 0.0, %v2219
        %v2221 = vpop.f32.mrb[0].mxu0
        %2222 = vmatprep.mubr.f32.mxu0 0.0
        %2223 = vmatmul.mubr.f32.gmra.mrb[0].mxu0 %v2136
        %v2224 = vpop.f32.mrb[0].mxu0
        %v2225 = vadd.f32 0.0, %v2224
        %v2226 = vpop.f32.mrb[0].mxu0
        %2227 = vmatprep.mubr.f32.mxu0 0.0
        %2228 = vmatmul.mubr.f32.gmra.mrb[0].mxu0 %v2138
        %v2229 = vpop.f32.mrb[0].mxu0
        %v2230 = vadd.f32 0.0, %v2229
        %v2231 = vpop.f32.mrb[0].mxu0
        %2232 = vmatprep.mubr.f32.mxu0 0.0
        %2233 = vmatmul.mubr.f32.gmra.mrb[0].mxu0 %v2140
        %v2234 = vpop.f32.mrb[0].mxu0
        %v2235 = vadd.f32 0.0, %v2234
        %v2236 = vpop.f32.mrb[0].mxu0
        %2237 = vmatprep.mubr.f32.mxu0 0.0
        %2238 = vmatmul.mubr.f32.gmra.mrb[0].mxu0 %v2142
        %v2239 = vpop.f32.mrb[0].mxu0
        %v2240 = vadd.f32 0.0, %v2239
        %v2241 = vpop.f32.mrb[0].mxu0
        %2242 = vmatprep.mubr.f32.mxu0 0.0
        %2243 = vmatmul.mubr.f32.gmra.mrb[0].mxu0 %v2144
        %v2244 = vpop.f32.mrb[0].mxu0
        %v2245 = vadd.f32 0.0, %v2244
        %v2246 = vpop.f32.mrb[0].mxu0
        %2247 = vmatprep.mubr.f32.mxu0 0.0
        %2248 = vmatmul.mubr.f32.gmra.mrb[0].mxu0 %v2146
        %v2249 = vpop.f32.mrb[0].mxu0
        %v2250 = vadd.f32 0.0, %v2249
        %v2251 = vpop.f32.mrb[0].mxu0
        %2252 = vdwg.mxu0
        %v2253 = vadd.f32 %v2124, %v2215
        %v2254 = vadd.f32 %v2125, %v2220
        %v2255 = vadd.f32 %v2126, %v2225
        %v2256 = vadd.f32 %v2127, %v2230
        %v2257 = vadd.f32 %v2128, %v2235
        %v2258 = vadd.f32 %v2129, %v2240
        %v2259 = vadd.f32 %v2130, %v2245
        %v2260 = vadd.f32 %v2131, %v2250
        %v2261 = vxor.u32 %v2253, 2147483648
        %v2262 = vxor.u32 %v2254, 2147483648
        %v2263 = vxor.u32 %v2255, 2147483648
        %v2264 = vxor.u32 %v2256, 2147483648
        %v2265 = vxor.u32 %v2257, 2147483648
        %v2266 = vxor.u32 %v2258, 2147483648
        %v2267 = vxor.u32 %v2259, 2147483648
        %v2268 = vxor.u32 %v2260, 2147483648
        %v2269 = vmul.f32 %v2261, 1.442695
        %v2270 = vpow.pop %v2269
        %v2271 = vmul.f32 %v2262, 1.442695
        %v2272 = vpow.pop %v2271
        %v2273 = vmul.f32 %v2263, 1.442695
        %v2274 = vpow.pop %v2273
        %v2275 = vmul.f32 %v2264, 1.442695
        %v2276 = vpow.pop %v2275
        %v2277 = vmul.f32 %v2265, 1.442695
        %v2278 = vpow.pop %v2277
        %v2279 = vmul.f32 %v2266, 1.442695
        %v2280 = vpow.pop %v2279
        %v2281 = vmul.f32 %v2267, 1.442695
        %v2282 = vpow.pop %v2281
        %v2283 = vmul.f32 %v2268, 1.442695
        %v2284 = vpow.pop %v2283
        %v2285 = vadd.f32 %v2270, 1.0
        %v2286 = vadd.f32 %v2272, 1.0
        %v2287 = vadd.f32 %v2274, 1.0
        %v2288 = vadd.f32 %v2276, 1.0
        %v2289 = vadd.f32 %v2278, 1.0
        %v2290 = vadd.f32 %v2280, 1.0
        %v2291 = vadd.f32 %v2282, 1.0
        %v2292 = vadd.f32 %v2284, 1.0
        %v2293 = vrcp.pop %v2285
        %v2294 = vmul.f32 1.0, %v2293
        %v2295 = vrcp.pop %v2286
        %v2296 = vmul.f32 1.0, %v2295
        %v2297 = vrcp.pop %v2287
        %v2298 = vmul.f32 1.0, %v2297
        %v2299 = vrcp.pop %v2288
        %v2300 = vmul.f32 1.0, %v2299
        %v2301 = vrcp.pop %v2289
        %v2302 = vmul.f32 1.0, %v2301
        %v2303 = vrcp.pop %v2290
        %v2304 = vmul.f32 1.0, %v2303
        %v2305 = vrcp.pop %v2291
        %v2306 = vmul.f32 1.0, %v2305
        %v2307 = vrcp.pop %v2292
        %v2308 = vmul.f32 1.0, %v2307
        %v2309 = vtanh.pop %v2253
        %v2310 = vtanh.pop %v2254
        %v2311 = vtanh.pop %v2255
        %v2312 = vtanh.pop %v2256
        %v2313 = vtanh.pop %v2257
        %v2314 = vtanh.pop %v2258
        %v2315 = vtanh.pop %v2259
        %v2316 = vtanh.pop %v2260
        %v2317 = vmul.f32 %v2294, %v2028
        %v2318 = vmul.f32 %v2296, %v2029
        %v2319 = vmul.f32 %v2298, %v2030
        %v2320 = vmul.f32 %v2300, %v2031
        %v2321 = vmul.f32 %v2302, %v2032
        %v2322 = vmul.f32 %v2304, %v2033
        %v2323 = vmul.f32 %v2306, %v2034
        %v2324 = vmul.f32 %v2308, %v2035
        %2333 = vrot.lane.b32.xlu0 %v2309, 32
        %v2334 = vpop.permute.xlu0 %2333
        %2335 = vrot.lane.b32.xlu0 %v2310, 32
        %v2336 = vpop.permute.xlu0 %2335
        %2337 = vrot.lane.b32.xlu0 %v2311, 32
        %v2338 = vpop.permute.xlu0 %2337
        %2339 = vrot.lane.b32.xlu0 %v2312, 32
        %v2340 = vpop.permute.xlu0 %2339
        %2341 = vrot.lane.b32.xlu0 %v2313, 32
        %v2342 = vpop.permute.xlu0 %2341
        %2343 = vrot.lane.b32.xlu0 %v2314, 32
        %v2344 = vpop.permute.xlu0 %2343
        %2345 = vrot.lane.b32.xlu0 %v2315, 32
        %v2346 = vpop.permute.xlu0 %2345
        %2347 = vrot.lane.b32.xlu0 %v2316, 32
        %v2348 = vpop.permute.xlu0 %2347
        %v2357 = vmul.f32 %v2294, %v2334
        %v2358 = vmul.f32 %v2296, %v2336
        %v2359 = vmul.f32 %v2298, %v2338
        %v2360 = vmul.f32 %v2300, %v2340
        %v2361 = vmul.f32 %v2302, %v2342
        %v2362 = vmul.f32 %v2304, %v2344
        %v2363 = vmul.f32 %v2306, %v2346
        %v2364 = vmul.f32 %v2308, %v2348
        %2373 = vrot.lane.b32.xlu0 %v2357, 32
        %v2374 = vpop.permute.xlu0 %2373
        %2375 = vrot.lane.b32.xlu0 %v2358, 32
        %v2376 = vpop.permute.xlu0 %2375
        %2377 = vrot.lane.b32.xlu0 %v2359, 32
        %v2378 = vpop.permute.xlu0 %2377
        %2379 = vrot.lane.b32.xlu0 %v2360, 32
        %v2380 = vpop.permute.xlu0 %2379
        %2381 = vrot.lane.b32.xlu0 %v2361, 32
        %v2382 = vpop.permute.xlu0 %2381
        %2383 = vrot.lane.b32.xlu0 %v2362, 32
        %v2384 = vpop.permute.xlu0 %2383
        %2385 = vrot.lane.b32.xlu0 %v2363, 32
        %v2386 = vpop.permute.xlu0 %2385
        %2387 = vrot.lane.b32.xlu0 %v2364, 32
        %v2388 = vpop.permute.xlu0 %2387
        %v2397 = vadd.f32 %v2317, %v2374
        %v2398 = vadd.f32 %v2318, %v2376
        %v2399 = vadd.f32 %v2319, %v2378
        %v2400 = vadd.f32 %v2320, %v2380
        %v2401 = vadd.f32 %v2321, %v2382
        %v2402 = vadd.f32 %v2322, %v2384
        %v2403 = vadd.f32 %v2323, %v2386
        %v2404 = vadd.f32 %v2324, %v2388
        %v2405 = vtanh.pop %v2397
        %v2406 = vtanh.pop %v2398
        %v2407 = vtanh.pop %v2399
        %v2408 = vtanh.pop %v2400
        %v2409 = vtanh.pop %v2401
        %v2410 = vtanh.pop %v2402
        %v2411 = vtanh.pop %v2403
        %v2412 = vtanh.pop %v2404
        %2421 = vrot.lane.b32.xlu0 %v2405, 32
        %v2422 = vpop.permute.xlu0 %2421
        %2423 = vrot.lane.b32.xlu0 %v2406, 32
        %v2424 = vpop.permute.xlu0 %2423
        %2425 = vrot.lane.b32.xlu0 %v2407, 32
        %v2426 = vpop.permute.xlu0 %2425
        %2427 = vrot.lane.b32.xlu0 %v2408, 32
        %v2428 = vpop.permute.xlu0 %2427
        %2429 = vrot.lane.b32.xlu0 %v2409, 32
        %v2430 = vpop.permute.xlu0 %2429
        %2431 = vrot.lane.b32.xlu0 %v2410, 32
        %v2432 = vpop.permute.xlu0 %2431
        %2433 = vrot.lane.b32.xlu0 %v2411, 32
        %v2434 = vpop.permute.xlu0 %2433
        %2435 = vrot.lane.b32.xlu0 %v2412, 32
        %v2436 = vpop.permute.xlu0 %2435
        %v2445 = vmul.f32 %v2294, %v2422
        %v2446 = vmul.f32 %v2296, %v2424
        %v2447 = vmul.f32 %v2298, %v2426
        %v2448 = vmul.f32 %v2300, %v2428
        %v2449 = vmul.f32 %v2302, %v2430
        %v2450 = vmul.f32 %v2304, %v2432
        %v2451 = vmul.f32 %v2306, %v2434
        %v2452 = vmul.f32 %v2308, %v2436
        %2461 = vrot.lane.b32.xlu0 %v2445, 64
        %v2462 = vpop.permute.xlu0 %2461
        %2463 = vrot.lane.b32.xlu0 %v2446, 64
        %v2464 = vpop.permute.xlu0 %2463
        %2465 = vrot.lane.b32.xlu0 %v2447, 64
        %v2466 = vpop.permute.xlu0 %2465
        %2467 = vrot.lane.b32.xlu0 %v2448, 64
        %v2468 = vpop.permute.xlu0 %2467
        %2469 = vrot.lane.b32.xlu0 %v2449, 64
        %v2470 = vpop.permute.xlu0 %2469
        %2471 = vrot.lane.b32.xlu0 %v2450, 64
        %v2472 = vpop.permute.xlu0 %2471
        %2473 = vrot.lane.b32.xlu0 %v2451, 64
        %v2474 = vpop.permute.xlu0 %2473
        %2475 = vrot.lane.b32.xlu0 %v2452, 64
        %v2476 = vpop.permute.xlu0 %2475
        %2485 = vst.msk [vmem:[#allocation3 + $0xc0] sm:$0xff] %vm1037, %v2462
        %2486 = vst.msk [vmem:[#allocation3 + $0xc8] sm:$0xff] %vm1037, %v2464
        %2487 = vst.msk [vmem:[#allocation3 + $0xd0] sm:$0xff] %vm1037, %v2466
        %2488 = vst.msk [vmem:[#allocation3 + $0xd8] sm:$0xff] %vm1037, %v2468
        %2489 = vst.msk [vmem:[#allocation3 + $0xe0] sm:$0xff] %vm1037, %v2470
        %2490 = vst.msk [vmem:[#allocation3 + $0xe8] sm:$0xff] %vm1037, %v2472
        %2491 = vst.msk [vmem:[#allocation3 + $0xf0] sm:$0xff] %vm1037, %v2474
        %2492 = vst.msk [vmem:[#allocation3 + $0xf8] sm:$0xff] %vm1037, %v2476
        %v2493 = vld [vmem:[#allocation2 + $0x100] sm:$0xff]
        %v2494 = vld [vmem:[#allocation2 + $0x108] sm:$0xff]
        %v2495 = vld [vmem:[#allocation2 + $0x110] sm:$0xff]
        %v2496 = vld [vmem:[#allocation2 + $0x118] sm:$0xff]
        %v2497 = vld [vmem:[#allocation2 + $0x120] sm:$0xff]
        %v2498 = vld [vmem:[#allocation2 + $0x128] sm:$0xff]
        %v2499 = vld [vmem:[#allocation2 + $0x130] sm:$0xff]
        %v2500 = vld [vmem:[#allocation2 + $0x138] sm:$0xff]
        %v2501 = vsel %vm1037, %v2462, 0
        %v2503 = vsel %vm1037, %v2464, 0
        %v2505 = vsel %vm1037, %v2466, 0
        %v2507 = vsel %vm1037, %v2468, 0
        %v2509 = vsel %vm1037, %v2470, 0
        %v2511 = vsel %vm1037, %v2472, 0
        %v2513 = vsel %vm1037, %v2474, 0
        %v2515 = vsel %vm1037, %v2476, 0
        %2517 = vmatprep.subr.mxu0 0.0
        %2518 = vmatpush1.msra.mxu0 %v1025
        %2519 = vmatprep.subr.mxu0 0.0
        %2520 = vmatpush1.msra.mxu0 %v1026
        %2521 = vmatprep.subr.mxu0 0.0
        %2522 = vmatpush1.msra.mxu0 %v1027
        %2523 = vmatprep.subr.mxu0 0.0
        %2524 = vmatpush1.msra.mxu0 %v1028
        %2525 = vmatprep.subr.mxu0 0.0
        %2526 = vmatpush1.msra.mxu0 0.0
        %2527 = vmatprep.subr.mxu0 0.0
        %2528 = vmatpush1.msra.mxu0 0.0
        %2529 = vmatprep.subr.mxu0 0.0
        %2530 = vmatpush1.msra.mxu0 0.0
        %2531 = vmatprep.subr.mxu0 0.0
        %2532 = vmatpush1.msra.mxu0 0.0
        %2533 = vmatprep.subr.mxu0 0.0
        %2534 = vmatpush1.msra.mxu0 0.0
        %2535 = vmatprep.subr.mxu0 0.0
        %2536 = vmatpush1.msra.mxu0 0.0
        %2537 = vmatprep.subr.mxu0 0.0
        %2538 = vmatpush1.msra.mxu0 0.0
        %2539 = vmatprep.subr.mxu0 0.0
        %2540 = vmatpush1.msra.mxu0 0.0
        %2541 = vmatprep.subr.mxu0 0.0
        %2542 = vmatpush1.msra.mxu0 0.0
        %2543 = vmatprep.subr.mxu0 0.0
        %2544 = vmatpush1.msra.mxu0 0.0
        %2545 = vmatprep.subr.mxu0 0.0
        %2546 = vmatpush1.msra.mxu0 0.0
        %2547 = vmatprep.subr.mxu0 0.0
        %2548 = vmatpush1.msra.mxu0 0.0
        %2549 = vmatprep.subr.mxu0 0.0
        %2550 = vmatpush1.msra.mxu0 0.0
        %2551 = vmatprep.subr.mxu0 0.0
        %2552 = vmatpush1.msra.mxu0 0.0
        %2553 = vmatprep.subr.mxu0 0.0
        %2554 = vmatpush1.msra.mxu0 0.0
        %2555 = vmatprep.subr.mxu0 0.0
        %2556 = vmatpush1.msra.mxu0 0.0
        %2557 = vmatprep.subr.mxu0 0.0
        %2558 = vmatpush1.msra.mxu0 0.0
        %2559 = vmatprep.subr.mxu0 0.0
        %2560 = vmatpush1.msra.mxu0 0.0
        %2561 = vmatprep.subr.mxu0 0.0
        %2562 = vmatpush1.msra.mxu0 0.0
        %2563 = vmatprep.subr.mxu0 0.0
        %2564 = vmatpush1.msra.mxu0 0.0
        %2565 = vmatprep.subr.mxu0 0.0
        %2566 = vmatpush1.msra.mxu0 0.0
        %2567 = vmatprep.subr.mxu0 0.0
        %2568 = vmatpush1.msra.mxu0 0.0
        %2569 = vmatprep.subr.mxu0 0.0
        %2570 = vmatpush1.msra.mxu0 0.0
        %2571 = vmatprep.subr.mxu0 0.0
        %2572 = vmatpush1.msra.mxu0 0.0
        %2573 = vmatprep.subr.mxu0 0.0
        %2574 = vmatpush1.msra.mxu0 0.0
        %2575 = vmatprep.subr.mxu0 0.0
        %2576 = vmatpush1.msra.mxu0 0.0
        %2577 = vmatprep.subr.mxu0 0.0
        %2578 = vmatpush1.msra.mxu0 0.0
        %2579 = vmatprep.subr.mxu0 0.0
        %2580 = vmatpush1.msra.mxu0 0.0
        %2581 = vmatprep.mubr.f32.mxu0 0.0
        %2582 = vmatmul.mubr.f32.gmra.mrb[0].mxu0 %v2501
        %v2583 = vpop.f32.mrb[0].mxu0
        %v2584 = vadd.f32 0.0, %v2583
        %v2585 = vpop.f32.mrb[0].mxu0
        %2586 = vmatprep.mubr.f32.mxu0 0.0
        %2587 = vmatmul.mubr.f32.gmra.mrb[0].mxu0 %v2503
        %v2588 = vpop.f32.mrb[0].mxu0
        %v2589 = vadd.f32 0.0, %v2588
        %v2590 = vpop.f32.mrb[0].mxu0
        %2591 = vmatprep.mubr.f32.mxu0 0.0
        %2592 = vmatmul.mubr.f32.gmra.mrb[0].mxu0 %v2505
        %v2593 = vpop.f32.mrb[0].mxu0
        %v2594 = vadd.f32 0.0, %v2593
        %v2595 = vpop.f32.mrb[0].mxu0
        %2596 = vmatprep.mubr.f32.mxu0 0.0
        %2597 = vmatmul.mubr.f32.gmra.mrb[0].mxu0 %v2507
        %v2598 = vpop.f32.mrb[0].mxu0
        %v2599 = vadd.f32 0.0, %v2598
        %v2600 = vpop.f32.mrb[0].mxu0
        %2601 = vmatprep.mubr.f32.mxu0 0.0
        %2602 = vmatmul.mubr.f32.gmra.mrb[0].mxu0 %v2509
        %v2603 = vpop.f32.mrb[0].mxu0
        %v2604 = vadd.f32 0.0, %v2603
        %v2605 = vpop.f32.mrb[0].mxu0
        %2606 = vmatprep.mubr.f32.mxu0 0.0
        %2607 = vmatmul.mubr.f32.gmra.mrb[0].mxu0 %v2511
        %v2608 = vpop.f32.mrb[0].mxu0
        %v2609 = vadd.f32 0.0, %v2608
        %v2610 = vpop.f32.mrb[0].mxu0
        %2611 = vmatprep.mubr.f32.mxu0 0.0
        %2612 = vmatmul.mubr.f32.gmra.mrb[0].mxu0 %v2513
        %v2613 = vpop.f32.mrb[0].mxu0
        %v2614 = vadd.f32 0.0, %v2613
        %v2615 = vpop.f32.mrb[0].mxu0
        %2616 = vmatprep.mubr.f32.mxu0 0.0
        %2617 = vmatmul.mubr.f32.gmra.mrb[0].mxu0 %v2515
        %v2618 = vpop.f32.mrb[0].mxu0
        %v2619 = vadd.f32 0.0, %v2618
        %v2620 = vpop.f32.mrb[0].mxu0
        %2621 = vdwg.mxu0
        %v2622 = vadd.f32 %v2493, %v2584
        %v2623 = vadd.f32 %v2494, %v2589
        %v2624 = vadd.f32 %v2495, %v2594
        %v2625 = vadd.f32 %v2496, %v2599
        %v2626 = vadd.f32 %v2497, %v2604
        %v2627 = vadd.f32 %v2498, %v2609
        %v2628 = vadd.f32 %v2499, %v2614
        %v2629 = vadd.f32 %v2500, %v2619
        %v2630 = vxor.u32 %v2622, 2147483648
        %v2631 = vxor.u32 %v2623, 2147483648
        %v2632 = vxor.u32 %v2624, 2147483648
        %v2633 = vxor.u32 %v2625, 2147483648
        %v2634 = vxor.u32 %v2626, 2147483648
        %v2635 = vxor.u32 %v2627, 2147483648
        %v2636 = vxor.u32 %v2628, 2147483648
        %v2637 = vxor.u32 %v2629, 2147483648
        %v2638 = vmul.f32 %v2630, 1.442695
        %v2639 = vpow.pop %v2638
        %v2640 = vmul.f32 %v2631, 1.442695
        %v2641 = vpow.pop %v2640
        %v2642 = vmul.f32 %v2632, 1.442695
        %v2643 = vpow.pop %v2642
        %v2644 = vmul.f32 %v2633, 1.442695
        %v2645 = vpow.pop %v2644
        %v2646 = vmul.f32 %v2634, 1.442695
        %v2647 = vpow.pop %v2646
        %v2648 = vmul.f32 %v2635, 1.442695
        %v2649 = vpow.pop %v2648
        %v2650 = vmul.f32 %v2636, 1.442695
        %v2651 = vpow.pop %v2650
        %v2652 = vmul.f32 %v2637, 1.442695
        %v2653 = vpow.pop %v2652
        %v2654 = vadd.f32 %v2639, 1.0
        %v2655 = vadd.f32 %v2641, 1.0
        %v2656 = vadd.f32 %v2643, 1.0
        %v2657 = vadd.f32 %v2645, 1.0
        %v2658 = vadd.f32 %v2647, 1.0
        %v2659 = vadd.f32 %v2649, 1.0
        %v2660 = vadd.f32 %v2651, 1.0
        %v2661 = vadd.f32 %v2653, 1.0
        %v2662 = vrcp.pop %v2654
        %v2663 = vmul.f32 1.0, %v2662
        %v2664 = vrcp.pop %v2655
        %v2665 = vmul.f32 1.0, %v2664
        %v2666 = vrcp.pop %v2656
        %v2667 = vmul.f32 1.0, %v2666
        %v2668 = vrcp.pop %v2657
        %v2669 = vmul.f32 1.0, %v2668
        %v2670 = vrcp.pop %v2658
        %v2671 = vmul.f32 1.0, %v2670
        %v2672 = vrcp.pop %v2659
        %v2673 = vmul.f32 1.0, %v2672
        %v2674 = vrcp.pop %v2660
        %v2675 = vmul.f32 1.0, %v2674
        %v2676 = vrcp.pop %v2661
        %v2677 = vmul.f32 1.0, %v2676
        %v2678 = vtanh.pop %v2622
        %v2679 = vtanh.pop %v2623
        %v2680 = vtanh.pop %v2624
        %v2681 = vtanh.pop %v2625
        %v2682 = vtanh.pop %v2626
        %v2683 = vtanh.pop %v2627
        %v2684 = vtanh.pop %v2628
        %v2685 = vtanh.pop %v2629
        %v2686 = vmul.f32 %v2663, %v2397
        %v2687 = vmul.f32 %v2665, %v2398
        %v2688 = vmul.f32 %v2667, %v2399
        %v2689 = vmul.f32 %v2669, %v2400
        %v2690 = vmul.f32 %v2671, %v2401
        %v2691 = vmul.f32 %v2673, %v2402
        %v2692 = vmul.f32 %v2675, %v2403
        %v2693 = vmul.f32 %v2677, %v2404
        %2702 = vrot.lane.b32.xlu0 %v2678, 32
        %v2703 = vpop.permute.xlu0 %2702
        %2704 = vrot.lane.b32.xlu0 %v2679, 32
        %v2705 = vpop.permute.xlu0 %2704
        %2706 = vrot.lane.b32.xlu0 %v2680, 32
        %v2707 = vpop.permute.xlu0 %2706
        %2708 = vrot.lane.b32.xlu0 %v2681, 32
        %v2709 = vpop.permute.xlu0 %2708
        %2710 = vrot.lane.b32.xlu0 %v2682, 32
        %v2711 = vpop.permute.xlu0 %2710
        %2712 = vrot.lane.b32.xlu0 %v2683, 32
        %v2713 = vpop.permute.xlu0 %2712
        %2714 = vrot.lane.b32.xlu0 %v2684, 32
        %v2715 = vpop.permute.xlu0 %2714
        %2716 = vrot.lane.b32.xlu0 %v2685, 32
        %v2717 = vpop.permute.xlu0 %2716
        %v2726 = vmul.f32 %v2663, %v2703
        %v2727 = vmul.f32 %v2665, %v2705
        %v2728 = vmul.f32 %v2667, %v2707
        %v2729 = vmul.f32 %v2669, %v2709
        %v2730 = vmul.f32 %v2671, %v2711
        %v2731 = vmul.f32 %v2673, %v2713
        %v2732 = vmul.f32 %v2675, %v2715
        %v2733 = vmul.f32 %v2677, %v2717
        %2742 = vrot.lane.b32.xlu0 %v2726, 32
        %v2743 = vpop.permute.xlu0 %2742
        %2744 = vrot.lane.b32.xlu0 %v2727, 32
        %v2745 = vpop.permute.xlu0 %2744
        %2746 = vrot.lane.b32.xlu0 %v2728, 32
        %v2747 = vpop.permute.xlu0 %2746
        %2748 = vrot.lane.b32.xlu0 %v2729, 32
        %v2749 = vpop.permute.xlu0 %2748
        %2750 = vrot.lane.b32.xlu0 %v2730, 32
        %v2751 = vpop.permute.xlu0 %2750
        %2752 = vrot.lane.b32.xlu0 %v2731, 32
        %v2753 = vpop.permute.xlu0 %2752
        %2754 = vrot.lane.b32.xlu0 %v2732, 32
        %v2755 = vpop.permute.xlu0 %2754
        %2756 = vrot.lane.b32.xlu0 %v2733, 32
        %v2757 = vpop.permute.xlu0 %2756
        %v2766 = vadd.f32 %v2686, %v2743
        %v2767 = vadd.f32 %v2687, %v2745
        %v2768 = vadd.f32 %v2688, %v2747
        %v2769 = vadd.f32 %v2689, %v2749
        %v2770 = vadd.f32 %v2690, %v2751
        %v2771 = vadd.f32 %v2691, %v2753
        %v2772 = vadd.f32 %v2692, %v2755
        %v2773 = vadd.f32 %v2693, %v2757
        %v2774 = vtanh.pop %v2766
        %v2775 = vtanh.pop %v2767
        %v2776 = vtanh.pop %v2768
        %v2777 = vtanh.pop %v2769
        %v2778 = vtanh.pop %v2770
        %v2779 = vtanh.pop %v2771
        %v2780 = vtanh.pop %v2772
        %v2781 = vtanh.pop %v2773
        %2790 = vrot.lane.b32.xlu0 %v2774, 32
        %v2791 = vpop.permute.xlu0 %2790
        %2792 = vrot.lane.b32.xlu0 %v2775, 32
        %v2793 = vpop.permute.xlu0 %2792
        %2794 = vrot.lane.b32.xlu0 %v2776, 32
        %v2795 = vpop.permute.xlu0 %2794
        %2796 = vrot.lane.b32.xlu0 %v2777, 32
        %v2797 = vpop.permute.xlu0 %2796
        %2798 = vrot.lane.b32.xlu0 %v2778, 32
        %v2799 = vpop.permute.xlu0 %2798
        %2800 = vrot.lane.b32.xlu0 %v2779, 32
        %v2801 = vpop.permute.xlu0 %2800
        %2802 = vrot.lane.b32.xlu0 %v2780, 32
        %v2803 = vpop.permute.xlu0 %2802
        %2804 = vrot.lane.b32.xlu0 %v2781, 32
        %v2805 = vpop.permute.xlu0 %2804
        %v2814 = vmul.f32 %v2663, %v2791
        %v2815 = vmul.f32 %v2665, %v2793
        %v2816 = vmul.f32 %v2667, %v2795
        %v2817 = vmul.f32 %v2669, %v2797
        %v2818 = vmul.f32 %v2671, %v2799
        %v2819 = vmul.f32 %v2673, %v2801
        %v2820 = vmul.f32 %v2675, %v2803
        %v2821 = vmul.f32 %v2677, %v2805
        %2830 = vrot.lane.b32.xlu0 %v2814, 64
        %v2831 = vpop.permute.xlu0 %2830
        %2832 = vrot.lane.b32.xlu0 %v2815, 64
        %v2833 = vpop.permute.xlu0 %2832
        %2834 = vrot.lane.b32.xlu0 %v2816, 64
        %v2835 = vpop.permute.xlu0 %2834
        %2836 = vrot.lane.b32.xlu0 %v2817, 64
        %v2837 = vpop.permute.xlu0 %2836
        %2838 = vrot.lane.b32.xlu0 %v2818, 64
        %v2839 = vpop.permute.xlu0 %2838
        %2840 = vrot.lane.b32.xlu0 %v2819, 64
        %v2841 = vpop.permute.xlu0 %2840
        %2842 = vrot.lane.b32.xlu0 %v2820, 64
        %v2843 = vpop.permute.xlu0 %2842
        %2844 = vrot.lane.b32.xlu0 %v2821, 64
        %v2845 = vpop.permute.xlu0 %2844
        %2854 = vst.msk [vmem:[#allocation3 + $0x100] sm:$0xff] %vm1037, %v2831
        %2855 = vst.msk [vmem:[#allocation3 + $0x108] sm:$0xff] %vm1037, %v2833
        %2856 = vst.msk [vmem:[#allocation3 + $0x110] sm:$0xff] %vm1037, %v2835
        %2857 = vst.msk [vmem:[#allocation3 + $0x118] sm:$0xff] %vm1037, %v2837
        %2858 = vst.msk [vmem:[#allocation3 + $0x120] sm:$0xff] %vm1037, %v2839
        %2859 = vst.msk [vmem:[#allocation3 + $0x128] sm:$0xff] %vm1037, %v2841
        %2860 = vst.msk [vmem:[#allocation3 + $0x130] sm:$0xff] %vm1037, %v2843
        %2861 = vst.msk [vmem:[#allocation3 + $0x138] sm:$0xff] %vm1037, %v2845
        %v2862 = vld [vmem:[%s4] sm:$0xf]
        %v2863 = vld [vmem:[%s7] sm:$0x1]
        %v2865 = vlaneseq
        %v2866 = vshrl.u32 %v2865, 7
        %v2867 = vsub.s32 0, %v2866
        %v2868 = vrot.slane %v2863, %v2867
        %v2871 = vsel %vm716, %v2862, 0
        %2873 = vmatprep.subr.mxu0 0.0
        %2874 = vmatpush1.msra.mxu0 %v2871
        %2875 = vmatprep.subr.mxu0 0.0
        %2876 = vmatpush1.msra.mxu0 0.0
        %2877 = vmatprep.subr.mxu0 0.0
        %2878 = vmatpush1.msra.mxu0 0.0
        %2879 = vmatprep.subr.mxu0 0.0
        %2880 = vmatpush1.msra.mxu0 0.0
        %2881 = vmatprep.subr.mxu0 0.0
        %2882 = vmatpush1.msra.mxu0 0.0
        %2883 = vmatprep.subr.mxu0 0.0
        %2884 = vmatpush1.msra.mxu0 0.0
        %2885 = vmatprep.subr.mxu0 0.0
        %2886 = vmatpush1.msra.mxu0 0.0
        %2887 = vmatprep.subr.mxu0 0.0
        %2888 = vmatpush1.msra.mxu0 0.0
        %2889 = vmatprep.subr.mxu0 0.0
        %2890 = vmatpush1.msra.mxu0 0.0
        %2891 = vmatprep.subr.mxu0 0.0
        %2892 = vmatpush1.msra.mxu0 0.0
        %2893 = vmatprep.subr.mxu0 0.0
        %2894 = vmatpush1.msra.mxu0 0.0
        %2895 = vmatprep.subr.mxu0 0.0
        %2896 = vmatpush1.msra.mxu0 0.0
        %2897 = vmatprep.subr.mxu0 0.0
        %2898 = vmatpush1.msra.mxu0 0.0
        %2899 = vmatprep.subr.mxu0 0.0
        %2900 = vmatpush1.msra.mxu0 0.0
        %2901 = vmatprep.subr.mxu0 0.0
        %2902 = vmatpush1.msra.mxu0 0.0
        %2903 = vmatprep.subr.mxu0 0.0
        %2904 = vmatpush1.msra.mxu0 0.0
        %2905 = vmatprep.subr.mxu0 0.0
        %2906 = vmatpush1.msra.mxu0 0.0
        %2907 = vmatprep.subr.mxu0 0.0
        %2908 = vmatpush1.msra.mxu0 0.0
        %2909 = vmatprep.subr.mxu0 0.0
        %2910 = vmatpush1.msra.mxu0 0.0
        %2911 = vmatprep.subr.mxu0 0.0
        %2912 = vmatpush1.msra.mxu0 0.0
        %2913 = vmatprep.subr.mxu0 0.0
        %2914 = vmatpush1.msra.mxu0 0.0
        %2915 = vmatprep.subr.mxu0 0.0
        %2916 = vmatpush1.msra.mxu0 0.0
        %2917 = vmatprep.subr.mxu0 0.0
        %2918 = vmatpush1.msra.mxu0 0.0
        %2919 = vmatprep.subr.mxu0 0.0
        %2920 = vmatpush1.msra.mxu0 0.0
        %2921 = vmatprep.subr.mxu0 0.0
        %2922 = vmatpush1.msra.mxu0 0.0
        %2923 = vmatprep.subr.mxu0 0.0
        %2924 = vmatpush1.msra.mxu0 0.0
        %2925 = vmatprep.subr.mxu0 0.0
        %2926 = vmatpush1.msra.mxu0 0.0
        %2927 = vmatprep.subr.mxu0 0.0
        %2928 = vmatpush1.msra.mxu0 0.0
        %2929 = vmatprep.subr.mxu0 0.0
        %2930 = vmatpush1.msra.mxu0 0.0
        %2931 = vmatprep.subr.mxu0 0.0
        %2932 = vmatpush1.msra.mxu0 0.0
        %2933 = vmatprep.subr.mxu0 0.0
        %2934 = vmatpush1.msra.mxu0 0.0
        %2935 = vmatprep.subr.mxu0 0.0
        %2936 = vmatpush1.msra.mxu0 0.0
        %2937 = vmatprep.mubr.f32.mxu0 0.0
        %2938 = vmatmul.mubr.f32.gmra.mrb[0].mxu0 %v597
        %v2939 = vpop.f32.mrb[0].mxu0
        %v2940 = vadd.f32 %v2868, %v2939
        %v2941 = vpop.f32.mrb[0].mxu0
        %2942 = vmatprep.mubr.f32.mxu0 0.0
        %2943 = vmatmul.mubr.f32.gmra.mrb[0].mxu0 %v600
        %v2944 = vpop.f32.mrb[0].mxu0
        %v2945 = vadd.f32 %v2868, %v2944
        %v2946 = vpop.f32.mrb[0].mxu0
        %2947 = vmatprep.mubr.f32.mxu0 0.0
        %2948 = vmatmul.mubr.f32.gmra.mrb[0].mxu0 %v603
        %v2949 = vpop.f32.mrb[0].mxu0
        %v2950 = vadd.f32 %v2868, %v2949
        %v2951 = vpop.f32.mrb[0].mxu0
        %2952 = vmatprep.mubr.f32.mxu0 0.0
        %2953 = vmatmul.mubr.f32.gmra.mrb[0].mxu0 %v606
        %v2954 = vpop.f32.mrb[0].mxu0
        %v2955 = vadd.f32 %v2868, %v2954
        %v2956 = vpop.f32.mrb[0].mxu0
        %2957 = vmatprep.mubr.f32.mxu0 0.0
        %2958 = vmatmul.mubr.f32.gmra.mrb[0].mxu0 %v609
        %v2959 = vpop.f32.mrb[0].mxu0
        %v2960 = vadd.f32 %v2868, %v2959
        %v2961 = vpop.f32.mrb[0].mxu0
        %2962 = vmatprep.mubr.f32.mxu0 0.0
        %2963 = vmatmul.mubr.f32.gmra.mrb[0].mxu0 %v612
        %v2964 = vpop.f32.mrb[0].mxu0
        %v2965 = vadd.f32 %v2868, %v2964
        %v2966 = vpop.f32.mrb[0].mxu0
        %2967 = vmatprep.mubr.f32.mxu0 0.0
        %2968 = vmatmul.mubr.f32.gmra.mrb[0].mxu0 %v615
        %v2969 = vpop.f32.mrb[0].mxu0
        %v2970 = vadd.f32 %v2868, %v2969
        %v2971 = vpop.f32.mrb[0].mxu0
        %2972 = vmatprep.mubr.f32.mxu0 0.0
        %2973 = vmatmul.mubr.f32.gmra.mrb[0].mxu0 %v618
        %v2974 = vpop.f32.mrb[0].mxu0
        %v2975 = vadd.f32 %v2868, %v2974
        %v2976 = vpop.f32.mrb[0].mxu0
        %2977 = vmatprep.mubr.f32.mxu0 0.0
        %2978 = vmatmul.mubr.f32.gmra.mrb[0].mxu0 %v621
        %v2979 = vpop.f32.mrb[0].mxu0
        %v2980 = vadd.f32 %v2868, %v2979
        %v2981 = vpop.f32.mrb[0].mxu0
        %2982 = vmatprep.mubr.f32.mxu0 0.0
        %2983 = vmatmul.mubr.f32.gmra.mrb[0].mxu0 %v624
        %v2984 = vpop.f32.mrb[0].mxu0
        %v2985 = vadd.f32 %v2868, %v2984
        %v2986 = vpop.f32.mrb[0].mxu0
        %2987 = vmatprep.mubr.f32.mxu0 0.0
        %2988 = vmatmul.mubr.f32.gmra.mrb[0].mxu0 %v627
        %v2989 = vpop.f32.mrb[0].mxu0
        %v2990 = vadd.f32 %v2868, %v2989
        %v2991 = vpop.f32.mrb[0].mxu0
        %2992 = vmatprep.mubr.f32.mxu0 0.0
        %2993 = vmatmul.mubr.f32.gmra.mrb[0].mxu0 %v630
        %v2994 = vpop.f32.mrb[0].mxu0
        %v2995 = vadd.f32 %v2868, %v2994
        %v2996 = vpop.f32.mrb[0].mxu0
        %2997 = vmatprep.mubr.f32.mxu0 0.0
        %2998 = vmatmul.mubr.f32.gmra.mrb[0].mxu0 %v633
        %v2999 = vpop.f32.mrb[0].mxu0
        %v3000 = vadd.f32 %v2868, %v2999
        %v3001 = vpop.f32.mrb[0].mxu0
        %3002 = vmatprep.mubr.f32.mxu0 0.0
        %3003 = vmatmul.mubr.f32.gmra.mrb[0].mxu0 %v636
        %v3004 = vpop.f32.mrb[0].mxu0
        %v3005 = vadd.f32 %v2868, %v3004
        %v3006 = vpop.f32.mrb[0].mxu0
        %3007 = vmatprep.mubr.f32.mxu0 0.0
        %3008 = vmatmul.mubr.f32.gmra.mrb[0].mxu0 %v639
        %v3009 = vpop.f32.mrb[0].mxu0
        %v3010 = vadd.f32 %v2868, %v3009
        %v3011 = vpop.f32.mrb[0].mxu0
        %3012 = vmatprep.mubr.f32.mxu0 0.0
        %3013 = vmatmul.mubr.f32.gmra.mrb[0].mxu0 %v642
        %v3014 = vpop.f32.mrb[0].mxu0
        %v3015 = vadd.f32 %v2868, %v3014
        %v3016 = vpop.f32.mrb[0].mxu0
        %3017 = vmatprep.mubr.f32.mxu0 0.0
        %3018 = vmatmul.mubr.f32.gmra.mrb[0].mxu0 %v645
        %v3019 = vpop.f32.mrb[0].mxu0
        %v3020 = vadd.f32 %v2868, %v3019
        %v3021 = vpop.f32.mrb[0].mxu0
        %3022 = vmatprep.mubr.f32.mxu0 0.0
        %3023 = vmatmul.mubr.f32.gmra.mrb[0].mxu0 %v648
        %v3024 = vpop.f32.mrb[0].mxu0
        %v3025 = vadd.f32 %v2868, %v3024
        %v3026 = vpop.f32.mrb[0].mxu0
        %3027 = vmatprep.mubr.f32.mxu0 0.0
        %3028 = vmatmul.mubr.f32.gmra.mrb[0].mxu0 %v651
        %v3029 = vpop.f32.mrb[0].mxu0
        %v3030 = vadd.f32 %v2868, %v3029
        %v3031 = vpop.f32.mrb[0].mxu0
        %3032 = vmatprep.mubr.f32.mxu0 0.0
        %3033 = vmatmul.mubr.f32.gmra.mrb[0].mxu0 %v654
        %v3034 = vpop.f32.mrb[0].mxu0
        %v3035 = vadd.f32 %v2868, %v3034
        %v3036 = vpop.f32.mrb[0].mxu0
        %3037 = vmatprep.mubr.f32.mxu0 0.0
        %3038 = vmatmul.mubr.f32.gmra.mrb[0].mxu0 %v657
        %v3039 = vpop.f32.mrb[0].mxu0
        %v3040 = vadd.f32 %v2868, %v3039
        %v3041 = vpop.f32.mrb[0].mxu0
        %3042 = vmatprep.mubr.f32.mxu0 0.0
        %3043 = vmatmul.mubr.f32.gmra.mrb[0].mxu0 %v660
        %v3044 = vpop.f32.mrb[0].mxu0
        %v3045 = vadd.f32 %v2868, %v3044
        %v3046 = vpop.f32.mrb[0].mxu0
        %3047 = vmatprep.mubr.f32.mxu0 0.0
        %3048 = vmatmul.mubr.f32.gmra.mrb[0].mxu0 %v663
        %v3049 = vpop.f32.mrb[0].mxu0
        %v3050 = vadd.f32 %v2868, %v3049
        %v3051 = vpop.f32.mrb[0].mxu0
        %3052 = vmatprep.mubr.f32.mxu0 0.0
        %3053 = vmatmul.mubr.f32.gmra.mrb[0].mxu0 %v666
        %v3054 = vpop.f32.mrb[0].mxu0
        %v3055 = vadd.f32 %v2868, %v3054
        %v3056 = vpop.f32.mrb[0].mxu0
        %3057 = vmatprep.mubr.f32.mxu0 0.0
        %3058 = vmatmul.mubr.f32.gmra.mrb[0].mxu0 %v669
        %v3059 = vpop.f32.mrb[0].mxu0
        %v3060 = vadd.f32 %v2868, %v3059
        %v3061 = vpop.f32.mrb[0].mxu0
        %3062 = vmatprep.mubr.f32.mxu0 0.0
        %3063 = vmatmul.mubr.f32.gmra.mrb[0].mxu0 %v672
        %v3064 = vpop.f32.mrb[0].mxu0
        %v3065 = vadd.f32 %v2868, %v3064
        %v3066 = vpop.f32.mrb[0].mxu0
        %3067 = vmatprep.mubr.f32.mxu0 0.0
        %3068 = vmatmul.mubr.f32.gmra.mrb[0].mxu0 %v675
        %v3069 = vpop.f32.mrb[0].mxu0
        %v3070 = vadd.f32 %v2868, %v3069
        %v3071 = vpop.f32.mrb[0].mxu0
        %3072 = vmatprep.mubr.f32.mxu0 0.0
        %3073 = vmatmul.mubr.f32.gmra.mrb[0].mxu0 %v678
        %v3074 = vpop.f32.mrb[0].mxu0
        %v3075 = vadd.f32 %v2868, %v3074
        %v3076 = vpop.f32.mrb[0].mxu0
        %3077 = vmatprep.mubr.f32.mxu0 0.0
        %3078 = vmatmul.mubr.f32.gmra.mrb[0].mxu0 %v681
        %v3079 = vpop.f32.mrb[0].mxu0
        %v3080 = vadd.f32 %v2868, %v3079
        %v3081 = vpop.f32.mrb[0].mxu0
        %3082 = vmatprep.mubr.f32.mxu0 0.0
        %3083 = vmatmul.mubr.f32.gmra.mrb[0].mxu0 %v684
        %v3084 = vpop.f32.mrb[0].mxu0
        %v3085 = vadd.f32 %v2868, %v3084
        %v3086 = vpop.f32.mrb[0].mxu0
        %3087 = vmatprep.mubr.f32.mxu0 0.0
        %3088 = vmatmul.mubr.f32.gmra.mrb[0].mxu0 %v687
        %v3089 = vpop.f32.mrb[0].mxu0
        %v3090 = vadd.f32 %v2868, %v3089
        %v3091 = vpop.f32.mrb[0].mxu0
        %3092 = vmatprep.mubr.f32.mxu0 0.0
        %3093 = vmatmul.mubr.f32.gmra.mrb[0].mxu0 %v690
        %v3094 = vpop.f32.mrb[0].mxu0
        %v3095 = vadd.f32 %v2868, %v3094
        %v3096 = vpop.f32.mrb[0].mxu0
        %3097 = vmatprep.mubr.f32.mxu0 0.0
        %3098 = vmatmul.mubr.f32.gmra.mrb[0].mxu0 %v693
        %v3099 = vpop.f32.mrb[0].mxu0
        %v3100 = vadd.f32 %v2868, %v3099
        %v3101 = vpop.f32.mrb[0].mxu0
        %3102 = vmatprep.mubr.f32.mxu0 0.0
        %3103 = vmatmul.mubr.f32.gmra.mrb[0].mxu0 %v696
        %v3104 = vpop.f32.mrb[0].mxu0
        %v3105 = vadd.f32 %v2868, %v3104
        %v3106 = vpop.f32.mrb[0].mxu0
        %3107 = vmatprep.mubr.f32.mxu0 0.0
        %3108 = vmatmul.mubr.f32.gmra.mrb[0].mxu0 %v699
        %v3109 = vpop.f32.mrb[0].mxu0
        %v3110 = vadd.f32 %v2868, %v3109
        %v3111 = vpop.f32.mrb[0].mxu0
        %3112 = vmatprep.mubr.f32.mxu0 0.0
        %3113 = vmatmul.mubr.f32.gmra.mrb[0].mxu0 %v702
        %v3114 = vpop.f32.mrb[0].mxu0
        %v3115 = vadd.f32 %v2868, %v3114
        %v3116 = vpop.f32.mrb[0].mxu0
        %3117 = vmatprep.mubr.f32.mxu0 0.0
        %3118 = vmatmul.mubr.f32.gmra.mrb[0].mxu0 %v705
        %v3119 = vpop.f32.mrb[0].mxu0
        %v3120 = vadd.f32 %v2868, %v3119
        %v3121 = vpop.f32.mrb[0].mxu0
        %3122 = vmatprep.mubr.f32.mxu0 0.0
        %3123 = vmatmul.mubr.f32.gmra.mrb[0].mxu0 %v708
        %v3124 = vpop.f32.mrb[0].mxu0
        %v3125 = vadd.f32 %v2868, %v3124
        %v3126 = vpop.f32.mrb[0].mxu0
        %3127 = vmatprep.mubr.f32.mxu0 0.0
        %3128 = vmatmul.mubr.f32.gmra.mrb[0].mxu0 %v711
        %v3129 = vpop.f32.mrb[0].mxu0
        %v3130 = vadd.f32 %v2868, %v3129
        %v3131 = vpop.f32.mrb[0].mxu0
        %3132 = vmatprep.mubr.f32.mxu0 0.0
        %3133 = vmatmul.mubr.f32.gmra.mrb[0].mxu0 %v714
        %v3134 = vpop.f32.mrb[0].mxu0
        %v3135 = vadd.f32 %v2868, %v3134
        %v3136 = vpop.f32.mrb[0].mxu0
        %3137 = vdwg.mxu0
        %v3138 = vld [vmem:[#allocation3] sm:$0xff]
        %v3139 = vld [vmem:[#allocation3 + $0x8] sm:$0xff]
        %v3140 = vld [vmem:[#allocation3 + $0x10] sm:$0xff]
        %v3141 = vld [vmem:[#allocation3 + $0x18] sm:$0xff]
        %v3142 = vld [vmem:[#allocation3 + $0x20] sm:$0xff]
        %v3143 = vld [vmem:[#allocation3 + $0x28] sm:$0xff]
        %v3144 = vld [vmem:[#allocation3 + $0x30] sm:$0xff]
        %v3145 = vld [vmem:[#allocation3 + $0x38] sm:$0xff]
        %v3146 = vld [vmem:[#allocation3 + $0x40] sm:$0xff]
        %v3147 = vld [vmem:[#allocation3 + $0x48] sm:$0xff]
        %v3148 = vld [vmem:[#allocation3 + $0x50] sm:$0xff]
        %v3149 = vld [vmem:[#allocation3 + $0x58] sm:$0xff]
        %v3150 = vld [vmem:[#allocation3 + $0x60] sm:$0xff]
        %v3151 = vld [vmem:[#allocation3 + $0x68] sm:$0xff]
        %v3152 = vld [vmem:[#allocation3 + $0x70] sm:$0xff]
        %v3153 = vld [vmem:[#allocation3 + $0x78] sm:$0xff]
        %v3154 = vld [vmem:[#allocation3 + $0x80] sm:$0xff]
        %v3155 = vld [vmem:[#allocation3 + $0x88] sm:$0xff]
        %v3156 = vld [vmem:[#allocation3 + $0x90] sm:$0xff]
        %v3157 = vld [vmem:[#allocation3 + $0x98] sm:$0xff]
        %v3158 = vld [vmem:[#allocation3 + $0xa0] sm:$0xff]
        %v3159 = vld [vmem:[#allocation3 + $0xa8] sm:$0xff]
        %v3160 = vld [vmem:[#allocation3 + $0xb0] sm:$0xff]
        %v3161 = vld [vmem:[#allocation3 + $0xb8] sm:$0xff]
        %v3162 = vld [vmem:[#allocation3 + $0xc0] sm:$0xff]
        %v3163 = vld [vmem:[#allocation3 + $0xc8] sm:$0xff]
        %v3164 = vld [vmem:[#allocation3 + $0xd0] sm:$0xff]
        %v3165 = vld [vmem:[#allocation3 + $0xd8] sm:$0xff]
        %v3166 = vld [vmem:[#allocation3 + $0xe0] sm:$0xff]
        %v3167 = vld [vmem:[#allocation3 + $0xe8] sm:$0xff]
        %v3168 = vld [vmem:[#allocation3 + $0xf0] sm:$0xff]
        %v3169 = vld [vmem:[#allocation3 + $0xf8] sm:$0xff]
        %v3170 = vld [vmem:[#allocation3 + $0x100] sm:$0xff]
        %v3171 = vld [vmem:[#allocation3 + $0x108] sm:$0xff]
        %v3172 = vld [vmem:[#allocation3 + $0x110] sm:$0xff]
        %v3173 = vld [vmem:[#allocation3 + $0x118] sm:$0xff]
        %v3174 = vld [vmem:[#allocation3 + $0x120] sm:$0xff]
        %v3175 = vld [vmem:[#allocation3 + $0x128] sm:$0xff]
        %v3176 = vld [vmem:[#allocation3 + $0x130] sm:$0xff]
        %v3177 = vld [vmem:[#allocation3 + $0x138] sm:$0xff]
        %v3178 = vld [vmem:[%s5] sm:$0xff]
        %v3179 = vld [vmem:[%s5 + $0x8] sm:$0xff]
        %v3180 = vld [vmem:[%s5 + $0x10] sm:$0xff]
        %v3181 = vld [vmem:[%s5 + $0x18] sm:$0xff]
        %v3183 = vsel %vm1037, %v3138, 0
        %v3186 = vsel %vm1037, %v3139, 0
        %v3189 = vsel %vm1037, %v3140, 0
        %v3192 = vsel %vm1037, %v3141, 0
        %v3195 = vsel %vm1037, %v3142, 0
        %v3198 = vsel %vm1037, %v3143, 0
        %v3201 = vsel %vm1037, %v3144, 0
        %v3204 = vsel %vm1037, %v3145, 0
        %v3207 = vsel %vm1037, %v3146, 0
        %v3210 = vsel %vm1037, %v3147, 0
        %v3213 = vsel %vm1037, %v3148, 0
        %v3216 = vsel %vm1037, %v3149, 0
        %v3219 = vsel %vm1037, %v3150, 0
        %v3222 = vsel %vm1037, %v3151, 0
        %v3225 = vsel %vm1037, %v3152, 0
        %v3228 = vsel %vm1037, %v3153, 0
        %v3231 = vsel %vm1037, %v3154, 0
        %v3234 = vsel %vm1037, %v3155, 0
        %v3237 = vsel %vm1037, %v3156, 0
        %v3240 = vsel %vm1037, %v3157, 0
        %v3243 = vsel %vm1037, %v3158, 0
        %v3246 = vsel %vm1037, %v3159, 0
        %v3249 = vsel %vm1037, %v3160, 0
        %v3252 = vsel %vm1037, %v3161, 0
        %v3255 = vsel %vm1037, %v3162, 0
        %v3258 = vsel %vm1037, %v3163, 0
        %v3261 = vsel %vm1037, %v3164, 0
        %v3264 = vsel %vm1037, %v3165, 0
        %v3267 = vsel %vm1037, %v3166, 0
        %v3270 = vsel %vm1037, %v3167, 0
        %v3273 = vsel %vm1037, %v3168, 0
        %v3276 = vsel %vm1037, %v3169, 0
        %v3279 = vsel %vm1037, %v3170, 0
        %v3282 = vsel %vm1037, %v3171, 0
        %v3285 = vsel %vm1037, %v3172, 0
        %v3288 = vsel %vm1037, %v3173, 0
        %v3291 = vsel %vm1037, %v3174, 0
        %v3294 = vsel %vm1037, %v3175, 0
        %v3297 = vsel %vm1037, %v3176, 0
        %v3300 = vsel %vm1037, %v3177, 0
        %3302 = vmatprep.subr.mxu0 0.0
        %3303 = vmatpush1.msra.mxu0 %v3178
        %3304 = vmatprep.subr.mxu0 0.0
        %3305 = vmatpush1.msra.mxu0 %v3179
        %3306 = vmatprep.subr.mxu0 0.0
        %3307 = vmatpush1.msra.mxu0 %v3180
        %3308 = vmatprep.subr.mxu0 0.0
        %3309 = vmatpush1.msra.mxu0 %v3181
        %3310 = vmatprep.subr.mxu0 0.0
        %3311 = vmatpush1.msra.mxu0 0.0
        %3312 = vmatprep.subr.mxu0 0.0
        %3313 = vmatpush1.msra.mxu0 0.0
        %3314 = vmatprep.subr.mxu0 0.0
        %3315 = vmatpush1.msra.mxu0 0.0
        %3316 = vmatprep.subr.mxu0 0.0
        %3317 = vmatpush1.msra.mxu0 0.0
        %3318 = vmatprep.subr.mxu0 0.0
        %3319 = vmatpush1.msra.mxu0 0.0
        %3320 = vmatprep.subr.mxu0 0.0
        %3321 = vmatpush1.msra.mxu0 0.0
        %3322 = vmatprep.subr.mxu0 0.0
        %3323 = vmatpush1.msra.mxu0 0.0
        %3324 = vmatprep.subr.mxu0 0.0
        %3325 = vmatpush1.msra.mxu0 0.0
        %3326 = vmatprep.subr.mxu0 0.0
        %3327 = vmatpush1.msra.mxu0 0.0
        %3328 = vmatprep.subr.mxu0 0.0
        %3329 = vmatpush1.msra.mxu0 0.0
        %3330 = vmatprep.subr.mxu0 0.0
        %3331 = vmatpush1.msra.mxu0 0.0
        %3332 = vmatprep.subr.mxu0 0.0
        %3333 = vmatpush1.msra.mxu0 0.0
        %3334 = vmatprep.subr.mxu0 0.0
        %3335 = vmatpush1.msra.mxu0 0.0
        %3336 = vmatprep.subr.mxu0 0.0
        %3337 = vmatpush1.msra.mxu0 0.0
        %3338 = vmatprep.subr.mxu0 0.0
        %3339 = vmatpush1.msra.mxu0 0.0
        %3340 = vmatprep.subr.mxu0 0.0
        %3341 = vmatpush1.msra.mxu0 0.0
        %3342 = vmatprep.subr.mxu0 0.0
        %3343 = vmatpush1.msra.mxu0 0.0
        %3344 = vmatprep.subr.mxu0 0.0
        %3345 = vmatpush1.msra.mxu0 0.0
        %3346 = vmatprep.subr.mxu0 0.0
        %3347 = vmatpush1.msra.mxu0 0.0
        %3348 = vmatprep.subr.mxu0 0.0
        %3349 = vmatpush1.msra.mxu0 0.0
        %3350 = vmatprep.subr.mxu0 0.0
        %3351 = vmatpush1.msra.mxu0 0.0
        %3352 = vmatprep.subr.mxu0 0.0
        %3353 = vmatpush1.msra.mxu0 0.0
        %3354 = vmatprep.subr.mxu0 0.0
        %3355 = vmatpush1.msra.mxu0 0.0
        %3356 = vmatprep.subr.mxu0 0.0
        %3357 = vmatpush1.msra.mxu0 0.0
        %3358 = vmatprep.subr.mxu0 0.0
        %3359 = vmatpush1.msra.mxu0 0.0
        %3360 = vmatprep.subr.mxu0 0.0
        %3361 = vmatpush1.msra.mxu0 0.0
        %3362 = vmatprep.subr.mxu0 0.0
        %3363 = vmatpush1.msra.mxu0 0.0
        %3364 = vmatprep.subr.mxu0 0.0
        %3365 = vmatpush1.msra.mxu0 0.0
        %3366 = vmatprep.mubr.f32.mxu0 0.0
        %3367 = vmatmul.mubr.f32.gmra.mrb[0].mxu0 %v3183
        %v3368 = vpop.f32.mrb[0].mxu0
        %v3369 = vadd.f32 0.0, %v3368
        %v3370 = vpop.f32.mrb[0].mxu0
        %3371 = vmatprep.mubr.f32.mxu0 0.0
        %3372 = vmatmul.mubr.f32.gmra.mrb[0].mxu0 %v3186
        %v3373 = vpop.f32.mrb[0].mxu0
        %v3374 = vadd.f32 0.0, %v3373
        %v3375 = vpop.f32.mrb[0].mxu0
        %3376 = vmatprep.mubr.f32.mxu0 0.0
        %3377 = vmatmul.mubr.f32.gmra.mrb[0].mxu0 %v3189
        %v3378 = vpop.f32.mrb[0].mxu0
        %v3379 = vadd.f32 0.0, %v3378
        %v3380 = vpop.f32.mrb[0].mxu0
        %3381 = vmatprep.mubr.f32.mxu0 0.0
        %3382 = vmatmul.mubr.f32.gmra.mrb[0].mxu0 %v3192
        %v3383 = vpop.f32.mrb[0].mxu0
        %v3384 = vadd.f32 0.0, %v3383
        %v3385 = vpop.f32.mrb[0].mxu0
        %3386 = vmatprep.mubr.f32.mxu0 0.0
        %3387 = vmatmul.mubr.f32.gmra.mrb[0].mxu0 %v3195
        %v3388 = vpop.f32.mrb[0].mxu0
        %v3389 = vadd.f32 0.0, %v3388
        %v3390 = vpop.f32.mrb[0].mxu0
        %3391 = vmatprep.mubr.f32.mxu0 0.0
        %3392 = vmatmul.mubr.f32.gmra.mrb[0].mxu0 %v3198
        %v3393 = vpop.f32.mrb[0].mxu0
        %v3394 = vadd.f32 0.0, %v3393
        %v3395 = vpop.f32.mrb[0].mxu0
        %3396 = vmatprep.mubr.f32.mxu0 0.0
        %3397 = vmatmul.mubr.f32.gmra.mrb[0].mxu0 %v3201
        %v3398 = vpop.f32.mrb[0].mxu0
        %v3399 = vadd.f32 0.0, %v3398
        %v3400 = vpop.f32.mrb[0].mxu0
        %3401 = vmatprep.mubr.f32.mxu0 0.0
        %3402 = vmatmul.mubr.f32.gmra.mrb[0].mxu0 %v3204
        %v3403 = vpop.f32.mrb[0].mxu0
        %v3404 = vadd.f32 0.0, %v3403
        %v3405 = vpop.f32.mrb[0].mxu0
        %3406 = vmatprep.mubr.f32.mxu0 0.0
        %3407 = vmatmul.mubr.f32.gmra.mrb[0].mxu0 %v3207
        %v3408 = vpop.f32.mrb[0].mxu0
        %v3409 = vadd.f32 0.0, %v3408
        %v3410 = vpop.f32.mrb[0].mxu0
        %3411 = vmatprep.mubr.f32.mxu0 0.0
        %3412 = vmatmul.mubr.f32.gmra.mrb[0].mxu0 %v3210
        %v3413 = vpop.f32.mrb[0].mxu0
        %v3414 = vadd.f32 0.0, %v3413
        %v3415 = vpop.f32.mrb[0].mxu0
        %3416 = vmatprep.mubr.f32.mxu0 0.0
        %3417 = vmatmul.mubr.f32.gmra.mrb[0].mxu0 %v3213
        %v3418 = vpop.f32.mrb[0].mxu0
        %v3419 = vadd.f32 0.0, %v3418
        %v3420 = vpop.f32.mrb[0].mxu0
        %3421 = vmatprep.mubr.f32.mxu0 0.0
        %3422 = vmatmul.mubr.f32.gmra.mrb[0].mxu0 %v3216
        %v3423 = vpop.f32.mrb[0].mxu0
        %v3424 = vadd.f32 0.0, %v3423
        %v3425 = vpop.f32.mrb[0].mxu0
        %3426 = vmatprep.mubr.f32.mxu0 0.0
        %3427 = vmatmul.mubr.f32.gmra.mrb[0].mxu0 %v3219
        %v3428 = vpop.f32.mrb[0].mxu0
        %v3429 = vadd.f32 0.0, %v3428
        %v3430 = vpop.f32.mrb[0].mxu0
        %3431 = vmatprep.mubr.f32.mxu0 0.0
        %3432 = vmatmul.mubr.f32.gmra.mrb[0].mxu0 %v3222
        %v3433 = vpop.f32.mrb[0].mxu0
        %v3434 = vadd.f32 0.0, %v3433
        %v3435 = vpop.f32.mrb[0].mxu0
        %3436 = vmatprep.mubr.f32.mxu0 0.0
        %3437 = vmatmul.mubr.f32.gmra.mrb[0].mxu0 %v3225
        %v3438 = vpop.f32.mrb[0].mxu0
        %v3439 = vadd.f32 0.0, %v3438
        %v3440 = vpop.f32.mrb[0].mxu0
        %3441 = vmatprep.mubr.f32.mxu0 0.0
        %3442 = vmatmul.mubr.f32.gmra.mrb[0].mxu0 %v3228
        %v3443 = vpop.f32.mrb[0].mxu0
        %v3444 = vadd.f32 0.0, %v3443
        %v3445 = vpop.f32.mrb[0].mxu0
        %3446 = vmatprep.mubr.f32.mxu0 0.0
        %3447 = vmatmul.mubr.f32.gmra.mrb[0].mxu0 %v3231
        %v3448 = vpop.f32.mrb[0].mxu0
        %v3449 = vadd.f32 0.0, %v3448
        %v3450 = vpop.f32.mrb[0].mxu0
        %3451 = vmatprep.mubr.f32.mxu0 0.0
        %3452 = vmatmul.mubr.f32.gmra.mrb[0].mxu0 %v3234
        %v3453 = vpop.f32.mrb[0].mxu0
        %v3454 = vadd.f32 0.0, %v3453
        %v3455 = vpop.f32.mrb[0].mxu0
        %3456 = vmatprep.mubr.f32.mxu0 0.0
        %3457 = vmatmul.mubr.f32.gmra.mrb[0].mxu0 %v3237
        %v3458 = vpop.f32.mrb[0].mxu0
        %v3459 = vadd.f32 0.0, %v3458
        %v3460 = vpop.f32.mrb[0].mxu0
        %3461 = vmatprep.mubr.f32.mxu0 0.0
        %3462 = vmatmul.mubr.f32.gmra.mrb[0].mxu0 %v3240
        %v3463 = vpop.f32.mrb[0].mxu0
        %v3464 = vadd.f32 0.0, %v3463
        %v3465 = vpop.f32.mrb[0].mxu0
        %3466 = vmatprep.mubr.f32.mxu0 0.0
        %3467 = vmatmul.mubr.f32.gmra.mrb[0].mxu0 %v3243
        %v3468 = vpop.f32.mrb[0].mxu0
        %v3469 = vadd.f32 0.0, %v3468
        %v3470 = vpop.f32.mrb[0].mxu0
        %3471 = vmatprep.mubr.f32.mxu0 0.0
        %3472 = vmatmul.mubr.f32.gmra.mrb[0].mxu0 %v3246
        %v3473 = vpop.f32.mrb[0].mxu0
        %v3474 = vadd.f32 0.0, %v3473
        %v3475 = vpop.f32.mrb[0].mxu0
        %3476 = vmatprep.mubr.f32.mxu0 0.0
        %3477 = vmatmul.mubr.f32.gmra.mrb[0].mxu0 %v3249
        %v3478 = vpop.f32.mrb[0].mxu0
        %v3479 = vadd.f32 0.0, %v3478
        %v3480 = vpop.f32.mrb[0].mxu0
        %3481 = vmatprep.mubr.f32.mxu0 0.0
        %3482 = vmatmul.mubr.f32.gmra.mrb[0].mxu0 %v3252
        %v3483 = vpop.f32.mrb[0].mxu0
        %v3484 = vadd.f32 0.0, %v3483
        %v3485 = vpop.f32.mrb[0].mxu0
        %3486 = vmatprep.mubr.f32.mxu0 0.0
        %3487 = vmatmul.mubr.f32.gmra.mrb[0].mxu0 %v3255
        %v3488 = vpop.f32.mrb[0].mxu0
        %v3489 = vadd.f32 0.0, %v3488
        %v3490 = vpop.f32.mrb[0].mxu0
        %3491 = vmatprep.mubr.f32.mxu0 0.0
        %3492 = vmatmul.mubr.f32.gmra.mrb[0].mxu0 %v3258
        %v3493 = vpop.f32.mrb[0].mxu0
        %v3494 = vadd.f32 0.0, %v3493
        %v3495 = vpop.f32.mrb[0].mxu0
        %3496 = vmatprep.mubr.f32.mxu0 0.0
        %3497 = vmatmul.mubr.f32.gmra.mrb[0].mxu0 %v3261
        %v3498 = vpop.f32.mrb[0].mxu0
        %v3499 = vadd.f32 0.0, %v3498
        %v3500 = vpop.f32.mrb[0].mxu0
        %3501 = vmatprep.mubr.f32.mxu0 0.0
        %3502 = vmatmul.mubr.f32.gmra.mrb[0].mxu0 %v3264
        %v3503 = vpop.f32.mrb[0].mxu0
        %v3504 = vadd.f32 0.0, %v3503
        %v3505 = vpop.f32.mrb[0].mxu0
        %3506 = vmatprep.mubr.f32.mxu0 0.0
        %3507 = vmatmul.mubr.f32.gmra.mrb[0].mxu0 %v3267
        %v3508 = vpop.f32.mrb[0].mxu0
        %v3509 = vadd.f32 0.0, %v3508
        %v3510 = vpop.f32.mrb[0].mxu0
        %3511 = vmatprep.mubr.f32.mxu0 0.0
        %3512 = vmatmul.mubr.f32.gmra.mrb[0].mxu0 %v3270
        %v3513 = vpop.f32.mrb[0].mxu0
        %v3514 = vadd.f32 0.0, %v3513
        %v3515 = vpop.f32.mrb[0].mxu0
        %3516 = vmatprep.mubr.f32.mxu0 0.0
        %3517 = vmatmul.mubr.f32.gmra.mrb[0].mxu0 %v3273
        %v3518 = vpop.f32.mrb[0].mxu0
        %v3519 = vadd.f32 0.0, %v3518
        %v3520 = vpop.f32.mrb[0].mxu0
        %3521 = vmatprep.mubr.f32.mxu0 0.0
        %3522 = vmatmul.mubr.f32.gmra.mrb[0].mxu0 %v3276
        %v3523 = vpop.f32.mrb[0].mxu0
        %v3524 = vadd.f32 0.0, %v3523
        %v3525 = vpop.f32.mrb[0].mxu0
        %3526 = vmatprep.mubr.f32.mxu0 0.0
        %3527 = vmatmul.mubr.f32.gmra.mrb[0].mxu0 %v3279
        %v3528 = vpop.f32.mrb[0].mxu0
        %v3529 = vadd.f32 0.0, %v3528
        %v3530 = vpop.f32.mrb[0].mxu0
        %3531 = vmatprep.mubr.f32.mxu0 0.0
        %3532 = vmatmul.mubr.f32.gmra.mrb[0].mxu0 %v3282
        %v3533 = vpop.f32.mrb[0].mxu0
        %v3534 = vadd.f32 0.0, %v3533
        %v3535 = vpop.f32.mrb[0].mxu0
        %3536 = vmatprep.mubr.f32.mxu0 0.0
        %3537 = vmatmul.mubr.f32.gmra.mrb[0].mxu0 %v3285
        %v3538 = vpop.f32.mrb[0].mxu0
        %v3539 = vadd.f32 0.0, %v3538
        %v3540 = vpop.f32.mrb[0].mxu0
        %3541 = vmatprep.mubr.f32.mxu0 0.0
        %3542 = vmatmul.mubr.f32.gmra.mrb[0].mxu0 %v3288
        %v3543 = vpop.f32.mrb[0].mxu0
        %v3544 = vadd.f32 0.0, %v3543
        %v3545 = vpop.f32.mrb[0].mxu0
        %3546 = vmatprep.mubr.f32.mxu0 0.0
        %3547 = vmatmul.mubr.f32.gmra.mrb[0].mxu0 %v3291
        %v3548 = vpop.f32.mrb[0].mxu0
        %v3549 = vadd.f32 0.0, %v3548
        %v3550 = vpop.f32.mrb[0].mxu0
        %3551 = vmatprep.mubr.f32.mxu0 0.0
        %3552 = vmatmul.mubr.f32.gmra.mrb[0].mxu0 %v3294
        %v3553 = vpop.f32.mrb[0].mxu0
        %v3554 = vadd.f32 0.0, %v3553
        %v3555 = vpop.f32.mrb[0].mxu0
        %3556 = vmatprep.mubr.f32.mxu0 0.0
        %3557 = vmatmul.mubr.f32.gmra.mrb[0].mxu0 %v3297
        %v3558 = vpop.f32.mrb[0].mxu0
        %v3559 = vadd.f32 0.0, %v3558
        %v3560 = vpop.f32.mrb[0].mxu0
        %3561 = vmatprep.mubr.f32.mxu0 0.0
        %3562 = vmatmul.mubr.f32.gmra.mrb[0].mxu0 %v3300
        %v3563 = vpop.f32.mrb[0].mxu0
        %v3564 = vadd.f32 0.0, %v3563
        %v3565 = vpop.f32.mrb[0].mxu0
        %3566 = vdwg.mxu0
        %v3567 = vadd.f32 %v2940, %v3369
        %v3568 = vadd.f32 %v2945, %v3374
        %v3569 = vadd.f32 %v2950, %v3379
        %v3570 = vadd.f32 %v2955, %v3384
        %v3571 = vadd.f32 %v2960, %v3389
        %v3572 = vadd.f32 %v2965, %v3394
        %v3573 = vadd.f32 %v2970, %v3399
        %v3574 = vadd.f32 %v2975, %v3404
        %v3575 = vadd.f32 %v2980, %v3409
        %v3576 = vadd.f32 %v2985, %v3414
        %v3577 = vadd.f32 %v2990, %v3419
        %v3578 = vadd.f32 %v2995, %v3424
        %v3579 = vadd.f32 %v3000, %v3429
        %v3580 = vadd.f32 %v3005, %v3434
        %v3581 = vadd.f32 %v3010, %v3439
        %v3582 = vadd.f32 %v3015, %v3444
        %v3583 = vadd.f32 %v3020, %v3449
        %v3584 = vadd.f32 %v3025, %v3454
        %v3585 = vadd.f32 %v3030, %v3459
        %v3586 = vadd.f32 %v3035, %v3464
        %v3587 = vadd.f32 %v3040, %v3469
        %v3588 = vadd.f32 %v3045, %v3474
        %v3589 = vadd.f32 %v3050, %v3479
        %v3590 = vadd.f32 %v3055, %v3484
        %v3591 = vadd.f32 %v3060, %v3489
        %v3592 = vadd.f32 %v3065, %v3494
        %v3593 = vadd.f32 %v3070, %v3499
        %v3594 = vadd.f32 %v3075, %v3504
        %v3595 = vadd.f32 %v3080, %v3509
        %v3596 = vadd.f32 %v3085, %v3514
        %v3597 = vadd.f32 %v3090, %v3519
        %v3598 = vadd.f32 %v3095, %v3524
        %v3599 = vadd.f32 %v3100, %v3529
        %v3600 = vadd.f32 %v3105, %v3534
        %v3601 = vadd.f32 %v3110, %v3539
        %v3602 = vadd.f32 %v3115, %v3544
        %v3603 = vadd.f32 %v3120, %v3549
        %v3604 = vadd.f32 %v3125, %v3554
        %v3605 = vadd.f32 %v3130, %v3559
        %v3606 = vadd.f32 %v3135, %v3564
        %3607 = vst [vmem:[#allocation2] sm:$0xff] %v3567
        %3608 = vst [vmem:[#allocation2 + $0x8] sm:$0xff] %v3568
        %3609 = vst [vmem:[#allocation2 + $0x10] sm:$0xff] %v3569
        %3610 = vst [vmem:[#allocation2 + $0x18] sm:$0xff] %v3570
        %3611 = vst [vmem:[#allocation2 + $0x20] sm:$0xff] %v3571
        %3612 = vst [vmem:[#allocation2 + $0x28] sm:$0xff] %v3572
        %3613 = vst [vmem:[#allocation2 + $0x30] sm:$0xff] %v3573
        %3614 = vst [vmem:[#allocation2 + $0x38] sm:$0xff] %v3574
        %3615 = vst [vmem:[#allocation2 + $0x40] sm:$0xff] %v3575
        %3616 = vst [vmem:[#allocation2 + $0x48] sm:$0xff] %v3576
        %3617 = vst [vmem:[#allocation2 + $0x50] sm:$0xff] %v3577
        %3618 = vst [vmem:[#allocation2 + $0x58] sm:$0xff] %v3578
        %3619 = vst [vmem:[#allocation2 + $0x60] sm:$0xff] %v3579
        %3620 = vst [vmem:[#allocation2 + $0x68] sm:$0xff] %v3580
        %3621 = vst [vmem:[#allocation2 + $0x70] sm:$0xff] %v3581
        %3622 = vst [vmem:[#allocation2 + $0x78] sm:$0xff] %v3582
        %3623 = vst [vmem:[#allocation2 + $0x80] sm:$0xff] %v3583
        %3624 = vst [vmem:[#allocation2 + $0x88] sm:$0xff] %v3584
        %3625 = vst [vmem:[#allocation2 + $0x90] sm:$0xff] %v3585
        %3626 = vst [vmem:[#allocation2 + $0x98] sm:$0xff] %v3586
        %3627 = vst [vmem:[#allocation2 + $0xa0] sm:$0xff] %v3587
        %3628 = vst [vmem:[#allocation2 + $0xa8] sm:$0xff] %v3588
        %3629 = vst [vmem:[#allocation2 + $0xb0] sm:$0xff] %v3589
        %3630 = vst [vmem:[#allocation2 + $0xb8] sm:$0xff] %v3590
        %3631 = vst [vmem:[#allocation2 + $0xc0] sm:$0xff] %v3591
        %3632 = vst [vmem:[#allocation2 + $0xc8] sm:$0xff] %v3592
        %3633 = vst [vmem:[#allocation2 + $0xd0] sm:$0xff] %v3593
        %3634 = vst [vmem:[#allocation2 + $0xd8] sm:$0xff] %v3594
        %3635 = vst [vmem:[#allocation2 + $0xe0] sm:$0xff] %v3595
        %3636 = vst [vmem:[#allocation2 + $0xe8] sm:$0xff] %v3596
        %3637 = vst [vmem:[#allocation2 + $0xf0] sm:$0xff] %v3597
        %3638 = vst [vmem:[#allocation2 + $0xf8] sm:$0xff] %v3598
        %3639 = vst [vmem:[#allocation2 + $0x100] sm:$0xff] %v3599
        %3640 = vst [vmem:[#allocation2 + $0x108] sm:$0xff] %v3600
        %3641 = vst [vmem:[#allocation2 + $0x110] sm:$0xff] %v3601
        %3642 = vst [vmem:[#allocation2 + $0x118] sm:$0xff] %v3602
        %3643 = vst [vmem:[#allocation2 + $0x120] sm:$0xff] %v3603
        %3644 = vst [vmem:[#allocation2 + $0x128] sm:$0xff] %v3604
        %3645 = vst [vmem:[#allocation2 + $0x130] sm:$0xff] %v3605
        %3646 = vst [vmem:[#allocation2 + $0x138] sm:$0xff] %v3606
        %v3647 = vld [vmem:[%s6] sm:$0xff]
        %v3648 = vld [vmem:[%s6 + $0x8] sm:$0xff]
        %v3649 = vld [vmem:[%s6 + $0x10] sm:$0xff]
        %v3650 = vld [vmem:[%s6 + $0x18] sm:$0xff]
        %v3651 = vld [vmem:[#allocation2] sm:$0xff]
        %v3652 = vld [vmem:[#allocation2 + $0x8] sm:$0xff]
        %v3653 = vld [vmem:[#allocation2 + $0x10] sm:$0xff]
        %v3654 = vld [vmem:[#allocation2 + $0x18] sm:$0xff]
        %v3655 = vld [vmem:[#allocation2 + $0x20] sm:$0xff]
        %v3656 = vld [vmem:[#allocation2 + $0x28] sm:$0xff]
        %v3657 = vld [vmem:[#allocation2 + $0x30] sm:$0xff]
        %v3658 = vld [vmem:[#allocation2 + $0x38] sm:$0xff]
        %3659 = vmatprep.subr.mxu0 0.0
        %3660 = vmatpush1.msra.mxu0 %v3647
        %3661 = vmatprep.subr.mxu0 0.0
        %3662 = vmatpush1.msra.mxu0 %v3648
        %3663 = vmatprep.subr.mxu0 0.0
        %3664 = vmatpush1.msra.mxu0 %v3649
        %3665 = vmatprep.subr.mxu0 0.0
        %3666 = vmatpush1.msra.mxu0 %v3650
        %3667 = vmatprep.subr.mxu0 0.0
        %3668 = vmatpush1.msra.mxu0 0.0
        %3669 = vmatprep.subr.mxu0 0.0
        %3670 = vmatpush1.msra.mxu0 0.0
        %3671 = vmatprep.subr.mxu0 0.0
        %3672 = vmatpush1.msra.mxu0 0.0
        %3673 = vmatprep.subr.mxu0 0.0
        %3674 = vmatpush1.msra.mxu0 0.0
        %3675 = vmatprep.subr.mxu0 0.0
        %3676 = vmatpush1.msra.mxu0 0.0
        %3677 = vmatprep.subr.mxu0 0.0
        %3678 = vmatpush1.msra.mxu0 0.0
        %3679 = vmatprep.subr.mxu0 0.0
        %3680 = vmatpush1.msra.mxu0 0.0
        %3681 = vmatprep.subr.mxu0 0.0
        %3682 = vmatpush1.msra.mxu0 0.0
        %3683 = vmatprep.subr.mxu0 0.0
        %3684 = vmatpush1.msra.mxu0 0.0
        %3685 = vmatprep.subr.mxu0 0.0
        %3686 = vmatpush1.msra.mxu0 0.0
        %3687 = vmatprep.subr.mxu0 0.0
        %3688 = vmatpush1.msra.mxu0 0.0
        %3689 = vmatprep.subr.mxu0 0.0
        %3690 = vmatpush1.msra.mxu0 0.0
        %3691 = vmatprep.subr.mxu0 0.0
        %3692 = vmatpush1.msra.mxu0 0.0
        %3693 = vmatprep.subr.mxu0 0.0
        %3694 = vmatpush1.msra.mxu0 0.0
        %3695 = vmatprep.subr.mxu0 0.0
        %3696 = vmatpush1.msra.mxu0 0.0
        %3697 = vmatprep.subr.mxu0 0.0
        %3698 = vmatpush1.msra.mxu0 0.0
        %3699 = vmatprep.subr.mxu0 0.0
        %3700 = vmatpush1.msra.mxu0 0.0
        %3701 = vmatprep.subr.mxu0 0.0
        %3702 = vmatpush1.msra.mxu0 0.0
        %3703 = vmatprep.subr.mxu0 0.0
        %3704 = vmatpush1.msra.mxu0 0.0
        %3705 = vmatprep.subr.mxu0 0.0
        %3706 = vmatpush1.msra.mxu0 0.0
        %3707 = vmatprep.subr.mxu0 0.0
        %3708 = vmatpush1.msra.mxu0 0.0
        %3709 = vmatprep.subr.mxu0 0.0
        %3710 = vmatpush1.msra.mxu0 0.0
        %3711 = vmatprep.subr.mxu0 0.0
        %3712 = vmatpush1.msra.mxu0 0.0
        %3713 = vmatprep.subr.mxu0 0.0
        %3714 = vmatpush1.msra.mxu0 0.0
        %3715 = vmatprep.subr.mxu0 0.0
        %3716 = vmatpush1.msra.mxu0 0.0
        %3717 = vmatprep.subr.mxu0 0.0
        %3718 = vmatpush1.msra.mxu0 0.0
        %3719 = vmatprep.subr.mxu0 0.0
        %3720 = vmatpush1.msra.mxu0 0.0
        %3721 = vmatprep.subr.mxu0 0.0
        %3722 = vmatpush1.msra.mxu0 0.0
        %3723 = vmatprep.mubr.f32.mxu0 0.0
        %3724 = vmatmul.mubr.f32.gmra.mrb[0].mxu0 %v1039
        %v3725 = vpop.f32.mrb[0].mxu0
        %v3726 = vadd.f32 0.0, %v3725
        %v3727 = vpop.f32.mrb[0].mxu0
        %3728 = vmatprep.mubr.f32.mxu0 0.0
        %3729 = vmatmul.mubr.f32.gmra.mrb[0].mxu0 %v1039
        %v3730 = vpop.f32.mrb[0].mxu0
        %v3731 = vadd.f32 0.0, %v3730
        %v3732 = vpop.f32.mrb[0].mxu0
        %3733 = vmatprep.mubr.f32.mxu0 0.0
        %3734 = vmatmul.mubr.f32.gmra.mrb[0].mxu0 %v1039
        %v3735 = vpop.f32.mrb[0].mxu0
        %v3736 = vadd.f32 0.0, %v3735
        %v3737 = vpop.f32.mrb[0].mxu0
        %3738 = vmatprep.mubr.f32.mxu0 0.0
        %3739 = vmatmul.mubr.f32.gmra.mrb[0].mxu0 %v1039
        %v3740 = vpop.f32.mrb[0].mxu0
        %v3741 = vadd.f32 0.0, %v3740
        %v3742 = vpop.f32.mrb[0].mxu0
        %3743 = vmatprep.mubr.f32.mxu0 0.0
        %3744 = vmatmul.mubr.f32.gmra.mrb[0].mxu0 %v1039
        %v3745 = vpop.f32.mrb[0].mxu0
        %v3746 = vadd.f32 0.0, %v3745
        %v3747 = vpop.f32.mrb[0].mxu0
        %3748 = vmatprep.mubr.f32.mxu0 0.0
        %3749 = vmatmul.mubr.f32.gmra.mrb[0].mxu0 %v1039
        %v3750 = vpop.f32.mrb[0].mxu0
        %v3751 = vadd.f32 0.0, %v3750
        %v3752 = vpop.f32.mrb[0].mxu0
        %3753 = vmatprep.mubr.f32.mxu0 0.0
        %3754 = vmatmul.mubr.f32.gmra.mrb[0].mxu0 %v1039
        %v3755 = vpop.f32.mrb[0].mxu0
        %v3756 = vadd.f32 0.0, %v3755
        %v3757 = vpop.f32.mrb[0].mxu0
        %3758 = vmatprep.mubr.f32.mxu0 0.0
        %3759 = vmatmul.mubr.f32.gmra.mrb[0].mxu0 %v1039
        %v3760 = vpop.f32.mrb[0].mxu0
        %v3761 = vadd.f32 0.0, %v3760
        %v3762 = vpop.f32.mrb[0].mxu0
        %3763 = vdwg.mxu0
        %v3764 = vadd.f32 %v3651, %v3726
        %v3765 = vadd.f32 %v3652, %v3731
        %v3766 = vadd.f32 %v3653, %v3736
        %v3767 = vadd.f32 %v3654, %v3741
        %v3768 = vadd.f32 %v3655, %v3746
        %v3769 = vadd.f32 %v3656, %v3751
        %v3770 = vadd.f32 %v3657, %v3756
        %v3771 = vadd.f32 %v3658, %v3761
        %v3772 = vxor.u32 %v3764, 2147483648
        %v3773 = vxor.u32 %v3765, 2147483648
        %v3774 = vxor.u32 %v3766, 2147483648
        %v3775 = vxor.u32 %v3767, 2147483648
        %v3776 = vxor.u32 %v3768, 2147483648
        %v3777 = vxor.u32 %v3769, 2147483648
        %v3778 = vxor.u32 %v3770, 2147483648
        %v3779 = vxor.u32 %v3771, 2147483648
        %v3780 = vmul.f32 %v3772, 1.442695
        %v3781 = vpow.pop %v3780
        %v3782 = vmul.f32 %v3773, 1.442695
        %v3783 = vpow.pop %v3782
        %v3784 = vmul.f32 %v3774, 1.442695
        %v3785 = vpow.pop %v3784
        %v3786 = vmul.f32 %v3775, 1.442695
        %v3787 = vpow.pop %v3786
        %v3788 = vmul.f32 %v3776, 1.442695
        %v3789 = vpow.pop %v3788
        %v3790 = vmul.f32 %v3777, 1.442695
        %v3791 = vpow.pop %v3790
        %v3792 = vmul.f32 %v3778, 1.442695
        %v3793 = vpow.pop %v3792
        %v3794 = vmul.f32 %v3779, 1.442695
        %v3795 = vpow.pop %v3794
        %v3796 = vadd.f32 %v3781, 1.0
        %v3797 = vadd.f32 %v3783, 1.0
        %v3798 = vadd.f32 %v3785, 1.0
        %v3799 = vadd.f32 %v3787, 1.0
        %v3800 = vadd.f32 %v3789, 1.0
        %v3801 = vadd.f32 %v3791, 1.0
        %v3802 = vadd.f32 %v3793, 1.0
        %v3803 = vadd.f32 %v3795, 1.0
        %v3804 = vrcp.pop %v3796
        %v3805 = vmul.f32 1.0, %v3804
        %v3806 = vrcp.pop %v3797
        %v3807 = vmul.f32 1.0, %v3806
        %v3808 = vrcp.pop %v3798
        %v3809 = vmul.f32 1.0, %v3808
        %v3810 = vrcp.pop %v3799
        %v3811 = vmul.f32 1.0, %v3810
        %v3812 = vrcp.pop %v3800
        %v3813 = vmul.f32 1.0, %v3812
        %v3814 = vrcp.pop %v3801
        %v3815 = vmul.f32 1.0, %v3814
        %v3816 = vrcp.pop %v3802
        %v3817 = vmul.f32 1.0, %v3816
        %v3818 = vrcp.pop %v3803
        %v3819 = vmul.f32 1.0, %v3818
        %v3820 = vtanh.pop %v3764
        %v3821 = vtanh.pop %v3765
        %v3822 = vtanh.pop %v3766
        %v3823 = vtanh.pop %v3767
        %v3824 = vtanh.pop %v3768
        %v3825 = vtanh.pop %v3769
        %v3826 = vtanh.pop %v3770
        %v3827 = vtanh.pop %v3771
        %v3828 = vmul.f32 %v3805, 0.0
        %v3829 = vmul.f32 %v3807, 0.0
        %v3830 = vmul.f32 %v3809, 0.0
        %v3831 = vmul.f32 %v3811, 0.0
        %v3832 = vmul.f32 %v3813, 0.0
        %v3833 = vmul.f32 %v3815, 0.0
        %v3834 = vmul.f32 %v3817, 0.0
        %v3835 = vmul.f32 %v3819, 0.0
        %3844 = vrot.lane.b32.xlu0 %v3820, 32
        %v3845 = vpop.permute.xlu0 %3844
        %3846 = vrot.lane.b32.xlu0 %v3821, 32
        %v3847 = vpop.permute.xlu0 %3846
        %3848 = vrot.lane.b32.xlu0 %v3822, 32
        %v3849 = vpop.permute.xlu0 %3848
        %3850 = vrot.lane.b32.xlu0 %v3823, 32
        %v3851 = vpop.permute.xlu0 %3850
        %3852 = vrot.lane.b32.xlu0 %v3824, 32
        %v3853 = vpop.permute.xlu0 %3852
        %3854 = vrot.lane.b32.xlu0 %v3825, 32
        %v3855 = vpop.permute.xlu0 %3854
        %3856 = vrot.lane.b32.xlu0 %v3826, 32
        %v3857 = vpop.permute.xlu0 %3856
        %3858 = vrot.lane.b32.xlu0 %v3827, 32
        %v3859 = vpop.permute.xlu0 %3858
        %v3868 = vmul.f32 %v3805, %v3845
        %v3869 = vmul.f32 %v3807, %v3847
        %v3870 = vmul.f32 %v3809, %v3849
        %v3871 = vmul.f32 %v3811, %v3851
        %v3872 = vmul.f32 %v3813, %v3853
        %v3873 = vmul.f32 %v3815, %v3855
        %v3874 = vmul.f32 %v3817, %v3857
        %v3875 = vmul.f32 %v3819, %v3859
        %3884 = vrot.lane.b32.xlu0 %v3868, 32
        %v3885 = vpop.permute.xlu0 %3884
        %3886 = vrot.lane.b32.xlu0 %v3869, 32
        %v3887 = vpop.permute.xlu0 %3886
        %3888 = vrot.lane.b32.xlu0 %v3870, 32
        %v3889 = vpop.permute.xlu0 %3888
        %3890 = vrot.lane.b32.xlu0 %v3871, 32
        %v3891 = vpop.permute.xlu0 %3890
        %3892 = vrot.lane.b32.xlu0 %v3872, 32
        %v3893 = vpop.permute.xlu0 %3892
        %3894 = vrot.lane.b32.xlu0 %v3873, 32
        %v3895 = vpop.permute.xlu0 %3894
        %3896 = vrot.lane.b32.xlu0 %v3874, 32
        %v3897 = vpop.permute.xlu0 %3896
        %3898 = vrot.lane.b32.xlu0 %v3875, 32
        %v3899 = vpop.permute.xlu0 %3898
        %v3908 = vadd.f32 %v3828, %v3885
        %v3909 = vadd.f32 %v3829, %v3887
        %v3910 = vadd.f32 %v3830, %v3889
        %v3911 = vadd.f32 %v3831, %v3891
        %v3912 = vadd.f32 %v3832, %v3893
        %v3913 = vadd.f32 %v3833, %v3895
        %v3914 = vadd.f32 %v3834, %v3897
        %v3915 = vadd.f32 %v3835, %v3899
        %v3916 = vtanh.pop %v3908
        %v3917 = vtanh.pop %v3909
        %v3918 = vtanh.pop %v3910
        %v3919 = vtanh.pop %v3911
        %v3920 = vtanh.pop %v3912
        %v3921 = vtanh.pop %v3913
        %v3922 = vtanh.pop %v3914
        %v3923 = vtanh.pop %v3915
        %3932 = vrot.lane.b32.xlu0 %v3916, 32
        %v3933 = vpop.permute.xlu0 %3932
        %3934 = vrot.lane.b32.xlu0 %v3917, 32
        %v3935 = vpop.permute.xlu0 %3934
        %3936 = vrot.lane.b32.xlu0 %v3918, 32
        %v3937 = vpop.permute.xlu0 %3936
        %3938 = vrot.lane.b32.xlu0 %v3919, 32
        %v3939 = vpop.permute.xlu0 %3938
        %3940 = vrot.lane.b32.xlu0 %v3920, 32
        %v3941 = vpop.permute.xlu0 %3940
        %3942 = vrot.lane.b32.xlu0 %v3921, 32
        %v3943 = vpop.permute.xlu0 %3942
        %3944 = vrot.lane.b32.xlu0 %v3922, 32
        %v3945 = vpop.permute.xlu0 %3944
        %3946 = vrot.lane.b32.xlu0 %v3923, 32
        %v3947 = vpop.permute.xlu0 %3946
        %v3956 = vmul.f32 %v3805, %v3933
        %v3957 = vmul.f32 %v3807, %v3935
        %v3958 = vmul.f32 %v3809, %v3937
        %v3959 = vmul.f32 %v3811, %v3939
        %v3960 = vmul.f32 %v3813, %v3941
        %v3961 = vmul.f32 %v3815, %v3943
        %v3962 = vmul.f32 %v3817, %v3945
        %v3963 = vmul.f32 %v3819, %v3947
        %3972 = vrot.lane.b32.xlu0 %v3956, 64
        %v3973 = vpop.permute.xlu0 %3972
        %3974 = vrot.lane.b32.xlu0 %v3957, 64
        %v3975 = vpop.permute.xlu0 %3974
        %3976 = vrot.lane.b32.xlu0 %v3958, 64
        %v3977 = vpop.permute.xlu0 %3976
        %3978 = vrot.lane.b32.xlu0 %v3959, 64
        %v3979 = vpop.permute.xlu0 %3978
        %3980 = vrot.lane.b32.xlu0 %v3960, 64
        %v3981 = vpop.permute.xlu0 %3980
        %3982 = vrot.lane.b32.xlu0 %v3961, 64
        %v3983 = vpop.permute.xlu0 %3982
        %3984 = vrot.lane.b32.xlu0 %v3962, 64
        %v3985 = vpop.permute.xlu0 %3984
        %3986 = vrot.lane.b32.xlu0 %v3963, 64
        %v3987 = vpop.permute.xlu0 %3986
        %3996 = vst.msk [vmem:[#allocation3] sm:$0xff] %vm1037, %v3973
        %3997 = vst.msk [vmem:[#allocation3 + $0x8] sm:$0xff] %vm1037, %v3975
        %3998 = vst.msk [vmem:[#allocation3 + $0x10] sm:$0xff] %vm1037, %v3977
        %3999 = vst.msk [vmem:[#allocation3 + $0x18] sm:$0xff] %vm1037, %v3979
        %4000 = vst.msk [vmem:[#allocation3 + $0x20] sm:$0xff] %vm1037, %v3981
        %4001 = vst.msk [vmem:[#allocation3 + $0x28] sm:$0xff] %vm1037, %v3983
        %4002 = vst.msk [vmem:[#allocation3 + $0x30] sm:$0xff] %vm1037, %v3985
        %4003 = vst.msk [vmem:[#allocation3 + $0x38] sm:$0xff] %vm1037, %v3987
        %v4004 = vld [vmem:[#allocation2 + $0x40] sm:$0xff]
        %v4005 = vld [vmem:[#allocation2 + $0x48] sm:$0xff]
        %v4006 = vld [vmem:[#allocation2 + $0x50] sm:$0xff]
        %v4007 = vld [vmem:[#allocation2 + $0x58] sm:$0xff]
        %v4008 = vld [vmem:[#allocation2 + $0x60] sm:$0xff]
        %v4009 = vld [vmem:[#allocation2 + $0x68] sm:$0xff]
        %v4010 = vld [vmem:[#allocation2 + $0x70] sm:$0xff]
        %v4011 = vld [vmem:[#allocation2 + $0x78] sm:$0xff]
        %v4012 = vsel %vm1037, %v3973, 0
        %v4014 = vsel %vm1037, %v3975, 0
        %v4016 = vsel %vm1037, %v3977, 0
        %v4018 = vsel %vm1037, %v3979, 0
        %v4020 = vsel %vm1037, %v3981, 0
        %v4022 = vsel %vm1037, %v3983, 0
        %v4024 = vsel %vm1037, %v3985, 0
        %v4026 = vsel %vm1037, %v3987, 0
        %4028 = vmatprep.subr.mxu0 0.0
        %4029 = vmatpush1.msra.mxu0 %v3647
        %4030 = vmatprep.subr.mxu0 0.0
        %4031 = vmatpush1.msra.mxu0 %v3648
        %4032 = vmatprep.subr.mxu0 0.0
        %4033 = vmatpush1.msra.mxu0 %v3649
        %4034 = vmatprep.subr.mxu0 0.0
        %4035 = vmatpush1.msra.mxu0 %v3650
        %4036 = vmatprep.subr.mxu0 0.0
        %4037 = vmatpush1.msra.mxu0 0.0
        %4038 = vmatprep.subr.mxu0 0.0
        %4039 = vmatpush1.msra.mxu0 0.0
        %4040 = vmatprep.subr.mxu0 0.0
        %4041 = vmatpush1.msra.mxu0 0.0
        %4042 = vmatprep.subr.mxu0 0.0
        %4043 = vmatpush1.msra.mxu0 0.0
        %4044 = vmatprep.subr.mxu0 0.0
        %4045 = vmatpush1.msra.mxu0 0.0
        %4046 = vmatprep.subr.mxu0 0.0
        %4047 = vmatpush1.msra.mxu0 0.0
        %4048 = vmatprep.subr.mxu0 0.0
        %4049 = vmatpush1.msra.mxu0 0.0
        %4050 = vmatprep.subr.mxu0 0.0
        %4051 = vmatpush1.msra.mxu0 0.0
        %4052 = vmatprep.subr.mxu0 0.0
        %4053 = vmatpush1.msra.mxu0 0.0
        %4054 = vmatprep.subr.mxu0 0.0
        %4055 = vmatpush1.msra.mxu0 0.0
        %4056 = vmatprep.subr.mxu0 0.0
        %4057 = vmatpush1.msra.mxu0 0.0
        %4058 = vmatprep.subr.mxu0 0.0
        %4059 = vmatpush1.msra.mxu0 0.0
        %4060 = vmatprep.subr.mxu0 0.0
        %4061 = vmatpush1.msra.mxu0 0.0
        %4062 = vmatprep.subr.mxu0 0.0
        %4063 = vmatpush1.msra.mxu0 0.0
        %4064 = vmatprep.subr.mxu0 0.0
        %4065 = vmatpush1.msra.mxu0 0.0
        %4066 = vmatprep.subr.mxu0 0.0
        %4067 = vmatpush1.msra.mxu0 0.0
        %4068 = vmatprep.subr.mxu0 0.0
        %4069 = vmatpush1.msra.mxu0 0.0
        %4070 = vmatprep.subr.mxu0 0.0
        %4071 = vmatpush1.msra.mxu0 0.0
        %4072 = vmatprep.subr.mxu0 0.0
        %4073 = vmatpush1.msra.mxu0 0.0
        %4074 = vmatprep.subr.mxu0 0.0
        %4075 = vmatpush1.msra.mxu0 0.0
        %4076 = vmatprep.subr.mxu0 0.0
        %4077 = vmatpush1.msra.mxu0 0.0
        %4078 = vmatprep.subr.mxu0 0.0
        %4079 = vmatpush1.msra.mxu0 0.0
        %4080 = vmatprep.subr.mxu0 0.0
        %4081 = vmatpush1.msra.mxu0 0.0
        %4082 = vmatprep.subr.mxu0 0.0
        %4083 = vmatpush1.msra.mxu0 0.0
        %4084 = vmatprep.subr.mxu0 0.0
        %4085 = vmatpush1.msra.mxu0 0.0
        %4086 = vmatprep.subr.mxu0 0.0
        %4087 = vmatpush1.msra.mxu0 0.0
        %4088 = vmatprep.subr.mxu0 0.0
        %4089 = vmatpush1.msra.mxu0 0.0
        %4090 = vmatprep.subr.mxu0 0.0
        %4091 = vmatpush1.msra.mxu0 0.0
        %4092 = vmatprep.mubr.f32.mxu0 0.0
        %4093 = vmatmul.mubr.f32.gmra.mrb[0].mxu0 %v4012
        %v4094 = vpop.f32.mrb[0].mxu0
        %v4095 = vadd.f32 0.0, %v4094
        %v4096 = vpop.f32.mrb[0].mxu0
        %4097 = vmatprep.mubr.f32.mxu0 0.0
        %4098 = vmatmul.mubr.f32.gmra.mrb[0].mxu0 %v4014
        %v4099 = vpop.f32.mrb[0].mxu0
        %v4100 = vadd.f32 0.0, %v4099
        %v4101 = vpop.f32.mrb[0].mxu0
        %4102 = vmatprep.mubr.f32.mxu0 0.0
        %4103 = vmatmul.mubr.f32.gmra.mrb[0].mxu0 %v4016
        %v4104 = vpop.f32.mrb[0].mxu0
        %v4105 = vadd.f32 0.0, %v4104
        %v4106 = vpop.f32.mrb[0].mxu0
        %4107 = vmatprep.mubr.f32.mxu0 0.0
        %4108 = vmatmul.mubr.f32.gmra.mrb[0].mxu0 %v4018
        %v4109 = vpop.f32.mrb[0].mxu0
        %v4110 = vadd.f32 0.0, %v4109
        %v4111 = vpop.f32.mrb[0].mxu0
        %4112 = vmatprep.mubr.f32.mxu0 0.0
        %4113 = vmatmul.mubr.f32.gmra.mrb[0].mxu0 %v4020
        %v4114 = vpop.f32.mrb[0].mxu0
        %v4115 = vadd.f32 0.0, %v4114
        %v4116 = vpop.f32.mrb[0].mxu0
        %4117 = vmatprep.mubr.f32.mxu0 0.0
        %4118 = vmatmul.mubr.f32.gmra.mrb[0].mxu0 %v4022
        %v4119 = vpop.f32.mrb[0].mxu0
        %v4120 = vadd.f32 0.0, %v4119
        %v4121 = vpop.f32.mrb[0].mxu0
        %4122 = vmatprep.mubr.f32.mxu0 0.0
        %4123 = vmatmul.mubr.f32.gmra.mrb[0].mxu0 %v4024
        %v4124 = vpop.f32.mrb[0].mxu0
        %v4125 = vadd.f32 0.0, %v4124
        %v4126 = vpop.f32.mrb[0].mxu0
        %4127 = vmatprep.mubr.f32.mxu0 0.0
        %4128 = vmatmul.mubr.f32.gmra.mrb[0].mxu0 %v4026
        %v4129 = vpop.f32.mrb[0].mxu0
        %v4130 = vadd.f32 0.0, %v4129
        %v4131 = vpop.f32.mrb[0].mxu0
        %4132 = vdwg.mxu0
        %v4133 = vadd.f32 %v4004, %v4095
        %v4134 = vadd.f32 %v4005, %v4100
        %v4135 = vadd.f32 %v4006, %v4105
        %v4136 = vadd.f32 %v4007, %v4110
        %v4137 = vadd.f32 %v4008, %v4115
        %v4138 = vadd.f32 %v4009, %v4120
        %v4139 = vadd.f32 %v4010, %v4125
        %v4140 = vadd.f32 %v4011, %v4130
        %v4141 = vxor.u32 %v4133, 2147483648
        %v4142 = vxor.u32 %v4134, 2147483648
        %v4143 = vxor.u32 %v4135, 2147483648
        %v4144 = vxor.u32 %v4136, 2147483648
        %v4145 = vxor.u32 %v4137, 2147483648
        %v4146 = vxor.u32 %v4138, 2147483648
        %v4147 = vxor.u32 %v4139, 2147483648
        %v4148 = vxor.u32 %v4140, 2147483648
        %v4149 = vmul.f32 %v4141, 1.442695
        %v4150 = vpow.pop %v4149
        %v4151 = vmul.f32 %v4142, 1.442695
        %v4152 = vpow.pop %v4151
        %v4153 = vmul.f32 %v4143, 1.442695
        %v4154 = vpow.pop %v4153
        %v4155 = vmul.f32 %v4144, 1.442695
        %v4156 = vpow.pop %v4155
        %v4157 = vmul.f32 %v4145, 1.442695
        %v4158 = vpow.pop %v4157
        %v4159 = vmul.f32 %v4146, 1.442695
        %v4160 = vpow.pop %v4159
        %v4161 = vmul.f32 %v4147, 1.442695
        %v4162 = vpow.pop %v4161
        %v4163 = vmul.f32 %v4148, 1.442695
        %v4164 = vpow.pop %v4163
        %v4165 = vadd.f32 %v4150, 1.0
        %v4166 = vadd.f32 %v4152, 1.0
        %v4167 = vadd.f32 %v4154, 1.0
        %v4168 = vadd.f32 %v4156, 1.0
        %v4169 = vadd.f32 %v4158, 1.0
        %v4170 = vadd.f32 %v4160, 1.0
        %v4171 = vadd.f32 %v4162, 1.0
        %v4172 = vadd.f32 %v4164, 1.0
        %v4173 = vrcp.pop %v4165
        %v4174 = vmul.f32 1.0, %v4173
        %v4175 = vrcp.pop %v4166
        %v4176 = vmul.f32 1.0, %v4175
        %v4177 = vrcp.pop %v4167
        %v4178 = vmul.f32 1.0, %v4177
        %v4179 = vrcp.pop %v4168
        %v4180 = vmul.f32 1.0, %v4179
        %v4181 = vrcp.pop %v4169
        %v4182 = vmul.f32 1.0, %v4181
        %v4183 = vrcp.pop %v4170
        %v4184 = vmul.f32 1.0, %v4183
        %v4185 = vrcp.pop %v4171
        %v4186 = vmul.f32 1.0, %v4185
        %v4187 = vrcp.pop %v4172
        %v4188 = vmul.f32 1.0, %v4187
        %v4189 = vtanh.pop %v4133
        %v4190 = vtanh.pop %v4134
        %v4191 = vtanh.pop %v4135
        %v4192 = vtanh.pop %v4136
        %v4193 = vtanh.pop %v4137
        %v4194 = vtanh.pop %v4138
        %v4195 = vtanh.pop %v4139
        %v4196 = vtanh.pop %v4140
        %v4197 = vmul.f32 %v4174, %v3908
        %v4198 = vmul.f32 %v4176, %v3909
        %v4199 = vmul.f32 %v4178, %v3910
        %v4200 = vmul.f32 %v4180, %v3911
        %v4201 = vmul.f32 %v4182, %v3912
        %v4202 = vmul.f32 %v4184, %v3913
        %v4203 = vmul.f32 %v4186, %v3914
        %v4204 = vmul.f32 %v4188, %v3915
        %4213 = vrot.lane.b32.xlu0 %v4189, 32
        %v4214 = vpop.permute.xlu0 %4213
        %4215 = vrot.lane.b32.xlu0 %v4190, 32
        %v4216 = vpop.permute.xlu0 %4215
        %4217 = vrot.lane.b32.xlu0 %v4191, 32
        %v4218 = vpop.permute.xlu0 %4217
        %4219 = vrot.lane.b32.xlu0 %v4192, 32
        %v4220 = vpop.permute.xlu0 %4219
        %4221 = vrot.lane.b32.xlu0 %v4193, 32
        %v4222 = vpop.permute.xlu0 %4221
        %4223 = vrot.lane.b32.xlu0 %v4194, 32
        %v4224 = vpop.permute.xlu0 %4223
        %4225 = vrot.lane.b32.xlu0 %v4195, 32
        %v4226 = vpop.permute.xlu0 %4225
        %4227 = vrot.lane.b32.xlu0 %v4196, 32
        %v4228 = vpop.permute.xlu0 %4227
        %v4237 = vmul.f32 %v4174, %v4214
        %v4238 = vmul.f32 %v4176, %v4216
        %v4239 = vmul.f32 %v4178, %v4218
        %v4240 = vmul.f32 %v4180, %v4220
        %v4241 = vmul.f32 %v4182, %v4222
        %v4242 = vmul.f32 %v4184, %v4224
        %v4243 = vmul.f32 %v4186, %v4226
        %v4244 = vmul.f32 %v4188, %v4228
        %4253 = vrot.lane.b32.xlu0 %v4237, 32
        %v4254 = vpop.permute.xlu0 %4253
        %4255 = vrot.lane.b32.xlu0 %v4238, 32
        %v4256 = vpop.permute.xlu0 %4255
        %4257 = vrot.lane.b32.xlu0 %v4239, 32
        %v4258 = vpop.permute.xlu0 %4257
        %4259 = vrot.lane.b32.xlu0 %v4240, 32
        %v4260 = vpop.permute.xlu0 %4259
        %4261 = vrot.lane.b32.xlu0 %v4241, 32
        %v4262 = vpop.permute.xlu0 %4261
        %4263 = vrot.lane.b32.xlu0 %v4242, 32
        %v4264 = vpop.permute.xlu0 %4263
        %4265 = vrot.lane.b32.xlu0 %v4243, 32
        %v4266 = vpop.permute.xlu0 %4265
        %4267 = vrot.lane.b32.xlu0 %v4244, 32
        %v4268 = vpop.permute.xlu0 %4267
        %v4277 = vadd.f32 %v4197, %v4254
        %v4278 = vadd.f32 %v4198, %v4256
        %v4279 = vadd.f32 %v4199, %v4258
        %v4280 = vadd.f32 %v4200, %v4260
        %v4281 = vadd.f32 %v4201, %v4262
        %v4282 = vadd.f32 %v4202, %v4264
        %v4283 = vadd.f32 %v4203, %v4266
        %v4284 = vadd.f32 %v4204, %v4268
        %v4285 = vtanh.pop %v4277
        %v4286 = vtanh.pop %v4278
        %v4287 = vtanh.pop %v4279
        %v4288 = vtanh.pop %v4280
        %v4289 = vtanh.pop %v4281
        %v4290 = vtanh.pop %v4282
        %v4291 = vtanh.pop %v4283
        %v4292 = vtanh.pop %v4284
        %4301 = vrot.lane.b32.xlu0 %v4285, 32
        %v4302 = vpop.permute.xlu0 %4301
        %4303 = vrot.lane.b32.xlu0 %v4286, 32
        %v4304 = vpop.permute.xlu0 %4303
        %4305 = vrot.lane.b32.xlu0 %v4287, 32
        %v4306 = vpop.permute.xlu0 %4305
        %4307 = vrot.lane.b32.xlu0 %v4288, 32
        %v4308 = vpop.permute.xlu0 %4307
        %4309 = vrot.lane.b32.xlu0 %v4289, 32
        %v4310 = vpop.permute.xlu0 %4309
        %4311 = vrot.lane.b32.xlu0 %v4290, 32
        %v4312 = vpop.permute.xlu0 %4311
        %4313 = vrot.lane.b32.xlu0 %v4291, 32
        %v4314 = vpop.permute.xlu0 %4313
        %4315 = vrot.lane.b32.xlu0 %v4292, 32
        %v4316 = vpop.permute.xlu0 %4315
        %v4325 = vmul.f32 %v4174, %v4302
        %v4326 = vmul.f32 %v4176, %v4304
        %v4327 = vmul.f32 %v4178, %v4306
        %v4328 = vmul.f32 %v4180, %v4308
        %v4329 = vmul.f32 %v4182, %v4310
        %v4330 = vmul.f32 %v4184, %v4312
        %v4331 = vmul.f32 %v4186, %v4314
        %v4332 = vmul.f32 %v4188, %v4316
        %4341 = vrot.lane.b32.xlu0 %v4325, 64
        %v4342 = vpop.permute.xlu0 %4341
        %4343 = vrot.lane.b32.xlu0 %v4326, 64
        %v4344 = vpop.permute.xlu0 %4343
        %4345 = vrot.lane.b32.xlu0 %v4327, 64
        %v4346 = vpop.permute.xlu0 %4345
        %4347 = vrot.lane.b32.xlu0 %v4328, 64
        %v4348 = vpop.permute.xlu0 %4347
        %4349 = vrot.lane.b32.xlu0 %v4329, 64
        %v4350 = vpop.permute.xlu0 %4349
        %4351 = vrot.lane.b32.xlu0 %v4330, 64
        %v4352 = vpop.permute.xlu0 %4351
        %4353 = vrot.lane.b32.xlu0 %v4331, 64
        %v4354 = vpop.permute.xlu0 %4353
        %4355 = vrot.lane.b32.xlu0 %v4332, 64
        %v4356 = vpop.permute.xlu0 %4355
        %4365 = vst.msk [vmem:[#allocation3 + $0x40] sm:$0xff] %vm1037, %v4342
        %4366 = vst.msk [vmem:[#allocation3 + $0x48] sm:$0xff] %vm1037, %v4344
        %4367 = vst.msk [vmem:[#allocation3 + $0x50] sm:$0xff] %vm1037, %v4346
        %4368 = vst.msk [vmem:[#allocation3 + $0x58] sm:$0xff] %vm1037, %v4348
        %4369 = vst.msk [vmem:[#allocation3 + $0x60] sm:$0xff] %vm1037, %v4350
        %4370 = vst.msk [vmem:[#allocation3 + $0x68] sm:$0xff] %vm1037, %v4352
        %4371 = vst.msk [vmem:[#allocation3 + $0x70] sm:$0xff] %vm1037, %v4354
        %4372 = vst.msk [vmem:[#allocation3 + $0x78] sm:$0xff] %vm1037, %v4356
        %v4373 = vld [vmem:[#allocation2 + $0x80] sm:$0xff]
        %v4374 = vld [vmem:[#allocation2 + $0x88] sm:$0xff]
        %v4375 = vld [vmem:[#allocation2 + $0x90] sm:$0xff]
        %v4376 = vld [vmem:[#allocation2 + $0x98] sm:$0xff]
        %v4377 = vld [vmem:[#allocation2 + $0xa0] sm:$0xff]
        %v4378 = vld [vmem:[#allocation2 + $0xa8] sm:$0xff]
        %v4379 = vld [vmem:[#allocation2 + $0xb0] sm:$0xff]
        %v4380 = vld [vmem:[#allocation2 + $0xb8] sm:$0xff]
        %v4381 = vsel %vm1037, %v4342, 0
        %v4383 = vsel %vm1037, %v4344, 0
        %v4385 = vsel %vm1037, %v4346, 0
        %v4387 = vsel %vm1037, %v4348, 0
        %v4389 = vsel %vm1037, %v4350, 0
        %v4391 = vsel %vm1037, %v4352, 0
        %v4393 = vsel %vm1037, %v4354, 0
        %v4395 = vsel %vm1037, %v4356, 0
        %4397 = vmatprep.subr.mxu0 0.0
        %4398 = vmatpush1.msra.mxu0 %v3647
        %4399 = vmatprep.subr.mxu0 0.0
        %4400 = vmatpush1.msra.mxu0 %v3648
        %4401 = vmatprep.subr.mxu0 0.0
        %4402 = vmatpush1.msra.mxu0 %v3649
        %4403 = vmatprep.subr.mxu0 0.0
        %4404 = vmatpush1.msra.mxu0 %v3650
        %4405 = vmatprep.subr.mxu0 0.0
        %4406 = vmatpush1.msra.mxu0 0.0
        %4407 = vmatprep.subr.mxu0 0.0
        %4408 = vmatpush1.msra.mxu0 0.0
        %4409 = vmatprep.subr.mxu0 0.0
        %4410 = vmatpush1.msra.mxu0 0.0
        %4411 = vmatprep.subr.mxu0 0.0
        %4412 = vmatpush1.msra.mxu0 0.0
        %4413 = vmatprep.subr.mxu0 0.0
        %4414 = vmatpush1.msra.mxu0 0.0
        %4415 = vmatprep.subr.mxu0 0.0
        %4416 = vmatpush1.msra.mxu0 0.0
        %4417 = vmatprep.subr.mxu0 0.0
        %4418 = vmatpush1.msra.mxu0 0.0
        %4419 = vmatprep.subr.mxu0 0.0
        %4420 = vmatpush1.msra.mxu0 0.0
        %4421 = vmatprep.subr.mxu0 0.0
        %4422 = vmatpush1.msra.mxu0 0.0
        %4423 = vmatprep.subr.mxu0 0.0
        %4424 = vmatpush1.msra.mxu0 0.0
        %4425 = vmatprep.subr.mxu0 0.0
        %4426 = vmatpush1.msra.mxu0 0.0
        %4427 = vmatprep.subr.mxu0 0.0
        %4428 = vmatpush1.msra.mxu0 0.0
        %4429 = vmatprep.subr.mxu0 0.0
        %4430 = vmatpush1.msra.mxu0 0.0
        %4431 = vmatprep.subr.mxu0 0.0
        %4432 = vmatpush1.msra.mxu0 0.0
        %4433 = vmatprep.subr.mxu0 0.0
        %4434 = vmatpush1.msra.mxu0 0.0
        %4435 = vmatprep.subr.mxu0 0.0
        %4436 = vmatpush1.msra.mxu0 0.0
        %4437 = vmatprep.subr.mxu0 0.0
        %4438 = vmatpush1.msra.mxu0 0.0
        %4439 = vmatprep.subr.mxu0 0.0
        %4440 = vmatpush1.msra.mxu0 0.0
        %4441 = vmatprep.subr.mxu0 0.0
        %4442 = vmatpush1.msra.mxu0 0.0
        %4443 = vmatprep.subr.mxu0 0.0
        %4444 = vmatpush1.msra.mxu0 0.0
        %4445 = vmatprep.subr.mxu0 0.0
        %4446 = vmatpush1.msra.mxu0 0.0
        %4447 = vmatprep.subr.mxu0 0.0
        %4448 = vmatpush1.msra.mxu0 0.0
        %4449 = vmatprep.subr.mxu0 0.0
        %4450 = vmatpush1.msra.mxu0 0.0
        %4451 = vmatprep.subr.mxu0 0.0
        %4452 = vmatpush1.msra.mxu0 0.0
        %4453 = vmatprep.subr.mxu0 0.0
        %4454 = vmatpush1.msra.mxu0 0.0
        %4455 = vmatprep.subr.mxu0 0.0
        %4456 = vmatpush1.msra.mxu0 0.0
        %4457 = vmatprep.subr.mxu0 0.0
        %4458 = vmatpush1.msra.mxu0 0.0
        %4459 = vmatprep.subr.mxu0 0.0
        %4460 = vmatpush1.msra.mxu0 0.0
        %4461 = vmatprep.mubr.f32.mxu0 0.0
        %4462 = vmatmul.mubr.f32.gmra.mrb[0].mxu0 %v4381
        %v4463 = vpop.f32.mrb[0].mxu0
        %v4464 = vadd.f32 0.0, %v4463
        %v4465 = vpop.f32.mrb[0].mxu0
        %4466 = vmatprep.mubr.f32.mxu0 0.0
        %4467 = vmatmul.mubr.f32.gmra.mrb[0].mxu0 %v4383
        %v4468 = vpop.f32.mrb[0].mxu0
        %v4469 = vadd.f32 0.0, %v4468
        %v4470 = vpop.f32.mrb[0].mxu0
        %4471 = vmatprep.mubr.f32.mxu0 0.0
        %4472 = vmatmul.mubr.f32.gmra.mrb[0].mxu0 %v4385
        %v4473 = vpop.f32.mrb[0].mxu0
        %v4474 = vadd.f32 0.0, %v4473
        %v4475 = vpop.f32.mrb[0].mxu0
        %4476 = vmatprep.mubr.f32.mxu0 0.0
        %4477 = vmatmul.mubr.f32.gmra.mrb[0].mxu0 %v4387
        %v4478 = vpop.f32.mrb[0].mxu0
        %v4479 = vadd.f32 0.0, %v4478
        %v4480 = vpop.f32.mrb[0].mxu0
        %4481 = vmatprep.mubr.f32.mxu0 0.0
        %4482 = vmatmul.mubr.f32.gmra.mrb[0].mxu0 %v4389
        %v4483 = vpop.f32.mrb[0].mxu0
        %v4484 = vadd.f32 0.0, %v4483
        %v4485 = vpop.f32.mrb[0].mxu0
        %4486 = vmatprep.mubr.f32.mxu0 0.0
        %4487 = vmatmul.mubr.f32.gmra.mrb[0].mxu0 %v4391
        %v4488 = vpop.f32.mrb[0].mxu0
        %v4489 = vadd.f32 0.0, %v4488
        %v4490 = vpop.f32.mrb[0].mxu0
        %4491 = vmatprep.mubr.f32.mxu0 0.0
        %4492 = vmatmul.mubr.f32.gmra.mrb[0].mxu0 %v4393
        %v4493 = vpop.f32.mrb[0].mxu0
        %v4494 = vadd.f32 0.0, %v4493
        %v4495 = vpop.f32.mrb[0].mxu0
        %4496 = vmatprep.mubr.f32.mxu0 0.0
        %4497 = vmatmul.mubr.f32.gmra.mrb[0].mxu0 %v4395
        %v4498 = vpop.f32.mrb[0].mxu0
        %v4499 = vadd.f32 0.0, %v4498
        %v4500 = vpop.f32.mrb[0].mxu0
        %4501 = vdwg.mxu0
        %v4502 = vadd.f32 %v4373, %v4464
        %v4503 = vadd.f32 %v4374, %v4469
        %v4504 = vadd.f32 %v4375, %v4474
        %v4505 = vadd.f32 %v4376, %v4479
        %v4506 = vadd.f32 %v4377, %v4484
        %v4507 = vadd.f32 %v4378, %v4489
        %v4508 = vadd.f32 %v4379, %v4494
        %v4509 = vadd.f32 %v4380, %v4499
        %v4510 = vxor.u32 %v4502, 2147483648
        %v4511 = vxor.u32 %v4503, 2147483648
        %v4512 = vxor.u32 %v4504, 2147483648
        %v4513 = vxor.u32 %v4505, 2147483648
        %v4514 = vxor.u32 %v4506, 2147483648
        %v4515 = vxor.u32 %v4507, 2147483648
        %v4516 = vxor.u32 %v4508, 2147483648
        %v4517 = vxor.u32 %v4509, 2147483648
        %v4518 = vmul.f32 %v4510, 1.442695
        %v4519 = vpow.pop %v4518
        %v4520 = vmul.f32 %v4511, 1.442695
        %v4521 = vpow.pop %v4520
        %v4522 = vmul.f32 %v4512, 1.442695
        %v4523 = vpow.pop %v4522
        %v4524 = vmul.f32 %v4513, 1.442695
        %v4525 = vpow.pop %v4524
        %v4526 = vmul.f32 %v4514, 1.442695
        %v4527 = vpow.pop %v4526
        %v4528 = vmul.f32 %v4515, 1.442695
        %v4529 = vpow.pop %v4528
        %v4530 = vmul.f32 %v4516, 1.442695
        %v4531 = vpow.pop %v4530
        %v4532 = vmul.f32 %v4517, 1.442695
        %v4533 = vpow.pop %v4532
        %v4534 = vadd.f32 %v4519, 1.0
        %v4535 = vadd.f32 %v4521, 1.0
        %v4536 = vadd.f32 %v4523, 1.0
        %v4537 = vadd.f32 %v4525, 1.0
        %v4538 = vadd.f32 %v4527, 1.0
        %v4539 = vadd.f32 %v4529, 1.0
        %v4540 = vadd.f32 %v4531, 1.0
        %v4541 = vadd.f32 %v4533, 1.0
        %v4542 = vrcp.pop %v4534
        %v4543 = vmul.f32 1.0, %v4542
        %v4544 = vrcp.pop %v4535
        %v4545 = vmul.f32 1.0, %v4544
        %v4546 = vrcp.pop %v4536
        %v4547 = vmul.f32 1.0, %v4546
        %v4548 = vrcp.pop %v4537
        %v4549 = vmul.f32 1.0, %v4548
        %v4550 = vrcp.pop %v4538
        %v4551 = vmul.f32 1.0, %v4550
        %v4552 = vrcp.pop %v4539
        %v4553 = vmul.f32 1.0, %v4552
        %v4554 = vrcp.pop %v4540
        %v4555 = vmul.f32 1.0, %v4554
        %v4556 = vrcp.pop %v4541
        %v4557 = vmul.f32 1.0, %v4556
        %v4558 = vtanh.pop %v4502
        %v4559 = vtanh.pop %v4503
        %v4560 = vtanh.pop %v4504
        %v4561 = vtanh.pop %v4505
        %v4562 = vtanh.pop %v4506
        %v4563 = vtanh.pop %v4507
        %v4564 = vtanh.pop %v4508
        %v4565 = vtanh.pop %v4509
        %v4566 = vmul.f32 %v4543, %v4277
        %v4567 = vmul.f32 %v4545, %v4278
        %v4568 = vmul.f32 %v4547, %v4279
        %v4569 = vmul.f32 %v4549, %v4280
        %v4570 = vmul.f32 %v4551, %v4281
        %v4571 = vmul.f32 %v4553, %v4282
        %v4572 = vmul.f32 %v4555, %v4283
        %v4573 = vmul.f32 %v4557, %v4284
        %4582 = vrot.lane.b32.xlu0 %v4558, 32
        %v4583 = vpop.permute.xlu0 %4582
        %4584 = vrot.lane.b32.xlu0 %v4559, 32
        %v4585 = vpop.permute.xlu0 %4584
        %4586 = vrot.lane.b32.xlu0 %v4560, 32
        %v4587 = vpop.permute.xlu0 %4586
        %4588 = vrot.lane.b32.xlu0 %v4561, 32
        %v4589 = vpop.permute.xlu0 %4588
        %4590 = vrot.lane.b32.xlu0 %v4562, 32
        %v4591 = vpop.permute.xlu0 %4590
        %4592 = vrot.lane.b32.xlu0 %v4563, 32
        %v4593 = vpop.permute.xlu0 %4592
        %4594 = vrot.lane.b32.xlu0 %v4564, 32
        %v4595 = vpop.permute.xlu0 %4594
        %4596 = vrot.lane.b32.xlu0 %v4565, 32
        %v4597 = vpop.permute.xlu0 %4596
        %v4606 = vmul.f32 %v4543, %v4583
        %v4607 = vmul.f32 %v4545, %v4585
        %v4608 = vmul.f32 %v4547, %v4587
        %v4609 = vmul.f32 %v4549, %v4589
        %v4610 = vmul.f32 %v4551, %v4591
        %v4611 = vmul.f32 %v4553, %v4593
        %v4612 = vmul.f32 %v4555, %v4595
        %v4613 = vmul.f32 %v4557, %v4597
        %4622 = vrot.lane.b32.xlu0 %v4606, 32
        %v4623 = vpop.permute.xlu0 %4622
        %4624 = vrot.lane.b32.xlu0 %v4607, 32
        %v4625 = vpop.permute.xlu0 %4624
        %4626 = vrot.lane.b32.xlu0 %v4608, 32
        %v4627 = vpop.permute.xlu0 %4626
        %4628 = vrot.lane.b32.xlu0 %v4609, 32
        %v4629 = vpop.permute.xlu0 %4628
        %4630 = vrot.lane.b32.xlu0 %v4610, 32
        %v4631 = vpop.permute.xlu0 %4630
        %4632 = vrot.lane.b32.xlu0 %v4611, 32
        %v4633 = vpop.permute.xlu0 %4632
        %4634 = vrot.lane.b32.xlu0 %v4612, 32
        %v4635 = vpop.permute.xlu0 %4634
        %4636 = vrot.lane.b32.xlu0 %v4613, 32
        %v4637 = vpop.permute.xlu0 %4636
        %v4646 = vadd.f32 %v4566, %v4623
        %v4647 = vadd.f32 %v4567, %v4625
        %v4648 = vadd.f32 %v4568, %v4627
        %v4649 = vadd.f32 %v4569, %v4629
        %v4650 = vadd.f32 %v4570, %v4631
        %v4651 = vadd.f32 %v4571, %v4633
        %v4652 = vadd.f32 %v4572, %v4635
        %v4653 = vadd.f32 %v4573, %v4637
        %v4654 = vtanh.pop %v4646
        %v4655 = vtanh.pop %v4647
        %v4656 = vtanh.pop %v4648
        %v4657 = vtanh.pop %v4649
        %v4658 = vtanh.pop %v4650
        %v4659 = vtanh.pop %v4651
        %v4660 = vtanh.pop %v4652
        %v4661 = vtanh.pop %v4653
        %4670 = vrot.lane.b32.xlu0 %v4654, 32
        %v4671 = vpop.permute.xlu0 %4670
        %4672 = vrot.lane.b32.xlu0 %v4655, 32
        %v4673 = vpop.permute.xlu0 %4672
        %4674 = vrot.lane.b32.xlu0 %v4656, 32
        %v4675 = vpop.permute.xlu0 %4674
        %4676 = vrot.lane.b32.xlu0 %v4657, 32
        %v4677 = vpop.permute.xlu0 %4676
        %4678 = vrot.lane.b32.xlu0 %v4658, 32
        %v4679 = vpop.permute.xlu0 %4678
        %4680 = vrot.lane.b32.xlu0 %v4659, 32
        %v4681 = vpop.permute.xlu0 %4680
        %4682 = vrot.lane.b32.xlu0 %v4660, 32
        %v4683 = vpop.permute.xlu0 %4682
        %4684 = vrot.lane.b32.xlu0 %v4661, 32
        %v4685 = vpop.permute.xlu0 %4684
        %v4694 = vmul.f32 %v4543, %v4671
        %v4695 = vmul.f32 %v4545, %v4673
        %v4696 = vmul.f32 %v4547, %v4675
        %v4697 = vmul.f32 %v4549, %v4677
        %v4698 = vmul.f32 %v4551, %v4679
        %v4699 = vmul.f32 %v4553, %v4681
        %v4700 = vmul.f32 %v4555, %v4683
        %v4701 = vmul.f32 %v4557, %v4685
        %4710 = vrot.lane.b32.xlu0 %v4694, 64
        %v4711 = vpop.permute.xlu0 %4710
        %4712 = vrot.lane.b32.xlu0 %v4695, 64
        %v4713 = vpop.permute.xlu0 %4712
        %4714 = vrot.lane.b32.xlu0 %v4696, 64
        %v4715 = vpop.permute.xlu0 %4714
        %4716 = vrot.lane.b32.xlu0 %v4697, 64
        %v4717 = vpop.permute.xlu0 %4716
        %4718 = vrot.lane.b32.xlu0 %v4698, 64
        %v4719 = vpop.permute.xlu0 %4718
        %4720 = vrot.lane.b32.xlu0 %v4699, 64
        %v4721 = vpop.permute.xlu0 %4720
        %4722 = vrot.lane.b32.xlu0 %v4700, 64
        %v4723 = vpop.permute.xlu0 %4722
        %4724 = vrot.lane.b32.xlu0 %v4701, 64
        %v4725 = vpop.permute.xlu0 %4724
        %4734 = vst.msk [vmem:[#allocation3 + $0x80] sm:$0xff] %vm1037, %v4711
        %4735 = vst.msk [vmem:[#allocation3 + $0x88] sm:$0xff] %vm1037, %v4713
        %4736 = vst.msk [vmem:[#allocation3 + $0x90] sm:$0xff] %vm1037, %v4715
        %4737 = vst.msk [vmem:[#allocation3 + $0x98] sm:$0xff] %vm1037, %v4717
        %4738 = vst.msk [vmem:[#allocation3 + $0xa0] sm:$0xff] %vm1037, %v4719
        %4739 = vst.msk [vmem:[#allocation3 + $0xa8] sm:$0xff] %vm1037, %v4721
        %4740 = vst.msk [vmem:[#allocation3 + $0xb0] sm:$0xff] %vm1037, %v4723
        %4741 = vst.msk [vmem:[#allocation3 + $0xb8] sm:$0xff] %vm1037, %v4725
        %v4742 = vld [vmem:[#allocation2 + $0xc0] sm:$0xff]
        %v4743 = vld [vmem:[#allocation2 + $0xc8] sm:$0xff]
        %v4744 = vld [vmem:[#allocation2 + $0xd0] sm:$0xff]
        %v4745 = vld [vmem:[#allocation2 + $0xd8] sm:$0xff]
        %v4746 = vld [vmem:[#allocation2 + $0xe0] sm:$0xff]
        %v4747 = vld [vmem:[#allocation2 + $0xe8] sm:$0xff]
        %v4748 = vld [vmem:[#allocation2 + $0xf0] sm:$0xff]
        %v4749 = vld [vmem:[#allocation2 + $0xf8] sm:$0xff]
        %v4750 = vsel %vm1037, %v4711, 0
        %v4752 = vsel %vm1037, %v4713, 0
        %v4754 = vsel %vm1037, %v4715, 0
        %v4756 = vsel %vm1037, %v4717, 0
        %v4758 = vsel %vm1037, %v4719, 0
        %v4760 = vsel %vm1037, %v4721, 0
        %v4762 = vsel %vm1037, %v4723, 0
        %v4764 = vsel %vm1037, %v4725, 0
        %4766 = vmatprep.subr.mxu0 0.0
        %4767 = vmatpush1.msra.mxu0 %v3647
        %4768 = vmatprep.subr.mxu0 0.0
        %4769 = vmatpush1.msra.mxu0 %v3648
        %4770 = vmatprep.subr.mxu0 0.0
        %4771 = vmatpush1.msra.mxu0 %v3649
        %4772 = vmatprep.subr.mxu0 0.0
        %4773 = vmatpush1.msra.mxu0 %v3650
        %4774 = vmatprep.subr.mxu0 0.0
        %4775 = vmatpush1.msra.mxu0 0.0
        %4776 = vmatprep.subr.mxu0 0.0
        %4777 = vmatpush1.msra.mxu0 0.0
        %4778 = vmatprep.subr.mxu0 0.0
        %4779 = vmatpush1.msra.mxu0 0.0
        %4780 = vmatprep.subr.mxu0 0.0
        %4781 = vmatpush1.msra.mxu0 0.0
        %4782 = vmatprep.subr.mxu0 0.0
        %4783 = vmatpush1.msra.mxu0 0.0
        %4784 = vmatprep.subr.mxu0 0.0
        %4785 = vmatpush1.msra.mxu0 0.0
        %4786 = vmatprep.subr.mxu0 0.0
        %4787 = vmatpush1.msra.mxu0 0.0
        %4788 = vmatprep.subr.mxu0 0.0
        %4789 = vmatpush1.msra.mxu0 0.0
        %4790 = vmatprep.subr.mxu0 0.0
        %4791 = vmatpush1.msra.mxu0 0.0
        %4792 = vmatprep.subr.mxu0 0.0
        %4793 = vmatpush1.msra.mxu0 0.0
        %4794 = vmatprep.subr.mxu0 0.0
        %4795 = vmatpush1.msra.mxu0 0.0
        %4796 = vmatprep.subr.mxu0 0.0
        %4797 = vmatpush1.msra.mxu0 0.0
        %4798 = vmatprep.subr.mxu0 0.0
        %4799 = vmatpush1.msra.mxu0 0.0
        %4800 = vmatprep.subr.mxu0 0.0
        %4801 = vmatpush1.msra.mxu0 0.0
        %4802 = vmatprep.subr.mxu0 0.0
        %4803 = vmatpush1.msra.mxu0 0.0
        %4804 = vmatprep.subr.mxu0 0.0
        %4805 = vmatpush1.msra.mxu0 0.0
        %4806 = vmatprep.subr.mxu0 0.0
        %4807 = vmatpush1.msra.mxu0 0.0
        %4808 = vmatprep.subr.mxu0 0.0
        %4809 = vmatpush1.msra.mxu0 0.0
        %4810 = vmatprep.subr.mxu0 0.0
        %4811 = vmatpush1.msra.mxu0 0.0
        %4812 = vmatprep.subr.mxu0 0.0
        %4813 = vmatpush1.msra.mxu0 0.0
        %4814 = vmatprep.subr.mxu0 0.0
        %4815 = vmatpush1.msra.mxu0 0.0
        %4816 = vmatprep.subr.mxu0 0.0
        %4817 = vmatpush1.msra.mxu0 0.0
        %4818 = vmatprep.subr.mxu0 0.0
        %4819 = vmatpush1.msra.mxu0 0.0
        %4820 = vmatprep.subr.mxu0 0.0
        %4821 = vmatpush1.msra.mxu0 0.0
        %4822 = vmatprep.subr.mxu0 0.0
        %4823 = vmatpush1.msra.mxu0 0.0
        %4824 = vmatprep.subr.mxu0 0.0
        %4825 = vmatpush1.msra.mxu0 0.0
        %4826 = vmatprep.subr.mxu0 0.0
        %4827 = vmatpush1.msra.mxu0 0.0
        %4828 = vmatprep.subr.mxu0 0.0
        %4829 = vmatpush1.msra.mxu0 0.0
        %4830 = vmatprep.mubr.f32.mxu0 0.0
        %4831 = vmatmul.mubr.f32.gmra.mrb[0].mxu0 %v4750
        %v4832 = vpop.f32.mrb[0].mxu0
        %v4833 = vadd.f32 0.0, %v4832
        %v4834 = vpop.f32.mrb[0].mxu0
        %4835 = vmatprep.mubr.f32.mxu0 0.0
        %4836 = vmatmul.mubr.f32.gmra.mrb[0].mxu0 %v4752
        %v4837 = vpop.f32.mrb[0].mxu0
        %v4838 = vadd.f32 0.0, %v4837
        %v4839 = vpop.f32.mrb[0].mxu0
        %4840 = vmatprep.mubr.f32.mxu0 0.0
        %4841 = vmatmul.mubr.f32.gmra.mrb[0].mxu0 %v4754
        %v4842 = vpop.f32.mrb[0].mxu0
        %v4843 = vadd.f32 0.0, %v4842
        %v4844 = vpop.f32.mrb[0].mxu0
        %4845 = vmatprep.mubr.f32.mxu0 0.0
        %4846 = vmatmul.mubr.f32.gmra.mrb[0].mxu0 %v4756
        %v4847 = vpop.f32.mrb[0].mxu0
        %v4848 = vadd.f32 0.0, %v4847
        %v4849 = vpop.f32.mrb[0].mxu0
        %4850 = vmatprep.mubr.f32.mxu0 0.0
        %4851 = vmatmul.mubr.f32.gmra.mrb[0].mxu0 %v4758
        %v4852 = vpop.f32.mrb[0].mxu0
        %v4853 = vadd.f32 0.0, %v4852
        %v4854 = vpop.f32.mrb[0].mxu0
        %4855 = vmatprep.mubr.f32.mxu0 0.0
        %4856 = vmatmul.mubr.f32.gmra.mrb[0].mxu0 %v4760
        %v4857 = vpop.f32.mrb[0].mxu0
        %v4858 = vadd.f32 0.0, %v4857
        %v4859 = vpop.f32.mrb[0].mxu0
        %4860 = vmatprep.mubr.f32.mxu0 0.0
        %4861 = vmatmul.mubr.f32.gmra.mrb[0].mxu0 %v4762
        %v4862 = vpop.f32.mrb[0].mxu0
        %v4863 = vadd.f32 0.0, %v4862
        %v4864 = vpop.f32.mrb[0].mxu0
        %4865 = vmatprep.mubr.f32.mxu0 0.0
        %4866 = vmatmul.mubr.f32.gmra.mrb[0].mxu0 %v4764
        %v4867 = vpop.f32.mrb[0].mxu0
        %v4868 = vadd.f32 0.0, %v4867
        %v4869 = vpop.f32.mrb[0].mxu0
        %4870 = vdwg.mxu0
        %v4871 = vadd.f32 %v4742, %v4833
        %v4872 = vadd.f32 %v4743, %v4838
        %v4873 = vadd.f32 %v4744, %v4843
        %v4874 = vadd.f32 %v4745, %v4848
        %v4875 = vadd.f32 %v4746, %v4853
        %v4876 = vadd.f32 %v4747, %v4858
        %v4877 = vadd.f32 %v4748, %v4863
        %v4878 = vadd.f32 %v4749, %v4868
        %v4879 = vxor.u32 %v4871, 2147483648
        %v4880 = vxor.u32 %v4872, 2147483648
        %v4881 = vxor.u32 %v4873, 2147483648
        %v4882 = vxor.u32 %v4874, 2147483648
        %v4883 = vxor.u32 %v4875, 2147483648
        %v4884 = vxor.u32 %v4876, 2147483648
        %v4885 = vxor.u32 %v4877, 2147483648
        %v4886 = vxor.u32 %v4878, 2147483648
        %v4887 = vmul.f32 %v4879, 1.442695
        %v4888 = vpow.pop %v4887
        %v4889 = vmul.f32 %v4880, 1.442695
        %v4890 = vpow.pop %v4889
        %v4891 = vmul.f32 %v4881, 1.442695
        %v4892 = vpow.pop %v4891
        %v4893 = vmul.f32 %v4882, 1.442695
        %v4894 = vpow.pop %v4893
        %v4895 = vmul.f32 %v4883, 1.442695
        %v4896 = vpow.pop %v4895
        %v4897 = vmul.f32 %v4884, 1.442695
        %v4898 = vpow.pop %v4897
        %v4899 = vmul.f32 %v4885, 1.442695
        %v4900 = vpow.pop %v4899
        %v4901 = vmul.f32 %v4886, 1.442695
        %v4902 = vpow.pop %v4901
        %v4903 = vadd.f32 %v4888, 1.0
        %v4904 = vadd.f32 %v4890, 1.0
        %v4905 = vadd.f32 %v4892, 1.0
        %v4906 = vadd.f32 %v4894, 1.0
        %v4907 = vadd.f32 %v4896, 1.0
        %v4908 = vadd.f32 %v4898, 1.0
        %v4909 = vadd.f32 %v4900, 1.0
        %v4910 = vadd.f32 %v4902, 1.0
        %v4911 = vrcp.pop %v4903
        %v4912 = vmul.f32 1.0, %v4911
        %v4913 = vrcp.pop %v4904
        %v4914 = vmul.f32 1.0, %v4913
        %v4915 = vrcp.pop %v4905
        %v4916 = vmul.f32 1.0, %v4915
        %v4917 = vrcp.pop %v4906
        %v4918 = vmul.f32 1.0, %v4917
        %v4919 = vrcp.pop %v4907
        %v4920 = vmul.f32 1.0, %v4919
        %v4921 = vrcp.pop %v4908
        %v4922 = vmul.f32 1.0, %v4921
        %v4923 = vrcp.pop %v4909
        %v4924 = vmul.f32 1.0, %v4923
        %v4925 = vrcp.pop %v4910
        %v4926 = vmul.f32 1.0, %v4925
        %v4927 = vtanh.pop %v4871
        %v4928 = vtanh.pop %v4872
        %v4929 = vtanh.pop %v4873
        %v4930 = vtanh.pop %v4874
        %v4931 = vtanh.pop %v4875
        %v4932 = vtanh.pop %v4876
        %v4933 = vtanh.pop %v4877
        %v4934 = vtanh.pop %v4878
        %v4935 = vmul.f32 %v4912, %v4646
        %v4936 = vmul.f32 %v4914, %v4647
        %v4937 = vmul.f32 %v4916, %v4648
        %v4938 = vmul.f32 %v4918, %v4649
        %v4939 = vmul.f32 %v4920, %v4650
        %v4940 = vmul.f32 %v4922, %v4651
        %v4941 = vmul.f32 %v4924, %v4652
        %v4942 = vmul.f32 %v4926, %v4653
        %4951 = vrot.lane.b32.xlu0 %v4927, 32
        %v4952 = vpop.permute.xlu0 %4951
        %4953 = vrot.lane.b32.xlu0 %v4928, 32
        %v4954 = vpop.permute.xlu0 %4953
        %4955 = vrot.lane.b32.xlu0 %v4929, 32
        %v4956 = vpop.permute.xlu0 %4955
        %4957 = vrot.lane.b32.xlu0 %v4930, 32
        %v4958 = vpop.permute.xlu0 %4957
        %4959 = vrot.lane.b32.xlu0 %v4931, 32
        %v4960 = vpop.permute.xlu0 %4959
        %4961 = vrot.lane.b32.xlu0 %v4932, 32
        %v4962 = vpop.permute.xlu0 %4961
        %4963 = vrot.lane.b32.xlu0 %v4933, 32
        %v4964 = vpop.permute.xlu0 %4963
        %4965 = vrot.lane.b32.xlu0 %v4934, 32
        %v4966 = vpop.permute.xlu0 %4965
        %v4975 = vmul.f32 %v4912, %v4952
        %v4976 = vmul.f32 %v4914, %v4954
        %v4977 = vmul.f32 %v4916, %v4956
        %v4978 = vmul.f32 %v4918, %v4958
        %v4979 = vmul.f32 %v4920, %v4960
        %v4980 = vmul.f32 %v4922, %v4962
        %v4981 = vmul.f32 %v4924, %v4964
        %v4982 = vmul.f32 %v4926, %v4966
        %4991 = vrot.lane.b32.xlu0 %v4975, 32
        %v4992 = vpop.permute.xlu0 %4991
        %4993 = vrot.lane.b32.xlu0 %v4976, 32
        %v4994 = vpop.permute.xlu0 %4993
        %4995 = vrot.lane.b32.xlu0 %v4977, 32
        %v4996 = vpop.permute.xlu0 %4995
        %4997 = vrot.lane.b32.xlu0 %v4978, 32
        %v4998 = vpop.permute.xlu0 %4997
        %4999 = vrot.lane.b32.xlu0 %v4979, 32
        %v5000 = vpop.permute.xlu0 %4999
        %5001 = vrot.lane.b32.xlu0 %v4980, 32
        %v5002 = vpop.permute.xlu0 %5001
        %5003 = vrot.lane.b32.xlu0 %v4981, 32
        %v5004 = vpop.permute.xlu0 %5003
        %5005 = vrot.lane.b32.xlu0 %v4982, 32
        %v5006 = vpop.permute.xlu0 %5005
        %v5015 = vadd.f32 %v4935, %v4992
        %v5016 = vadd.f32 %v4936, %v4994
        %v5017 = vadd.f32 %v4937, %v4996
        %v5018 = vadd.f32 %v4938, %v4998
        %v5019 = vadd.f32 %v4939, %v5000
        %v5020 = vadd.f32 %v4940, %v5002
        %v5021 = vadd.f32 %v4941, %v5004
        %v5022 = vadd.f32 %v4942, %v5006
        %v5023 = vtanh.pop %v5015
        %v5024 = vtanh.pop %v5016
        %v5025 = vtanh.pop %v5017
        %v5026 = vtanh.pop %v5018
        %v5027 = vtanh.pop %v5019
        %v5028 = vtanh.pop %v5020
        %v5029 = vtanh.pop %v5021
        %v5030 = vtanh.pop %v5022
        %5039 = vrot.lane.b32.xlu0 %v5023, 32
        %v5040 = vpop.permute.xlu0 %5039
        %5041 = vrot.lane.b32.xlu0 %v5024, 32
        %v5042 = vpop.permute.xlu0 %5041
        %5043 = vrot.lane.b32.xlu0 %v5025, 32
        %v5044 = vpop.permute.xlu0 %5043
        %5045 = vrot.lane.b32.xlu0 %v5026, 32
        %v5046 = vpop.permute.xlu0 %5045
        %5047 = vrot.lane.b32.xlu0 %v5027, 32
        %v5048 = vpop.permute.xlu0 %5047
        %5049 = vrot.lane.b32.xlu0 %v5028, 32
        %v5050 = vpop.permute.xlu0 %5049
        %5051 = vrot.lane.b32.xlu0 %v5029, 32
        %v5052 = vpop.permute.xlu0 %5051
        %5053 = vrot.lane.b32.xlu0 %v5030, 32
        %v5054 = vpop.permute.xlu0 %5053
        %v5063 = vmul.f32 %v4912, %v5040
        %v5064 = vmul.f32 %v4914, %v5042
        %v5065 = vmul.f32 %v4916, %v5044
        %v5066 = vmul.f32 %v4918, %v5046
        %v5067 = vmul.f32 %v4920, %v5048
        %v5068 = vmul.f32 %v4922, %v5050
        %v5069 = vmul.f32 %v4924, %v5052
        %v5070 = vmul.f32 %v4926, %v5054
        %5079 = vrot.lane.b32.xlu0 %v5063, 64
        %v5080 = vpop.permute.xlu0 %5079
        %5081 = vrot.lane.b32.xlu0 %v5064, 64
        %v5082 = vpop.permute.xlu0 %5081
        %5083 = vrot.lane.b32.xlu0 %v5065, 64
        %v5084 = vpop.permute.xlu0 %5083
        %5085 = vrot.lane.b32.xlu0 %v5066, 64
        %v5086 = vpop.permute.xlu0 %5085
        %5087 = vrot.lane.b32.xlu0 %v5067, 64
        %v5088 = vpop.permute.xlu0 %5087
        %5089 = vrot.lane.b32.xlu0 %v5068, 64
        %v5090 = vpop.permute.xlu0 %5089
        %5091 = vrot.lane.b32.xlu0 %v5069, 64
        %v5092 = vpop.permute.xlu0 %5091
        %5093 = vrot.lane.b32.xlu0 %v5070, 64
        %v5094 = vpop.permute.xlu0 %5093
        %5103 = vst.msk [vmem:[#allocation3 + $0xc0] sm:$0xff] %vm1037, %v5080
        %5104 = vst.msk [vmem:[#allocation3 + $0xc8] sm:$0xff] %vm1037, %v5082
        %5105 = vst.msk [vmem:[#allocation3 + $0xd0] sm:$0xff] %vm1037, %v5084
        %5106 = vst.msk [vmem:[#allocation3 + $0xd8] sm:$0xff] %vm1037, %v5086
        %5107 = vst.msk [vmem:[#allocation3 + $0xe0] sm:$0xff] %vm1037, %v5088
        %5108 = vst.msk [vmem:[#allocation3 + $0xe8] sm:$0xff] %vm1037, %v5090
        %5109 = vst.msk [vmem:[#allocation3 + $0xf0] sm:$0xff] %vm1037, %v5092
        %5110 = vst.msk [vmem:[#allocation3 + $0xf8] sm:$0xff] %vm1037, %v5094
        %v5111 = vld [vmem:[#allocation2 + $0x100] sm:$0xff]
        %v5112 = vld [vmem:[#allocation2 + $0x108] sm:$0xff]
        %v5113 = vld [vmem:[#allocation2 + $0x110] sm:$0xff]
        %v5114 = vld [vmem:[#allocation2 + $0x118] sm:$0xff]
        %v5115 = vld [vmem:[#allocation2 + $0x120] sm:$0xff]
        %v5116 = vld [vmem:[#allocation2 + $0x128] sm:$0xff]
        %v5117 = vld [vmem:[#allocation2 + $0x130] sm:$0xff]
        %v5118 = vld [vmem:[#allocation2 + $0x138] sm:$0xff]
        %v5119 = vsel %vm1037, %v5080, 0
        %v5121 = vsel %vm1037, %v5082, 0
        %v5123 = vsel %vm1037, %v5084, 0
        %v5125 = vsel %vm1037, %v5086, 0
        %v5127 = vsel %vm1037, %v5088, 0
        %v5129 = vsel %vm1037, %v5090, 0
        %v5131 = vsel %vm1037, %v5092, 0
        %v5133 = vsel %vm1037, %v5094, 0
        %5135 = vmatprep.subr.mxu0 0.0
        %5136 = vmatpush1.msra.mxu0 %v3647
        %5137 = vmatprep.subr.mxu0 0.0
        %5138 = vmatpush1.msra.mxu0 %v3648
        %5139 = vmatprep.subr.mxu0 0.0
        %5140 = vmatpush1.msra.mxu0 %v3649
        %5141 = vmatprep.subr.mxu0 0.0
        %5142 = vmatpush1.msra.mxu0 %v3650
        %5143 = vmatprep.subr.mxu0 0.0
        %5144 = vmatpush1.msra.mxu0 0.0
        %5145 = vmatprep.subr.mxu0 0.0
        %5146 = vmatpush1.msra.mxu0 0.0
        %5147 = vmatprep.subr.mxu0 0.0
        %5148 = vmatpush1.msra.mxu0 0.0
        %5149 = vmatprep.subr.mxu0 0.0
        %5150 = vmatpush1.msra.mxu0 0.0
        %5151 = vmatprep.subr.mxu0 0.0
        %5152 = vmatpush1.msra.mxu0 0.0
        %5153 = vmatprep.subr.mxu0 0.0
        %5154 = vmatpush1.msra.mxu0 0.0
        %5155 = vmatprep.subr.mxu0 0.0
        %5156 = vmatpush1.msra.mxu0 0.0
        %5157 = vmatprep.subr.mxu0 0.0
        %5158 = vmatpush1.msra.mxu0 0.0
        %5159 = vmatprep.subr.mxu0 0.0
        %5160 = vmatpush1.msra.mxu0 0.0
        %5161 = vmatprep.subr.mxu0 0.0
        %5162 = vmatpush1.msra.mxu0 0.0
        %5163 = vmatprep.subr.mxu0 0.0
        %5164 = vmatpush1.msra.mxu0 0.0
        %5165 = vmatprep.subr.mxu0 0.0
        %5166 = vmatpush1.msra.mxu0 0.0
        %5167 = vmatprep.subr.mxu0 0.0
        %5168 = vmatpush1.msra.mxu0 0.0
        %5169 = vmatprep.subr.mxu0 0.0
        %5170 = vmatpush1.msra.mxu0 0.0
        %5171 = vmatprep.subr.mxu0 0.0
        %5172 = vmatpush1.msra.mxu0 0.0
        %5173 = vmatprep.subr.mxu0 0.0
        %5174 = vmatpush1.msra.mxu0 0.0
        %5175 = vmatprep.subr.mxu0 0.0
        %5176 = vmatpush1.msra.mxu0 0.0
        %5177 = vmatprep.subr.mxu0 0.0
        %5178 = vmatpush1.msra.mxu0 0.0
        %5179 = vmatprep.subr.mxu0 0.0
        %5180 = vmatpush1.msra.mxu0 0.0
        %5181 = vmatprep.subr.mxu0 0.0
        %5182 = vmatpush1.msra.mxu0 0.0
        %5183 = vmatprep.subr.mxu0 0.0
        %5184 = vmatpush1.msra.mxu0 0.0
        %5185 = vmatprep.subr.mxu0 0.0
        %5186 = vmatpush1.msra.mxu0 0.0
        %5187 = vmatprep.subr.mxu0 0.0
        %5188 = vmatpush1.msra.mxu0 0.0
        %5189 = vmatprep.subr.mxu0 0.0
        %5190 = vmatpush1.msra.mxu0 0.0
        %5191 = vmatprep.subr.mxu0 0.0
        %5192 = vmatpush1.msra.mxu0 0.0
        %5193 = vmatprep.subr.mxu0 0.0
        %5194 = vmatpush1.msra.mxu0 0.0
        %5195 = vmatprep.subr.mxu0 0.0
        %5196 = vmatpush1.msra.mxu0 0.0
        %5197 = vmatprep.subr.mxu0 0.0
        %5198 = vmatpush1.msra.mxu0 0.0
        %5199 = vmatprep.mubr.f32.mxu0 0.0
        %5200 = vmatmul.mubr.f32.gmra.mrb[0].mxu0 %v5119
        %v5201 = vpop.f32.mrb[0].mxu0
        %v5202 = vadd.f32 0.0, %v5201
        %v5203 = vpop.f32.mrb[0].mxu0
        %5204 = vmatprep.mubr.f32.mxu0 0.0
        %5205 = vmatmul.mubr.f32.gmra.mrb[0].mxu0 %v5121
        %v5206 = vpop.f32.mrb[0].mxu0
        %v5207 = vadd.f32 0.0, %v5206
        %v5208 = vpop.f32.mrb[0].mxu0
        %5209 = vmatprep.mubr.f32.mxu0 0.0
        %5210 = vmatmul.mubr.f32.gmra.mrb[0].mxu0 %v5123
        %v5211 = vpop.f32.mrb[0].mxu0
        %v5212 = vadd.f32 0.0, %v5211
        %v5213 = vpop.f32.mrb[0].mxu0
        %5214 = vmatprep.mubr.f32.mxu0 0.0
        %5215 = vmatmul.mubr.f32.gmra.mrb[0].mxu0 %v5125
        %v5216 = vpop.f32.mrb[0].mxu0
        %v5217 = vadd.f32 0.0, %v5216
        %v5218 = vpop.f32.mrb[0].mxu0
        %5219 = vmatprep.mubr.f32.mxu0 0.0
        %5220 = vmatmul.mubr.f32.gmra.mrb[0].mxu0 %v5127
        %v5221 = vpop.f32.mrb[0].mxu0
        %v5222 = vadd.f32 0.0, %v5221
        %v5223 = vpop.f32.mrb[0].mxu0
        %5224 = vmatprep.mubr.f32.mxu0 0.0
        %5225 = vmatmul.mubr.f32.gmra.mrb[0].mxu0 %v5129
        %v5226 = vpop.f32.mrb[0].mxu0
        %v5227 = vadd.f32 0.0, %v5226
        %v5228 = vpop.f32.mrb[0].mxu0
        %5229 = vmatprep.mubr.f32.mxu0 0.0
        %5230 = vmatmul.mubr.f32.gmra.mrb[0].mxu0 %v5131
        %v5231 = vpop.f32.mrb[0].mxu0
        %v5232 = vadd.f32 0.0, %v5231
        %v5233 = vpop.f32.mrb[0].mxu0
        %5234 = vmatprep.mubr.f32.mxu0 0.0
        %5235 = vmatmul.mubr.f32.gmra.mrb[0].mxu0 %v5133
        %v5236 = vpop.f32.mrb[0].mxu0
        %v5237 = vadd.f32 0.0, %v5236
        %v5238 = vpop.f32.mrb[0].mxu0
        %5239 = vdwg.mxu0
        %v5240 = vadd.f32 %v5111, %v5202
        %v5241 = vadd.f32 %v5112, %v5207
        %v5242 = vadd.f32 %v5113, %v5212
        %v5243 = vadd.f32 %v5114, %v5217
        %v5244 = vadd.f32 %v5115, %v5222
        %v5245 = vadd.f32 %v5116, %v5227
        %v5246 = vadd.f32 %v5117, %v5232
        %v5247 = vadd.f32 %v5118, %v5237
        %v5248 = vxor.u32 %v5240, 2147483648
        %v5249 = vxor.u32 %v5241, 2147483648
        %v5250 = vxor.u32 %v5242, 2147483648
        %v5251 = vxor.u32 %v5243, 2147483648
        %v5252 = vxor.u32 %v5244, 2147483648
        %v5253 = vxor.u32 %v5245, 2147483648
        %v5254 = vxor.u32 %v5246, 2147483648
        %v5255 = vxor.u32 %v5247, 2147483648
        %v5256 = vmul.f32 %v5248, 1.442695
        %v5257 = vpow.pop %v5256
        %v5258 = vmul.f32 %v5249, 1.442695
        %v5259 = vpow.pop %v5258
        %v5260 = vmul.f32 %v5250, 1.442695
        %v5261 = vpow.pop %v5260
        %v5262 = vmul.f32 %v5251, 1.442695
        %v5263 = vpow.pop %v5262
        %v5264 = vmul.f32 %v5252, 1.442695
        %v5265 = vpow.pop %v5264
        %v5266 = vmul.f32 %v5253, 1.442695
        %v5267 = vpow.pop %v5266
        %v5268 = vmul.f32 %v5254, 1.442695
        %v5269 = vpow.pop %v5268
        %v5270 = vmul.f32 %v5255, 1.442695
        %v5271 = vpow.pop %v5270
        %v5272 = vadd.f32 %v5257, 1.0
        %v5273 = vadd.f32 %v5259, 1.0
        %v5274 = vadd.f32 %v5261, 1.0
        %v5275 = vadd.f32 %v5263, 1.0
        %v5276 = vadd.f32 %v5265, 1.0
        %v5277 = vadd.f32 %v5267, 1.0
        %v5278 = vadd.f32 %v5269, 1.0
        %v5279 = vadd.f32 %v5271, 1.0
        %v5280 = vrcp.pop %v5272
        %v5281 = vmul.f32 1.0, %v5280
        %v5282 = vrcp.pop %v5273
        %v5283 = vmul.f32 1.0, %v5282
        %v5284 = vrcp.pop %v5274
        %v5285 = vmul.f32 1.0, %v5284
        %v5286 = vrcp.pop %v5275
        %v5287 = vmul.f32 1.0, %v5286
        %v5288 = vrcp.pop %v5276
        %v5289 = vmul.f32 1.0, %v5288
        %v5290 = vrcp.pop %v5277
        %v5291 = vmul.f32 1.0, %v5290
        %v5292 = vrcp.pop %v5278
        %v5293 = vmul.f32 1.0, %v5292
        %v5294 = vrcp.pop %v5279
        %v5295 = vmul.f32 1.0, %v5294
        %v5296 = vtanh.pop %v5240
        %v5297 = vtanh.pop %v5241
        %v5298 = vtanh.pop %v5242
        %v5299 = vtanh.pop %v5243
        %v5300 = vtanh.pop %v5244
        %v5301 = vtanh.pop %v5245
        %v5302 = vtanh.pop %v5246
        %v5303 = vtanh.pop %v5247
        %v5304 = vmul.f32 %v5281, %v5015
        %v5305 = vmul.f32 %v5283, %v5016
        %v5306 = vmul.f32 %v5285, %v5017
        %v5307 = vmul.f32 %v5287, %v5018
        %v5308 = vmul.f32 %v5289, %v5019
        %v5309 = vmul.f32 %v5291, %v5020
        %v5310 = vmul.f32 %v5293, %v5021
        %v5311 = vmul.f32 %v5295, %v5022
        %5320 = vrot.lane.b32.xlu0 %v5296, 32
        %v5321 = vpop.permute.xlu0 %5320
        %5322 = vrot.lane.b32.xlu0 %v5297, 32
        %v5323 = vpop.permute.xlu0 %5322
        %5324 = vrot.lane.b32.xlu0 %v5298, 32
        %v5325 = vpop.permute.xlu0 %5324
        %5326 = vrot.lane.b32.xlu0 %v5299, 32
        %v5327 = vpop.permute.xlu0 %5326
        %5328 = vrot.lane.b32.xlu0 %v5300, 32
        %v5329 = vpop.permute.xlu0 %5328
        %5330 = vrot.lane.b32.xlu0 %v5301, 32
        %v5331 = vpop.permute.xlu0 %5330
        %5332 = vrot.lane.b32.xlu0 %v5302, 32
        %v5333 = vpop.permute.xlu0 %5332
        %5334 = vrot.lane.b32.xlu0 %v5303, 32
        %v5335 = vpop.permute.xlu0 %5334
        %v5344 = vmul.f32 %v5281, %v5321
        %v5345 = vmul.f32 %v5283, %v5323
        %v5346 = vmul.f32 %v5285, %v5325
        %v5347 = vmul.f32 %v5287, %v5327
        %v5348 = vmul.f32 %v5289, %v5329
        %v5349 = vmul.f32 %v5291, %v5331
        %v5350 = vmul.f32 %v5293, %v5333
        %v5351 = vmul.f32 %v5295, %v5335
        %5360 = vrot.lane.b32.xlu0 %v5344, 32
        %v5361 = vpop.permute.xlu0 %5360
        %5362 = vrot.lane.b32.xlu0 %v5345, 32
        %v5363 = vpop.permute.xlu0 %5362
        %5364 = vrot.lane.b32.xlu0 %v5346, 32
        %v5365 = vpop.permute.xlu0 %5364
        %5366 = vrot.lane.b32.xlu0 %v5347, 32
        %v5367 = vpop.permute.xlu0 %5366
        %5368 = vrot.lane.b32.xlu0 %v5348, 32
        %v5369 = vpop.permute.xlu0 %5368
        %5370 = vrot.lane.b32.xlu0 %v5349, 32
        %v5371 = vpop.permute.xlu0 %5370
        %5372 = vrot.lane.b32.xlu0 %v5350, 32
        %v5373 = vpop.permute.xlu0 %5372
        %5374 = vrot.lane.b32.xlu0 %v5351, 32
        %v5375 = vpop.permute.xlu0 %5374
        %v5384 = vadd.f32 %v5304, %v5361
        %v5385 = vadd.f32 %v5305, %v5363
        %v5386 = vadd.f32 %v5306, %v5365
        %v5387 = vadd.f32 %v5307, %v5367
        %v5388 = vadd.f32 %v5308, %v5369
        %v5389 = vadd.f32 %v5309, %v5371
        %v5390 = vadd.f32 %v5310, %v5373
        %v5391 = vadd.f32 %v5311, %v5375
        %v5392 = vtanh.pop %v5384
        %v5393 = vtanh.pop %v5385
        %v5394 = vtanh.pop %v5386
        %v5395 = vtanh.pop %v5387
        %v5396 = vtanh.pop %v5388
        %v5397 = vtanh.pop %v5389
        %v5398 = vtanh.pop %v5390
        %v5399 = vtanh.pop %v5391
        %5408 = vrot.lane.b32.xlu0 %v5392, 32
        %v5409 = vpop.permute.xlu0 %5408
        %5410 = vrot.lane.b32.xlu0 %v5393, 32
        %v5411 = vpop.permute.xlu0 %5410
        %5412 = vrot.lane.b32.xlu0 %v5394, 32
        %v5413 = vpop.permute.xlu0 %5412
        %5414 = vrot.lane.b32.xlu0 %v5395, 32
        %v5415 = vpop.permute.xlu0 %5414
        %5416 = vrot.lane.b32.xlu0 %v5396, 32
        %v5417 = vpop.permute.xlu0 %5416
        %5418 = vrot.lane.b32.xlu0 %v5397, 32
        %v5419 = vpop.permute.xlu0 %5418
        %5420 = vrot.lane.b32.xlu0 %v5398, 32
        %v5421 = vpop.permute.xlu0 %5420
        %5422 = vrot.lane.b32.xlu0 %v5399, 32
        %v5423 = vpop.permute.xlu0 %5422
        %v5432 = vmul.f32 %v5281, %v5409
        %v5433 = vmul.f32 %v5283, %v5411
        %v5434 = vmul.f32 %v5285, %v5413
        %v5435 = vmul.f32 %v5287, %v5415
        %v5436 = vmul.f32 %v5289, %v5417
        %v5437 = vmul.f32 %v5291, %v5419
        %v5438 = vmul.f32 %v5293, %v5421
        %v5439 = vmul.f32 %v5295, %v5423
        %5448 = vrot.lane.b32.xlu0 %v5432, 64
        %v5449 = vpop.permute.xlu0 %5448
        %5450 = vrot.lane.b32.xlu0 %v5433, 64
        %v5451 = vpop.permute.xlu0 %5450
        %5452 = vrot.lane.b32.xlu0 %v5434, 64
        %v5453 = vpop.permute.xlu0 %5452
        %5454 = vrot.lane.b32.xlu0 %v5435, 64
        %v5455 = vpop.permute.xlu0 %5454
        %5456 = vrot.lane.b32.xlu0 %v5436, 64
        %v5457 = vpop.permute.xlu0 %5456
        %5458 = vrot.lane.b32.xlu0 %v5437, 64
        %v5459 = vpop.permute.xlu0 %5458
        %5460 = vrot.lane.b32.xlu0 %v5438, 64
        %v5461 = vpop.permute.xlu0 %5460
        %5462 = vrot.lane.b32.xlu0 %v5439, 64
        %v5463 = vpop.permute.xlu0 %5462
        %5472 = vst.msk [vmem:[#allocation3 + $0x100] sm:$0xff] %vm1037, %v5449
        %5473 = vst.msk [vmem:[#allocation3 + $0x108] sm:$0xff] %vm1037, %v5451
        %5474 = vst.msk [vmem:[#allocation3 + $0x110] sm:$0xff] %vm1037, %v5453
        %5475 = vst.msk [vmem:[#allocation3 + $0x118] sm:$0xff] %vm1037, %v5455
        %5476 = vst.msk [vmem:[#allocation3 + $0x120] sm:$0xff] %vm1037, %v5457
        %5477 = vst.msk [vmem:[#allocation3 + $0x128] sm:$0xff] %vm1037, %v5459
        %5478 = vst.msk [vmem:[#allocation3 + $0x130] sm:$0xff] %vm1037, %v5461
        %5479 = vst.msk [vmem:[#allocation3 + $0x138] sm:$0xff] %vm1037, %v5463
        %v5480 = vld [vmem:[#allocation3] sm:$0xff]
        %v5481 = vld [vmem:[#allocation3 + $0x8] sm:$0xff]
        %v5482 = vld [vmem:[#allocation3 + $0x10] sm:$0xff]
        %v5483 = vld [vmem:[#allocation3 + $0x18] sm:$0xff]
        %v5484 = vld [vmem:[#allocation3 + $0x20] sm:$0xff]
        %v5485 = vld [vmem:[#allocation3 + $0x28] sm:$0xff]
        %v5486 = vld [vmem:[#allocation3 + $0x30] sm:$0xff]
        %v5487 = vld [vmem:[#allocation3 + $0x38] sm:$0xff]
        %v5488 = vld [vmem:[#allocation3 + $0x40] sm:$0xff]
        %v5489 = vld [vmem:[#allocation3 + $0x48] sm:$0xff]
        %v5490 = vld [vmem:[#allocation3 + $0x50] sm:$0xff]
        %v5491 = vld [vmem:[#allocation3 + $0x58] sm:$0xff]
        %v5492 = vld [vmem:[#allocation3 + $0x60] sm:$0xff]
        %v5493 = vld [vmem:[#allocation3 + $0x68] sm:$0xff]
        %v5494 = vld [vmem:[#allocation3 + $0x70] sm:$0xff]
        %v5495 = vld [vmem:[#allocation3 + $0x78] sm:$0xff]
        %v5496 = vld [vmem:[#allocation3 + $0x80] sm:$0xff]
        %v5497 = vld [vmem:[#allocation3 + $0x88] sm:$0xff]
        %v5498 = vld [vmem:[#allocation3 + $0x90] sm:$0xff]
        %v5499 = vld [vmem:[#allocation3 + $0x98] sm:$0xff]
        %v5500 = vld [vmem:[#allocation3 + $0xa0] sm:$0xff]
        %v5501 = vld [vmem:[#allocation3 + $0xa8] sm:$0xff]
        %v5502 = vld [vmem:[#allocation3 + $0xb0] sm:$0xff]
        %v5503 = vld [vmem:[#allocation3 + $0xb8] sm:$0xff]
        %v5504 = vld [vmem:[#allocation3 + $0xc0] sm:$0xff]
        %v5505 = vld [vmem:[#allocation3 + $0xc8] sm:$0xff]
        %v5506 = vld [vmem:[#allocation3 + $0xd0] sm:$0xff]
        %v5507 = vld [vmem:[#allocation3 + $0xd8] sm:$0xff]
        %v5508 = vld [vmem:[#allocation3 + $0xe0] sm:$0xff]
        %v5509 = vld [vmem:[#allocation3 + $0xe8] sm:$0xff]
        %v5510 = vld [vmem:[#allocation3 + $0xf0] sm:$0xff]
        %v5511 = vld [vmem:[#allocation3 + $0xf8] sm:$0xff]
        %v5512 = vld [vmem:[#allocation3 + $0x100] sm:$0xff]
        %v5513 = vld [vmem:[#allocation3 + $0x108] sm:$0xff]
        %v5514 = vld [vmem:[#allocation3 + $0x110] sm:$0xff]
        %v5515 = vld [vmem:[#allocation3 + $0x118] sm:$0xff]
        %v5516 = vld [vmem:[#allocation3 + $0x120] sm:$0xff]
        %v5517 = vld [vmem:[#allocation3 + $0x128] sm:$0xff]
        %v5518 = vld [vmem:[#allocation3 + $0x130] sm:$0xff]
        %v5519 = vld [vmem:[#allocation3 + $0x138] sm:$0xff]
        %v5520 = vld [vmem:[%s8] sm:$0xff]
        %v5521 = vld [vmem:[%s8 + $0x8] sm:$0xff]
        %v5522 = vld [vmem:[%s8 + $0x10] sm:$0xff]
        %v5523 = vld [vmem:[%s8 + $0x18] sm:$0xff]
        %v5524 = vld [vmem:[%s9] sm:$0x1]
        %v5526 = vlaneseq
        %v5527 = vshrl.u32 %v5526, 7
        %v5528 = vsub.s32 0, %v5527
        %v5529 = vrot.slane %v5524, %v5528
        %v5532 = vsel %vm1037, %v5480, 0
        %v5535 = vsel %vm1037, %v5481, 0
        %v5538 = vsel %vm1037, %v5482, 0
        %v5541 = vsel %vm1037, %v5483, 0
        %v5544 = vsel %vm1037, %v5484, 0
        %v5547 = vsel %vm1037, %v5485, 0
        %v5550 = vsel %vm1037, %v5486, 0
        %v5553 = vsel %vm1037, %v5487, 0
        %v5556 = vsel %vm1037, %v5488, 0
        %v5559 = vsel %vm1037, %v5489, 0
        %v5562 = vsel %vm1037, %v5490, 0
        %v5565 = vsel %vm1037, %v5491, 0
        %v5568 = vsel %vm1037, %v5492, 0
        %v5571 = vsel %vm1037, %v5493, 0
        %v5574 = vsel %vm1037, %v5494, 0
        %v5577 = vsel %vm1037, %v5495, 0
        %v5580 = vsel %vm1037, %v5496, 0
        %v5583 = vsel %vm1037, %v5497, 0
        %v5586 = vsel %vm1037, %v5498, 0
        %v5589 = vsel %vm1037, %v5499, 0
        %v5592 = vsel %vm1037, %v5500, 0
        %v5595 = vsel %vm1037, %v5501, 0
        %v5598 = vsel %vm1037, %v5502, 0
        %v5601 = vsel %vm1037, %v5503, 0
        %v5604 = vsel %vm1037, %v5504, 0
        %v5607 = vsel %vm1037, %v5505, 0
        %v5610 = vsel %vm1037, %v5506, 0
        %v5613 = vsel %vm1037, %v5507, 0
        %v5616 = vsel %vm1037, %v5508, 0
        %v5619 = vsel %vm1037, %v5509, 0
        %v5622 = vsel %vm1037, %v5510, 0
        %v5625 = vsel %vm1037, %v5511, 0
        %v5628 = vsel %vm1037, %v5512, 0
        %v5631 = vsel %vm1037, %v5513, 0
        %v5634 = vsel %vm1037, %v5514, 0
        %v5637 = vsel %vm1037, %v5515, 0
        %v5640 = vsel %vm1037, %v5516, 0
        %v5643 = vsel %vm1037, %v5517, 0
        %v5646 = vsel %vm1037, %v5518, 0
        %v5649 = vsel %vm1037, %v5519, 0
        %5651 = vmatprep.subr.mxu0 0.0
        %5652 = vmatpush1.msra.mxu0 %v5520
        %5653 = vmatprep.subr.mxu0 0.0
        %5654 = vmatpush1.msra.mxu0 %v5521
        %5655 = vmatprep.subr.mxu0 0.0
        %5656 = vmatpush1.msra.mxu0 %v5522
        %5657 = vmatprep.subr.mxu0 0.0
        %5658 = vmatpush1.msra.mxu0 %v5523
        %5659 = vmatprep.subr.mxu0 0.0
        %5660 = vmatpush1.msra.mxu0 0.0
        %5661 = vmatprep.subr.mxu0 0.0
        %5662 = vmatpush1.msra.mxu0 0.0
        %5663 = vmatprep.subr.mxu0 0.0
        %5664 = vmatpush1.msra.mxu0 0.0
        %5665 = vmatprep.subr.mxu0 0.0
        %5666 = vmatpush1.msra.mxu0 0.0
        %5667 = vmatprep.subr.mxu0 0.0
        %5668 = vmatpush1.msra.mxu0 0.0
        %5669 = vmatprep.subr.mxu0 0.0
        %5670 = vmatpush1.msra.mxu0 0.0
        %5671 = vmatprep.subr.mxu0 0.0
        %5672 = vmatpush1.msra.mxu0 0.0
        %5673 = vmatprep.subr.mxu0 0.0
        %5674 = vmatpush1.msra.mxu0 0.0
        %5675 = vmatprep.subr.mxu0 0.0
        %5676 = vmatpush1.msra.mxu0 0.0
        %5677 = vmatprep.subr.mxu0 0.0
        %5678 = vmatpush1.msra.mxu0 0.0
        %5679 = vmatprep.subr.mxu0 0.0
        %5680 = vmatpush1.msra.mxu0 0.0
        %5681 = vmatprep.subr.mxu0 0.0
        %5682 = vmatpush1.msra.mxu0 0.0
        %5683 = vmatprep.subr.mxu0 0.0
        %5684 = vmatpush1.msra.mxu0 0.0
        %5685 = vmatprep.subr.mxu0 0.0
        %5686 = vmatpush1.msra.mxu0 0.0
        %5687 = vmatprep.subr.mxu0 0.0
        %5688 = vmatpush1.msra.mxu0 0.0
        %5689 = vmatprep.subr.mxu0 0.0
        %5690 = vmatpush1.msra.mxu0 0.0
        %5691 = vmatprep.subr.mxu0 0.0
        %5692 = vmatpush1.msra.mxu0 0.0
        %5693 = vmatprep.subr.mxu0 0.0
        %5694 = vmatpush1.msra.mxu0 0.0
        %5695 = vmatprep.subr.mxu0 0.0
        %5696 = vmatpush1.msra.mxu0 0.0
        %5697 = vmatprep.subr.mxu0 0.0
        %5698 = vmatpush1.msra.mxu0 0.0
        %5699 = vmatprep.subr.mxu0 0.0
        %5700 = vmatpush1.msra.mxu0 0.0
        %5701 = vmatprep.subr.mxu0 0.0
        %5702 = vmatpush1.msra.mxu0 0.0
        %5703 = vmatprep.subr.mxu0 0.0
        %5704 = vmatpush1.msra.mxu0 0.0
        %5705 = vmatprep.subr.mxu0 0.0
        %5706 = vmatpush1.msra.mxu0 0.0
        %5707 = vmatprep.subr.mxu0 0.0
        %5708 = vmatpush1.msra.mxu0 0.0
        %5709 = vmatprep.subr.mxu0 0.0
        %5710 = vmatpush1.msra.mxu0 0.0
        %5711 = vmatprep.subr.mxu0 0.0
        %5712 = vmatpush1.msra.mxu0 0.0
        %5713 = vmatprep.subr.mxu0 0.0
        %5714 = vmatpush1.msra.mxu0 0.0
        %5715 = vmatprep.mubr.f32.mxu0 0.0
        %5716 = vmatmul.mubr.f32.gmra.mrb[0].mxu0 %v5532
        %v5717 = vpop.f32.mrb[0].mxu0
        %v5718 = vadd.f32 %v5529, %v5717
        %v5719 = vpop.f32.mrb[0].mxu0
        %5720 = vmatprep.mubr.f32.mxu0 0.0
        %5721 = vmatmul.mubr.f32.gmra.mrb[0].mxu0 %v5535
        %v5722 = vpop.f32.mrb[0].mxu0
        %v5723 = vadd.f32 %v5529, %v5722
        %v5724 = vpop.f32.mrb[0].mxu0
        %5725 = vmatprep.mubr.f32.mxu0 0.0
        %5726 = vmatmul.mubr.f32.gmra.mrb[0].mxu0 %v5538
        %v5727 = vpop.f32.mrb[0].mxu0
        %v5728 = vadd.f32 %v5529, %v5727
        %v5729 = vpop.f32.mrb[0].mxu0
        %5730 = vmatprep.mubr.f32.mxu0 0.0
        %5731 = vmatmul.mubr.f32.gmra.mrb[0].mxu0 %v5541
        %v5732 = vpop.f32.mrb[0].mxu0
        %v5733 = vadd.f32 %v5529, %v5732
        %v5734 = vpop.f32.mrb[0].mxu0
        %5735 = vmatprep.mubr.f32.mxu0 0.0
        %5736 = vmatmul.mubr.f32.gmra.mrb[0].mxu0 %v5544
        %v5737 = vpop.f32.mrb[0].mxu0
        %v5738 = vadd.f32 %v5529, %v5737
        %v5739 = vpop.f32.mrb[0].mxu0
        %5740 = vmatprep.mubr.f32.mxu0 0.0
        %5741 = vmatmul.mubr.f32.gmra.mrb[0].mxu0 %v5547
        %v5742 = vpop.f32.mrb[0].mxu0
        %v5743 = vadd.f32 %v5529, %v5742
        %v5744 = vpop.f32.mrb[0].mxu0
        %5745 = vmatprep.mubr.f32.mxu0 0.0
        %5746 = vmatmul.mubr.f32.gmra.mrb[0].mxu0 %v5550
        %v5747 = vpop.f32.mrb[0].mxu0
        %v5748 = vadd.f32 %v5529, %v5747
        %v5749 = vpop.f32.mrb[0].mxu0
        %5750 = vmatprep.mubr.f32.mxu0 0.0
        %5751 = vmatmul.mubr.f32.gmra.mrb[0].mxu0 %v5553
        %v5752 = vpop.f32.mrb[0].mxu0
        %v5753 = vadd.f32 %v5529, %v5752
        %v5754 = vpop.f32.mrb[0].mxu0
        %5755 = vmatprep.mubr.f32.mxu0 0.0
        %5756 = vmatmul.mubr.f32.gmra.mrb[0].mxu0 %v5556
        %v5757 = vpop.f32.mrb[0].mxu0
        %v5758 = vadd.f32 %v5529, %v5757
        %v5759 = vpop.f32.mrb[0].mxu0
        %5760 = vmatprep.mubr.f32.mxu0 0.0
        %5761 = vmatmul.mubr.f32.gmra.mrb[0].mxu0 %v5559
        %v5762 = vpop.f32.mrb[0].mxu0
        %v5763 = vadd.f32 %v5529, %v5762
        %v5764 = vpop.f32.mrb[0].mxu0
        %5765 = vmatprep.mubr.f32.mxu0 0.0
        %5766 = vmatmul.mubr.f32.gmra.mrb[0].mxu0 %v5562
        %v5767 = vpop.f32.mrb[0].mxu0
        %v5768 = vadd.f32 %v5529, %v5767
        %v5769 = vpop.f32.mrb[0].mxu0
        %5770 = vmatprep.mubr.f32.mxu0 0.0
        %5771 = vmatmul.mubr.f32.gmra.mrb[0].mxu0 %v5565
        %v5772 = vpop.f32.mrb[0].mxu0
        %v5773 = vadd.f32 %v5529, %v5772
        %v5774 = vpop.f32.mrb[0].mxu0
        %5775 = vmatprep.mubr.f32.mxu0 0.0
        %5776 = vmatmul.mubr.f32.gmra.mrb[0].mxu0 %v5568
        %v5777 = vpop.f32.mrb[0].mxu0
        %v5778 = vadd.f32 %v5529, %v5777
        %v5779 = vpop.f32.mrb[0].mxu0
        %5780 = vmatprep.mubr.f32.mxu0 0.0
        %5781 = vmatmul.mubr.f32.gmra.mrb[0].mxu0 %v5571
        %v5782 = vpop.f32.mrb[0].mxu0
        %v5783 = vadd.f32 %v5529, %v5782
        %v5784 = vpop.f32.mrb[0].mxu0
        %5785 = vmatprep.mubr.f32.mxu0 0.0
        %5786 = vmatmul.mubr.f32.gmra.mrb[0].mxu0 %v5574
        %v5787 = vpop.f32.mrb[0].mxu0
        %v5788 = vadd.f32 %v5529, %v5787
        %v5789 = vpop.f32.mrb[0].mxu0
        %5790 = vmatprep.mubr.f32.mxu0 0.0
        %5791 = vmatmul.mubr.f32.gmra.mrb[0].mxu0 %v5577
        %v5792 = vpop.f32.mrb[0].mxu0
        %v5793 = vadd.f32 %v5529, %v5792
        %v5794 = vpop.f32.mrb[0].mxu0
        %5795 = vmatprep.mubr.f32.mxu0 0.0
        %5796 = vmatmul.mubr.f32.gmra.mrb[0].mxu0 %v5580
        %v5797 = vpop.f32.mrb[0].mxu0
        %v5798 = vadd.f32 %v5529, %v5797
        %v5799 = vpop.f32.mrb[0].mxu0
        %5800 = vmatprep.mubr.f32.mxu0 0.0
        %5801 = vmatmul.mubr.f32.gmra.mrb[0].mxu0 %v5583
        %v5802 = vpop.f32.mrb[0].mxu0
        %v5803 = vadd.f32 %v5529, %v5802
        %v5804 = vpop.f32.mrb[0].mxu0
        %5805 = vmatprep.mubr.f32.mxu0 0.0
        %5806 = vmatmul.mubr.f32.gmra.mrb[0].mxu0 %v5586
        %v5807 = vpop.f32.mrb[0].mxu0
        %v5808 = vadd.f32 %v5529, %v5807
        %v5809 = vpop.f32.mrb[0].mxu0
        %5810 = vmatprep.mubr.f32.mxu0 0.0
        %5811 = vmatmul.mubr.f32.gmra.mrb[0].mxu0 %v5589
        %v5812 = vpop.f32.mrb[0].mxu0
        %v5813 = vadd.f32 %v5529, %v5812
        %v5814 = vpop.f32.mrb[0].mxu0
        %5815 = vmatprep.mubr.f32.mxu0 0.0
        %5816 = vmatmul.mubr.f32.gmra.mrb[0].mxu0 %v5592
        %v5817 = vpop.f32.mrb[0].mxu0
        %v5818 = vadd.f32 %v5529, %v5817
        %v5819 = vpop.f32.mrb[0].mxu0
        %5820 = vmatprep.mubr.f32.mxu0 0.0
        %5821 = vmatmul.mubr.f32.gmra.mrb[0].mxu0 %v5595
        %v5822 = vpop.f32.mrb[0].mxu0
        %v5823 = vadd.f32 %v5529, %v5822
        %v5824 = vpop.f32.mrb[0].mxu0
        %5825 = vmatprep.mubr.f32.mxu0 0.0
        %5826 = vmatmul.mubr.f32.gmra.mrb[0].mxu0 %v5598
        %v5827 = vpop.f32.mrb[0].mxu0
        %v5828 = vadd.f32 %v5529, %v5827
        %v5829 = vpop.f32.mrb[0].mxu0
        %5830 = vmatprep.mubr.f32.mxu0 0.0
        %5831 = vmatmul.mubr.f32.gmra.mrb[0].mxu0 %v5601
        %v5832 = vpop.f32.mrb[0].mxu0
        %v5833 = vadd.f32 %v5529, %v5832
        %v5834 = vpop.f32.mrb[0].mxu0
        %5835 = vmatprep.mubr.f32.mxu0 0.0
        %5836 = vmatmul.mubr.f32.gmra.mrb[0].mxu0 %v5604
        %v5837 = vpop.f32.mrb[0].mxu0
        %v5838 = vadd.f32 %v5529, %v5837
        %v5839 = vpop.f32.mrb[0].mxu0
        %5840 = vmatprep.mubr.f32.mxu0 0.0
        %5841 = vmatmul.mubr.f32.gmra.mrb[0].mxu0 %v5607
        %v5842 = vpop.f32.mrb[0].mxu0
        %v5843 = vadd.f32 %v5529, %v5842
        %v5844 = vpop.f32.mrb[0].mxu0
        %5845 = vmatprep.mubr.f32.mxu0 0.0
        %5846 = vmatmul.mubr.f32.gmra.mrb[0].mxu0 %v5610
        %v5847 = vpop.f32.mrb[0].mxu0
        %v5848 = vadd.f32 %v5529, %v5847
        %v5849 = vpop.f32.mrb[0].mxu0
        %5850 = vmatprep.mubr.f32.mxu0 0.0
        %5851 = vmatmul.mubr.f32.gmra.mrb[0].mxu0 %v5613
        %v5852 = vpop.f32.mrb[0].mxu0
        %v5853 = vadd.f32 %v5529, %v5852
        %v5854 = vpop.f32.mrb[0].mxu0
        %5855 = vmatprep.mubr.f32.mxu0 0.0
        %5856 = vmatmul.mubr.f32.gmra.mrb[0].mxu0 %v5616
        %v5857 = vpop.f32.mrb[0].mxu0
        %v5858 = vadd.f32 %v5529, %v5857
        %v5859 = vpop.f32.mrb[0].mxu0
        %5860 = vmatprep.mubr.f32.mxu0 0.0
        %5861 = vmatmul.mubr.f32.gmra.mrb[0].mxu0 %v5619
        %v5862 = vpop.f32.mrb[0].mxu0
        %v5863 = vadd.f32 %v5529, %v5862
        %v5864 = vpop.f32.mrb[0].mxu0
        %5865 = vmatprep.mubr.f32.mxu0 0.0
        %5866 = vmatmul.mubr.f32.gmra.mrb[0].mxu0 %v5622
        %v5867 = vpop.f32.mrb[0].mxu0
        %v5868 = vadd.f32 %v5529, %v5867
        %v5869 = vpop.f32.mrb[0].mxu0
        %5870 = vmatprep.mubr.f32.mxu0 0.0
        %5871 = vmatmul.mubr.f32.gmra.mrb[0].mxu0 %v5625
        %v5872 = vpop.f32.mrb[0].mxu0
        %v5873 = vadd.f32 %v5529, %v5872
        %v5874 = vpop.f32.mrb[0].mxu0
        %5875 = vmatprep.mubr.f32.mxu0 0.0
        %5876 = vmatmul.mubr.f32.gmra.mrb[0].mxu0 %v5628
        %v5877 = vpop.f32.mrb[0].mxu0
        %v5878 = vadd.f32 %v5529, %v5877
        %v5879 = vpop.f32.mrb[0].mxu0
        %5880 = vmatprep.mubr.f32.mxu0 0.0
        %5881 = vmatmul.mubr.f32.gmra.mrb[0].mxu0 %v5631
        %v5882 = vpop.f32.mrb[0].mxu0
        %v5883 = vadd.f32 %v5529, %v5882
        %v5884 = vpop.f32.mrb[0].mxu0
        %5885 = vmatprep.mubr.f32.mxu0 0.0
        %5886 = vmatmul.mubr.f32.gmra.mrb[0].mxu0 %v5634
        %v5887 = vpop.f32.mrb[0].mxu0
        %v5888 = vadd.f32 %v5529, %v5887
        %v5889 = vpop.f32.mrb[0].mxu0
        %5890 = vmatprep.mubr.f32.mxu0 0.0
        %5891 = vmatmul.mubr.f32.gmra.mrb[0].mxu0 %v5637
        %v5892 = vpop.f32.mrb[0].mxu0
        %v5893 = vadd.f32 %v5529, %v5892
        %v5894 = vpop.f32.mrb[0].mxu0
        %5895 = vmatprep.mubr.f32.mxu0 0.0
        %5896 = vmatmul.mubr.f32.gmra.mrb[0].mxu0 %v5640
        %v5897 = vpop.f32.mrb[0].mxu0
        %v5898 = vadd.f32 %v5529, %v5897
        %v5899 = vpop.f32.mrb[0].mxu0
        %5900 = vmatprep.mubr.f32.mxu0 0.0
        %5901 = vmatmul.mubr.f32.gmra.mrb[0].mxu0 %v5643
        %v5902 = vpop.f32.mrb[0].mxu0
        %v5903 = vadd.f32 %v5529, %v5902
        %v5904 = vpop.f32.mrb[0].mxu0
        %5905 = vmatprep.mubr.f32.mxu0 0.0
        %5906 = vmatmul.mubr.f32.gmra.mrb[0].mxu0 %v5646
        %v5907 = vpop.f32.mrb[0].mxu0
        %v5908 = vadd.f32 %v5529, %v5907
        %v5909 = vpop.f32.mrb[0].mxu0
        %5910 = vmatprep.mubr.f32.mxu0 0.0
        %5911 = vmatmul.mubr.f32.gmra.mrb[0].mxu0 %v5649
        %v5912 = vpop.f32.mrb[0].mxu0
        %v5913 = vadd.f32 %v5529, %v5912
        %v5914 = vpop.f32.mrb[0].mxu0
        %5915 = vdwg.mxu0
        %vm5916 = vcmask 15360
        %5917 = vst.msk [vmem:[%s544] sm:$0xff] %vm5916, %v5718
        %5918 = vst.msk [vmem:[%s544 + $0x8] sm:$0xff] %vm5916, %v5723
        %5919 = vst.msk [vmem:[%s544 + $0x10] sm:$0xff] %vm5916, %v5728
        %5920 = vst.msk [vmem:[%s544 + $0x18] sm:$0xff] %vm5916, %v5733
        %5921 = vst.msk [vmem:[%s544 + $0x20] sm:$0xff] %vm5916, %v5738
        %5922 = vst.msk [vmem:[%s544 + $0x28] sm:$0xff] %vm5916, %v5743
        %5923 = vst.msk [vmem:[%s544 + $0x30] sm:$0xff] %vm5916, %v5748
        %5924 = vst.msk [vmem:[%s544 + $0x38] sm:$0xff] %vm5916, %v5753
        %5925 = vst.msk [vmem:[%s544 + $0x40] sm:$0xff] %vm5916, %v5758
        %5926 = vst.msk [vmem:[%s544 + $0x48] sm:$0xff] %vm5916, %v5763
        %5927 = vst.msk [vmem:[%s544 + $0x50] sm:$0xff] %vm5916, %v5768
        %5928 = vst.msk [vmem:[%s544 + $0x58] sm:$0xff] %vm5916, %v5773
        %5929 = vst.msk [vmem:[%s544 + $0x60] sm:$0xff] %vm5916, %v5778
        %5930 = vst.msk [vmem:[%s544 + $0x68] sm:$0xff] %vm5916, %v5783
        %5931 = vst.msk [vmem:[%s544 + $0x70] sm:$0xff] %vm5916, %v5788
        %5932 = vst.msk [vmem:[%s544 + $0x78] sm:$0xff] %vm5916, %v5793
        %5933 = vst.msk [vmem:[%s544 + $0x80] sm:$0xff] %vm5916, %v5798
        %5934 = vst.msk [vmem:[%s544 + $0x88] sm:$0xff] %vm5916, %v5803
        %5935 = vst.msk [vmem:[%s544 + $0x90] sm:$0xff] %vm5916, %v5808
        %5936 = vst.msk [vmem:[%s544 + $0x98] sm:$0xff] %vm5916, %v5813
        %5937 = vst.msk [vmem:[%s544 + $0xa0] sm:$0xff] %vm5916, %v5818
        %5938 = vst.msk [vmem:[%s544 + $0xa8] sm:$0xff] %vm5916, %v5823
        %5939 = vst.msk [vmem:[%s544 + $0xb0] sm:$0xff] %vm5916, %v5828
        %5940 = vst.msk [vmem:[%s544 + $0xb8] sm:$0xff] %vm5916, %v5833
        %5941 = vst.msk [vmem:[%s544 + $0xc0] sm:$0xff] %vm5916, %v5838
        %5942 = vst.msk [vmem:[%s544 + $0xc8] sm:$0xff] %vm5916, %v5843
        %5943 = vst.msk [vmem:[%s544 + $0xd0] sm:$0xff] %vm5916, %v5848
        %5944 = vst.msk [vmem:[%s544 + $0xd8] sm:$0xff] %vm5916, %v5853
        %5945 = vst.msk [vmem:[%s544 + $0xe0] sm:$0xff] %vm5916, %v5858
        %5946 = vst.msk [vmem:[%s544 + $0xe8] sm:$0xff] %vm5916, %v5863
        %5947 = vst.msk [vmem:[%s544 + $0xf0] sm:$0xff] %vm5916, %v5868
        %5948 = vst.msk [vmem:[%s544 + $0xf8] sm:$0xff] %vm5916, %v5873
        %5949 = vst.msk [vmem:[%s544 + $0x100] sm:$0xff] %vm5916, %v5878
        %5950 = vst.msk [vmem:[%s544 + $0x108] sm:$0xff] %vm5916, %v5883
        %5951 = vst.msk [vmem:[%s544 + $0x110] sm:$0xff] %vm5916, %v5888
        %5952 = vst.msk [vmem:[%s544 + $0x118] sm:$0xff] %vm5916, %v5893
        %5953 = vst.msk [vmem:[%s544 + $0x120] sm:$0xff] %vm5916, %v5898
        %5954 = vst.msk [vmem:[%s544 + $0x128] sm:$0xff] %vm5916, %v5903
        %5955 = vst.msk [vmem:[%s544 + $0x130] sm:$0xff] %vm5916, %v5908
        %5956 = vst.msk [vmem:[%s544 + $0x138] sm:$0xff] %vm5916, %v5913
        %s5957 = sand.u32 %s244, 1
        %s5958 = sand.u32 %s244, 1
        %s5959 = smul.addr %s5958, 320
        %s5960 = scalar_lea.vmem [#allocation5], %s5959
        // Predicated region
        $region99: #{cpnn_forward.1} parent=93 // pred_check
          %p5961 = pneg %p254
        $region100: #{cpnn_forward.1} parent=93 // pred_check_branch
          %5963 = sbr.rel (%p5961) target = $region102
        $region101: #{cpnn_forward.1} parent=93 // pred_region
          %s5964 = smul.u32 8, %s21
          %s5965 = smul.addr %s5964, 8
          %s5966 = scalar_lea.vmem %s10, %s5965
          // Predicated region
          $region103: #{cpnn_forward.1} parent=101 // pred_check
            _
          $region104: #{cpnn_forward.1} parent=101 // pred_check_branch
            %5968 = sbr.rel (0) target = $region106
          $region105: #{cpnn_forward.1} parent=101 // pred_region
            // Predicated region
            $region107: #{cpnn_forward.1} parent=105 // pred_check
              _
            $region108: #{cpnn_forward.1} parent=105 // pred_check_branch
              %5970 = sbr.rel (0) target = $region110
            $region109: #{cpnn_forward.1} parent=105 // pred_region
              // Predicated region
              $region122: #{cpnn_forward.1} parent=109 // pred_check
                _
              $region123: #{cpnn_forward.1} parent=109 // pred_check_branch
                %6063 = sbr.rel (0) target = $region125
              $region124: #{cpnn_forward.1} parent=109 // pred_region
                loop: start=0, step=1, limit=1
                $region126: #{cpnn_forward.1} parent=124 // loop_pre_header
                  _
                $region127: #{cpnn_forward.1} parent=124 // loop_header
                  %s6065 = sphi 0, %s6069
                  %p6066 = scmp.ge.s32.totalorder %s6065, 1
                  %s6070 = sphi %s5960, %s5960
                  %s6071 = sphi %s5966, %s5966
                $region128: #{cpnn_forward.1} parent=124 // loop_header_branch
                  %6068 = sbr.rel (%p6066) target = $region132
                $region129: #{cpnn_forward.1} parent=124 // loop_body
                  %v6072 = vld [vmem:[%s6070] sm:$0xff]
                  %6073 = vst [vmem:[%s6071] sm:$0xff] %v6072
                  %v6074 = vld [vmem:[%s6070 + $0x8] sm:$0xff]
                  %6075 = vst [vmem:[%s6071 + $0x8] sm:$0xff] %v6074
                  %v6076 = vld [vmem:[%s6070 + $0x10] sm:$0xff]
                  %6077 = vst [vmem:[%s6071 + $0x10] sm:$0xff] %v6076
                  %v6078 = vld [vmem:[%s6070 + $0x18] sm:$0xff]
                  %6079 = vst [vmem:[%s6071 + $0x18] sm:$0xff] %v6078
                  %v6080 = vld [vmem:[%s6070 + $0x20] sm:$0xff]
                  %6081 = vst [vmem:[%s6071 + $0x20] sm:$0xff] %v6080
                  %v6082 = vld [vmem:[%s6070 + $0x28] sm:$0xff]
                  %6083 = vst [vmem:[%s6071 + $0x28] sm:$0xff] %v6082
                  %v6084 = vld [vmem:[%s6070 + $0x30] sm:$0xff]
                  %6085 = vst [vmem:[%s6071 + $0x30] sm:$0xff] %v6084
                  %v6086 = vld [vmem:[%s6070 + $0x38] sm:$0xff]
                  %6087 = vst [vmem:[%s6071 + $0x38] sm:$0xff] %v6086
                  %v6088 = vld [vmem:[%s6070 + $0x40] sm:$0xff]
                  %6089 = vst [vmem:[%s6071 + $0x80] sm:$0xff] %v6088
                  %v6090 = vld [vmem:[%s6070 + $0x48] sm:$0xff]
                  %6091 = vst [vmem:[%s6071 + $0x88] sm:$0xff] %v6090
                  %v6092 = vld [vmem:[%s6070 + $0x50] sm:$0xff]
                  %6093 = vst [vmem:[%s6071 + $0x90] sm:$0xff] %v6092
                  %v6094 = vld [vmem:[%s6070 + $0x58] sm:$0xff]
                  %6095 = vst [vmem:[%s6071 + $0x98] sm:$0xff] %v6094
                  %v6096 = vld [vmem:[%s6070 + $0x60] sm:$0xff]
                  %6097 = vst [vmem:[%s6071 + $0xa0] sm:$0xff] %v6096
                  %v6098 = vld [vmem:[%s6070 + $0x68] sm:$0xff]
                  %6099 = vst [vmem:[%s6071 + $0xa8] sm:$0xff] %v6098
                  %v6100 = vld [vmem:[%s6070 + $0x70] sm:$0xff]
                  %6101 = vst [vmem:[%s6071 + $0xb0] sm:$0xff] %v6100
                  %v6102 = vld [vmem:[%s6070 + $0x78] sm:$0xff]
                  %6103 = vst [vmem:[%s6071 + $0xb8] sm:$0xff] %v6102
                  %v6104 = vld [vmem:[%s6070 + $0x80] sm:$0xff]
                  %6105 = vst [vmem:[%s6071 + $0x100] sm:$0xff] %v6104
                  %v6106 = vld [vmem:[%s6070 + $0x88] sm:$0xff]
                  %6107 = vst [vmem:[%s6071 + $0x108] sm:$0xff] %v6106
                  %v6108 = vld [vmem:[%s6070 + $0x90] sm:$0xff]
                  %6109 = vst [vmem:[%s6071 + $0x110] sm:$0xff] %v6108
                  %v6110 = vld [vmem:[%s6070 + $0x98] sm:$0xff]
                  %6111 = vst [vmem:[%s6071 + $0x118] sm:$0xff] %v6110
                  %v6112 = vld [vmem:[%s6070 + $0xa0] sm:$0xff]
                  %6113 = vst [vmem:[%s6071 + $0x120] sm:$0xff] %v6112
                  %v6114 = vld [vmem:[%s6070 + $0xa8] sm:$0xff]
                  %6115 = vst [vmem:[%s6071 + $0x128] sm:$0xff] %v6114
                  %v6116 = vld [vmem:[%s6070 + $0xb0] sm:$0xff]
                  %6117 = vst [vmem:[%s6071 + $0x130] sm:$0xff] %v6116
                  %v6118 = vld [vmem:[%s6070 + $0xb8] sm:$0xff]
                  %6119 = vst [vmem:[%s6071 + $0x138] sm:$0xff] %v6118
                  %v6120 = vld [vmem:[%s6070 + $0xc0] sm:$0xff]
                  %6121 = vst [vmem:[%s6071 + $0x180] sm:$0xff] %v6120
                  %v6122 = vld [vmem:[%s6070 + $0xc8] sm:$0xff]
                  %6123 = vst [vmem:[%s6071 + $0x188] sm:$0xff] %v6122
                  %v6124 = vld [vmem:[%s6070 + $0xd0] sm:$0xff]
                  %6125 = vst [vmem:[%s6071 + $0x190] sm:$0xff] %v6124
                  %v6126 = vld [vmem:[%s6070 + $0xd8] sm:$0xff]
                  %6127 = vst [vmem:[%s6071 + $0x198] sm:$0xff] %v6126
                  %v6128 = vld [vmem:[%s6070 + $0xe0] sm:$0xff]
                  %6129 = vst [vmem:[%s6071 + $0x1a0] sm:$0xff] %v6128
                  %v6130 = vld [vmem:[%s6070 + $0xe8] sm:$0xff]
                  %6131 = vst [vmem:[%s6071 + $0x1a8] sm:$0xff] %v6130
                  %v6132 = vld [vmem:[%s6070 + $0xf0] sm:$0xff]
                  %6133 = vst [vmem:[%s6071 + $0x1b0] sm:$0xff] %v6132
                  %v6134 = vld [vmem:[%s6070 + $0xf8] sm:$0xff]
                  %6135 = vst [vmem:[%s6071 + $0x1b8] sm:$0xff] %v6134
                  %v6136 = vld [vmem:[%s6070 + $0x100] sm:$0xff]
                  %6137 = vst [vmem:[%s6071 + $0x200] sm:$0xff] %v6136
                  %v6138 = vld [vmem:[%s6070 + $0x108] sm:$0xff]
                  %6139 = vst [vmem:[%s6071 + $0x208] sm:$0xff] %v6138
                  %v6140 = vld [vmem:[%s6070 + $0x110] sm:$0xff]
                  %6141 = vst [vmem:[%s6071 + $0x210] sm:$0xff] %v6140
                  %v6142 = vld [vmem:[%s6070 + $0x118] sm:$0xff]
                  %6143 = vst [vmem:[%s6071 + $0x218] sm:$0xff] %v6142
                  %v6144 = vld [vmem:[%s6070 + $0x120] sm:$0xff]
                  %6145 = vst [vmem:[%s6071 + $0x220] sm:$0xff] %v6144
                  %v6146 = vld [vmem:[%s6070 + $0x128] sm:$0xff]
                  %6147 = vst [vmem:[%s6071 + $0x228] sm:$0xff] %v6146
                  %v6148 = vld [vmem:[%s6070 + $0x130] sm:$0xff]
                  %6149 = vst [vmem:[%s6071 + $0x230] sm:$0xff] %v6148
                  %v6150 = vld [vmem:[%s6070 + $0x138] sm:$0xff]
                  %6151 = vst [vmem:[%s6071 + $0x238] sm:$0xff] %v6150
                $region130: #{cpnn_forward.1} parent=124 // loop_footer
                  %s6069 = sadd.s32 1, %s6065
                $region131: #{cpnn_forward.1} parent=124 // loop_footer_branch
                  %6064 = sbr.rel target = $region127
                $region132: #{cpnn_forward.1} parent=124 // loop_exit
                  _
              $region125: #{cpnn_forward.1} parent=109 // pred_fallthru
                _
              // Predicated region
              $region133: #{cpnn_forward.1} parent=109 // pred_check
                _
              $region134: #{cpnn_forward.1} parent=109 // pred_check_branch
                %6153 = sbr.rel target = $region136
              $region135: #{cpnn_forward.1} parent=109 // pred_region
                _
              $region136: #{cpnn_forward.1} parent=109 // pred_fallthru
                _
            $region110: #{cpnn_forward.1} parent=105 // pred_fallthru
              _
            // Predicated region
            $region111: #{cpnn_forward.1} parent=105 // pred_check
              _
            $region112: #{cpnn_forward.1} parent=105 // pred_check_branch
              %5972 = sbr.rel target = $region114
            $region113: #{cpnn_forward.1} parent=105 // pred_region
              loop: start=0, step=1, limit=1
              $region115: #{cpnn_forward.1} parent=113 // loop_pre_header
                _
              $region116: #{cpnn_forward.1} parent=113 // loop_header
                %s5975 = sphi 0, %s5979
                %p5976 = scmp.ge.s32.totalorder %s5975, 1
                %s5980 = sphi %s5960, %s5960
                %s5981 = sphi %s5966, %s5966
              $region117: #{cpnn_forward.1} parent=113 // loop_header_branch
                %5978 = sbr.rel (%p5976) target = $region121
              $region118: #{cpnn_forward.1} parent=113 // loop_body
                %v5982 = vld [vmem:[%s5980] sm:$0xff]
                %5983 = vst [vmem:[%s5981] sm:$0xff] %v5982
                %v5984 = vld [vmem:[%s5980 + $0x8] sm:$0xff]
                %5985 = vst [vmem:[%s5981 + $0x8] sm:$0xff] %v5984
                %v5986 = vld [vmem:[%s5980 + $0x10] sm:$0xff]
                %5987 = vst [vmem:[%s5981 + $0x10] sm:$0xff] %v5986
                %v5988 = vld [vmem:[%s5980 + $0x18] sm:$0xff]
                %5989 = vst [vmem:[%s5981 + $0x18] sm:$0xff] %v5988
                %v5990 = vld [vmem:[%s5980 + $0x20] sm:$0xff]
                %5991 = vst [vmem:[%s5981 + $0x20] sm:$0xff] %v5990
                %v5992 = vld [vmem:[%s5980 + $0x28] sm:$0xff]
                %5993 = vst [vmem:[%s5981 + $0x28] sm:$0xff] %v5992
                %v5994 = vld [vmem:[%s5980 + $0x30] sm:$0xff]
                %5995 = vst [vmem:[%s5981 + $0x30] sm:$0xff] %v5994
                %v5996 = vld [vmem:[%s5980 + $0x38] sm:$0xff]
                %5997 = vst [vmem:[%s5981 + $0x38] sm:$0xff] %v5996
                %v5998 = vld [vmem:[%s5980 + $0x40] sm:$0xff]
                %5999 = vst [vmem:[%s5981 + $0x80] sm:$0xff] %v5998
                %v6000 = vld [vmem:[%s5980 + $0x48] sm:$0xff]
                %6001 = vst [vmem:[%s5981 + $0x88] sm:$0xff] %v6000
                %v6002 = vld [vmem:[%s5980 + $0x50] sm:$0xff]
                %6003 = vst [vmem:[%s5981 + $0x90] sm:$0xff] %v6002
                %v6004 = vld [vmem:[%s5980 + $0x58] sm:$0xff]
                %6005 = vst [vmem:[%s5981 + $0x98] sm:$0xff] %v6004
                %v6006 = vld [vmem:[%s5980 + $0x60] sm:$0xff]
                %6007 = vst [vmem:[%s5981 + $0xa0] sm:$0xff] %v6006
                %v6008 = vld [vmem:[%s5980 + $0x68] sm:$0xff]
                %6009 = vst [vmem:[%s5981 + $0xa8] sm:$0xff] %v6008
                %v6010 = vld [vmem:[%s5980 + $0x70] sm:$0xff]
                %6011 = vst [vmem:[%s5981 + $0xb0] sm:$0xff] %v6010
                %v6012 = vld [vmem:[%s5980 + $0x78] sm:$0xff]
                %6013 = vst [vmem:[%s5981 + $0xb8] sm:$0xff] %v6012
                %v6014 = vld [vmem:[%s5980 + $0x80] sm:$0xff]
                %6015 = vst [vmem:[%s5981 + $0x100] sm:$0xff] %v6014
                %v6016 = vld [vmem:[%s5980 + $0x88] sm:$0xff]
                %6017 = vst [vmem:[%s5981 + $0x108] sm:$0xff] %v6016
                %v6018 = vld [vmem:[%s5980 + $0x90] sm:$0xff]
                %6019 = vst [vmem:[%s5981 + $0x110] sm:$0xff] %v6018
                %v6020 = vld [vmem:[%s5980 + $0x98] sm:$0xff]
                %6021 = vst [vmem:[%s5981 + $0x118] sm:$0xff] %v6020
                %v6022 = vld [vmem:[%s5980 + $0xa0] sm:$0xff]
                %6023 = vst [vmem:[%s5981 + $0x120] sm:$0xff] %v6022
                %v6024 = vld [vmem:[%s5980 + $0xa8] sm:$0xff]
                %6025 = vst [vmem:[%s5981 + $0x128] sm:$0xff] %v6024
                %v6026 = vld [vmem:[%s5980 + $0xb0] sm:$0xff]
                %6027 = vst [vmem:[%s5981 + $0x130] sm:$0xff] %v6026
                %v6028 = vld [vmem:[%s5980 + $0xb8] sm:$0xff]
                %6029 = vst [vmem:[%s5981 + $0x138] sm:$0xff] %v6028
                %v6030 = vld [vmem:[%s5980 + $0xc0] sm:$0xff]
                %6031 = vst [vmem:[%s5981 + $0x180] sm:$0xff] %v6030
                %v6032 = vld [vmem:[%s5980 + $0xc8] sm:$0xff]
                %6033 = vst [vmem:[%s5981 + $0x188] sm:$0xff] %v6032
                %v6034 = vld [vmem:[%s5980 + $0xd0] sm:$0xff]
                %6035 = vst [vmem:[%s5981 + $0x190] sm:$0xff] %v6034
                %v6036 = vld [vmem:[%s5980 + $0xd8] sm:$0xff]
                %6037 = vst [vmem:[%s5981 + $0x198] sm:$0xff] %v6036
                %v6038 = vld [vmem:[%s5980 + $0xe0] sm:$0xff]
                %6039 = vst [vmem:[%s5981 + $0x1a0] sm:$0xff] %v6038
                %v6040 = vld [vmem:[%s5980 + $0xe8] sm:$0xff]
                %6041 = vst [vmem:[%s5981 + $0x1a8] sm:$0xff] %v6040
                %v6042 = vld [vmem:[%s5980 + $0xf0] sm:$0xff]
                %6043 = vst [vmem:[%s5981 + $0x1b0] sm:$0xff] %v6042
                %v6044 = vld [vmem:[%s5980 + $0xf8] sm:$0xff]
                %6045 = vst [vmem:[%s5981 + $0x1b8] sm:$0xff] %v6044
                %v6046 = vld [vmem:[%s5980 + $0x100] sm:$0xff]
                %6047 = vst [vmem:[%s5981 + $0x200] sm:$0xff] %v6046
                %v6048 = vld [vmem:[%s5980 + $0x108] sm:$0xff]
                %6049 = vst [vmem:[%s5981 + $0x208] sm:$0xff] %v6048
                %v6050 = vld [vmem:[%s5980 + $0x110] sm:$0xff]
                %6051 = vst [vmem:[%s5981 + $0x210] sm:$0xff] %v6050
                %v6052 = vld [vmem:[%s5980 + $0x118] sm:$0xff]
                %6053 = vst [vmem:[%s5981 + $0x218] sm:$0xff] %v6052
                %v6054 = vld [vmem:[%s5980 + $0x120] sm:$0xff]
                %6055 = vst [vmem:[%s5981 + $0x220] sm:$0xff] %v6054
                %v6056 = vld [vmem:[%s5980 + $0x128] sm:$0xff]
                %6057 = vst [vmem:[%s5981 + $0x228] sm:$0xff] %v6056
                %v6058 = vld [vmem:[%s5980 + $0x130] sm:$0xff]
                %6059 = vst [vmem:[%s5981 + $0x230] sm:$0xff] %v6058
                %v6060 = vld [vmem:[%s5980 + $0x138] sm:$0xff]
                %6061 = vst [vmem:[%s5981 + $0x238] sm:$0xff] %v6060
              $region119: #{cpnn_forward.1} parent=113 // loop_footer
                %s5979 = sadd.s32 1, %s5975
              $region120: #{cpnn_forward.1} parent=113 // loop_footer_branch
                %5974 = sbr.rel target = $region116
              $region121: #{cpnn_forward.1} parent=113 // loop_exit
                _
            $region114: #{cpnn_forward.1} parent=105 // pred_fallthru
              _
          $region106: #{cpnn_forward.1} parent=101 // pred_fallthru
            _
          %6154 = vnop
        $region102: #{cpnn_forward.1} parent=93 // pred_fallthru
          _
      $region94: #{cpnn_forward.1} parent=5 // pred_fallthru
        _
      %p6155 = scmp.le.s32.totalorder 2, %s16
      // Predicated region
      $region137: #{cpnn_forward.1} parent=5 // pred_check
        %p6156 = pneg %p6155
      $region138: #{cpnn_forward.1} parent=5 // pred_check_branch
        %6158 = sbr.rel (%p6156) target = $region140
      $region139: #{cpnn_forward.1} parent=5 // pred_region
        %s6159 = ssub.s32 %s16, 2
        // Predicated region
        $region141: #{cpnn_forward.1} parent=139 // pred_check
          %p6160 = pneg %p260
        $region142: #{cpnn_forward.1} parent=139 // pred_check_branch
          %6162 = sbr.rel (%p6160) target = $region144
        $region143: #{cpnn_forward.1} parent=139 // pred_region
          %s6163 = sand.u32 %s245, 1
          %s6164 = sand.u32 %s245, 1
          %s6165 = smul.addr %s6164, 320
          %s6166 = scalar_lea.vmem [#allocation5], %s6165
        $region144: #{cpnn_forward.1} parent=139 // pred_fallthru
          _
      $region140: #{cpnn_forward.1} parent=5 // pred_fallthru
        _
    $region6: #{cpnn_forward.1} parent=1 // loop_footer
      %s20 = sadd.s32 1, %s16
    $region7: #{cpnn_forward.1} parent=1 // loop_footer_branch
      %15 = sbr.rel target = $region3
    $region8: #{cpnn_forward.1} parent=1 // loop_exit
      _

</llo_original>
